<compile_context>
chip_gen: v6e
topology: v6e:2x2x1
jax: 0.10.0
libtpu: 0.0.40
codegen_flags: <defaults>
</compile_context>

<pallas_src>
import jax
import jax.numpy as jnp
from jax.experimental import pallas as pl
from jax.experimental.pallas import tpu as pltpu


GCN_IN = [64, 64, 32, 64, 128, 64, 128, 256, 128]
GCN_OUT = [64, 32, 64, 128, 64, 128, 256, 128, 256]
MLP_HIDDEN = 512
NUM_CLASSES = 2
LANE = 128
OUT_PAD = 128            # lane-dense padded class dimension for the output row


def _pad128(c):
    return ((c + LANE - 1) // LANE) * LANE


# ---------------------------------------------------------------------------
# Shared per-graph forward body.  Accepts Pallas Refs *or* plain jnp arrays
# (both support `obj[...]`), so the kernel and the pure-JAX reference run the
# exact same math (same cast points, same matmul association).
# ---------------------------------------------------------------------------
def _forward_one_graph(a_ref, x_ref, w_refs, b_refs, w1_ref, b1_ref, w2_ref, b2_ref):
    """Shapes (channel dims zero-padded to multiples of 128):
       a: (per, per) bf16, x: (per, pad(64)) bf16, w_i: (pad(cin), pad(cout)) bf16,
       b_i: (1, pad(cout)) f32, w1: (256, 512) bf16, w2: (512, OUT_PAD) bf16.
       Returns (1, OUT_PAD) f32 log-softmax row (padded classes are -inf)."""
    bf16 = jnp.bfloat16
    a = a_ref[...]                     # per-graph normalized adjacency block
    x = x_ref[...]                     # canonical bf16 activation
    x_ini = x
    res_dim = GCN_IN[0]

    for i in range(9):                 # static unroll: channel widths differ
        if i % 3 == 0:
            x_ini = x
            res_dim = GCN_IN[i]
        w = w_refs[i][...]             # load right before use (bf16)
        b = b_refs[i][...]             # f32 (1, cout_p)
        cin_p, cout_p = _pad128(GCN_IN[i]), _pad128(GCN_OUT[i])
        if cout_p > cin_p:
            # reassociated: keep the O(per^2) matmul at the narrower width
            ax = jnp.dot(a, x, preferred_element_type=jnp.float32)
            h = jnp.dot(ax.astype(bf16), w, preferred_element_type=jnp.float32)
        else:
            xw = jnp.dot(x, w, preferred_element_type=jnp.float32)
            h = jnp.dot(a, xw.astype(bf16), preferred_element_type=jnp.float32)
        h = jnp.maximum(h + b, 0.0)    # bias + ReLU (dropout = identity), f32
        # TODO(synk): residuals with mismatched channel dims (blocks 2 and 3)
        # would raise a shape error in PyTorch; they are skipped here.
        if (i + 1) % 3 == 0 and GCN_OUT[i] == res_dim:
            h = h + x_ini.astype(jnp.float32)
        x = h.astype(bf16)             # keep canonical activation in bf16

    # global_mean_pool: every graph in the batch has `per` nodes -> row mean.
    pooled = jnp.mean(x.astype(jnp.float32), axis=0, keepdims=True)   # (1, 256)

    h1 = jnp.maximum(
        jnp.dot(pooled.astype(bf16), w1_ref[...],
                preferred_element_type=jnp.float32) + b1_ref[...], 0.0)
    y = jnp.maximum(
        jnp.dot(h1.astype(bf16), w2_ref[...],
                preferred_element_type=jnp.float32) + b2_ref[...], 0.0)

    # mask padded classes, then numerically stable log_softmax over dim 1 (f32)
    lane = jax.lax.broadcasted_iota(jnp.int32, y.shape, 1)
    y = jnp.where(lane < NUM_CLASSES, y, -jnp.inf)
    m = jnp.max(y, axis=1, keepdims=True)
    z = y - m
    lse = jnp.log(jnp.sum(jnp.exp(z), axis=1, keepdims=True))
    return z - lse


# ---------------------------------------------------------------------------
# Pallas kernel: one grid step == one graph.
# ---------------------------------------------------------------------------
def particlenet_kernel(*refs):
    # ref order: a, x, w0..w8, b0..b8, w_mp1, b_mp1, w_mp2, b_mp2, out
    o_ref = refs[24]
    o_ref[...] = _forward_one_graph(refs[0], refs[1], refs[2:11], refs[11:20],
                                    refs[20], refs[21], refs[22], refs[23])


# ---------------------------------------------------------------------------
# Host-side prep: pad channel dims to 128-lane multiples, cast matmul operands
# to bf16 (zero padding never changes the logical outputs).
# ---------------------------------------------------------------------------
def _prepare_inputs(x_blocks, a_blocks, params):
    bf16 = jnp.bfloat16
    c_in = x_blocks.shape[-1]
    c0p = _pad128(c_in)
    xp = jnp.pad(x_blocks, ((0, 0), (0, 0), (0, c0p - c_in))).astype(bf16)
    ab = a_blocks.astype(bf16)

    ws, bs = [], []
    for i in range(9):
        cin_p, cout_p = _pad128(GCN_IN[i]), _pad128(GCN_OUT[i])
        w, b = params[f"w{i}"], params[f"b{i}"]
        ws.append(jnp.pad(
            w, ((0, cin_p - w.shape[0]), (0, cout_p - w.shape[1]))).astype(bf16))
        bs.append(jnp.pad(b, ((0, 0), (0, cout_p - b.shape[1]))).astype(jnp.float32))

    w1 = params["w_mp1"].astype(bf16)
    b1 = params["b_mp1"].astype(jnp.float32)
    w2 = jnp.pad(params["w_mp2"],
                 ((0, 0), (0, OUT_PAD - NUM_CLASSES))).astype(bf16)
    b2 = jnp.pad(params["b_mp2"],
                 ((0, 0), (0, OUT_PAD - NUM_CLASSES))).astype(jnp.float32)
    return ab, xp, ws, bs, w1, b1, w2, b2


def _cost_estimate(num_graphs, per, in_bytes, out_bytes):
    flops = 0
    for cin, cout in zip(GCN_IN, GCN_OUT):
        cin_p, cout_p = _pad128(cin), _pad128(cout)
        flops += 2 * per * cin_p * cout_p              # X @ W  (or (AX) @ W)
        flops += 2 * per * per * min(cin_p, cout_p)    # A-matmul at narrow width
    flops += 2 * per * _pad128(GCN_OUT[-1])            # row-mean pool
    flops += 2 * _pad128(GCN_OUT[-1]) * MLP_HIDDEN + 2 * MLP_HIDDEN * OUT_PAD
    flops *= num_graphs
    return pl.CostEstimate(flops=int(flops),
                           transcendentals=int(num_graphs * (OUT_PAD + 1)),
                           bytes_accessed=int(in_bytes + out_bytes))


def _vmem_limit_bytes(per, c0p, weight_bytes):
    # weights stay resident (constant index_maps, counted x2 for buffering);
    # per-graph A / x / out blocks are double-buffered; plus slack for f32
    # working activations and Mosaic internal scratch.
    blocks = 2 * (per * per * 2 + per * c0p * 2 + OUT_PAD * 4)
    work = 16 * per * 256 * 4
    return int(min(2 * weight_bytes + blocks + work + (16 << 20), 64 << 20))


# ---------------------------------------------------------------------------
# Wrapper: grid over graphs, weights VMEM-resident, blocks pipelined.
# ---------------------------------------------------------------------------
def particlenet_forward(x_blocks, a_blocks, params):
    """x_blocks: [G, per, C_in] f32 node features (equal-size graphs);
       a_blocks: [G, per, per] f32 per-graph D^-1/2 (A+I) D^-1/2 blocks."""
    num_graphs, per, _ = x_blocks.shape
    ab, xp, ws, bs, w1, b1, w2, b2 = _prepare_inputs(x_blocks, a_blocks, params)
    c0p = xp.shape[-1]

    inputs = [ab, xp] + ws + bs + [w1, b1, w2, b2]

    const = lambda g: (0, 0)           # weights: same block every grid step
    in_specs = [
        pl.BlockSpec((None, per, per), lambda g: (g, 0, 0)),   # A_hat block g
        pl.BlockSpec((None, per, c0p), lambda g: (g, 0, 0)),   # x block g
    ]
    in_specs += [pl.BlockSpec(w.shape, const) for w in ws]
    in_specs += [pl.BlockSpec(b.shape, const) for b in bs]
    in_specs += [pl.BlockSpec(w1.shape, const), pl.BlockSpec(b1.shape, const),
                 pl.BlockSpec(w2.shape, const), pl.BlockSpec(b2.shape, const)]

    out_shape = jax.ShapeDtypeStruct((num_graphs, 1, OUT_PAD), jnp.float32)
    out_specs = pl.BlockSpec((None, 1, OUT_PAD), lambda g: (g, 0, 0))

    weight_bytes = sum(int(t.size) * t.dtype.itemsize for t in inputs[2:])
    in_bytes = sum(int(t.size) * t.dtype.itemsize for t in inputs)

    out = pl.pallas_call(
        particlenet_kernel,
        grid=(num_graphs,),
        in_specs=in_specs,
        out_specs=out_specs,
        out_shape=out_shape,
        compiler_params=pltpu.CompilerParams(
            dimension_semantics=("parallel",),        # megacore split on v7x
            vmem_limit_bytes=_vmem_limit_bytes(per, c0p, weight_bytes)),
        cost_estimate=_cost_estimate(num_graphs, per, in_bytes,
                                     num_graphs * OUT_PAD * 4),
    )(*inputs)
    return out[:, 0, :NUM_CLASSES]


# ---------------------------------------------------------------------------
# Pure-JAX reference: identical math / cast points via the shared body.
# ---------------------------------------------------------------------------
def particlenet_reference(x_blocks, a_blocks, params):
    ab, xp, ws, bs, w1, b1, w2, b2 = _prepare_inputs(x_blocks, a_blocks, params)
    rows = [_forward_one_graph(ab[g], xp[g], ws, bs, w1, b1, w2, b2)
            for g in range(ab.shape[0])]
    return jnp.concatenate(rows, axis=0)[:, :NUM_CLASSES]


# ---------------------------------------------------------------------------
# Parameters + graph construction (vectorized)
# ---------------------------------------------------------------------------
def init_params(key):
    params = {}
    for i, (cin, cout) in enumerate(zip(GCN_IN, GCN_OUT)):
        key, kw = jax.random.split(key)
        scale = (2.0 / (cin + cout)) ** 0.5                        # glorot-ish
        params[f"w{i}"] = scale * jax.random.normal(kw, (cin, cout), jnp.float32)
        params[f"b{i}"] = jnp.zeros((1, cout), jnp.float32)
    key, k1, k2 = jax.random.split(key, 3)
    params["w_mp1"] = (2.0 / (256 + MLP_HIDDEN)) ** 0.5 * jax.random.normal(
        k1, (256, MLP_HIDDEN), jnp.float32)
    params["b_mp1"] = jnp.zeros((1, MLP_HIDDEN), jnp.float32)
    params["w_mp2"] = (2.0 / (MLP_HIDDEN + NUM_CLASSES)) ** 0.5 * jax.random.normal(
        k2, (MLP_HIDDEN, NUM_CLASSES), jnp.float32)
    params["b_mp2"] = jnp.zeros((1, NUM_CLASSES), jnp.float32)
    return params


def build_graph(nodes_per_graph, num_graphs):
    """Ring graph per batched graph; returns D^-1/2 (A+I) D^-1/2 blocks of
    shape [num_graphs, per, per] (fully vectorized)."""
    per = nodes_per_graph
    idx = jnp.arange(per)
    nxt = (idx + 1) % per
    adj = jnp.zeros((per, per), jnp.float32)
    adj = adj.at[idx, nxt].set(1.0)
    adj = adj.at[nxt, idx].set(1.0)
    a_self = adj + jnp.eye(per, dtype=jnp.float32)                 # A + I
    d_inv_sqrt = 1.0 / jnp.sqrt(jnp.sum(a_self, axis=1))
    a_hat = a_self * d_inv_sqrt[:, None] * d_inv_sqrt[None, :]
    return jnp.broadcast_to(a_hat, (num_graphs, per, per))


# ---------------------------------------------------------------------------
if __name__ == "__main__":
    NODES_PER_GRAPH = 16     # nodes per graph (all graphs equal-size)
    NUM_GRAPHS = 4           # graphs in the batch == grid size
    INPUT_DIM = 64           # node feature dim (matches first GCN layer / residual)

    key = jax.random.PRNGKey(0)
    key, kx, kp = jax.random.split(key, 3)

    x = jax.random.normal(kx, (NUM_GRAPHS, NODES_PER_GRAPH, INPUT_DIM), jnp.float32)
    a_blocks = build_graph(NODES_PER_GRAPH, NUM_GRAPHS)
    params = init_params(kp)

    forward = jax.jit(particlenet_forward)
    out = jax.block_until_ready(forward(x, a_blocks, params))

    assert out.shape == (NUM_GRAPHS, NUM_CLASSES)
    # log_softmax rows should exp-sum to 1
    assert jnp.allclose(jnp.sum(jnp.exp(out), axis=1), 1.0, atol=1e-5)

    # cross-check against a pure-JAX reference running the exact same math
    ref = jax.block_until_ready(particlenet_reference(x, a_blocks, params))
    assert jnp.allclose(out, ref, atol=2e-2, rtol=2e-2), (out, ref)

    print("KERNEL_OK")
</pallas_src>

<mosaic_0001>
module attributes {stable_mosaic.version = 11 : i64} {
  func.func @particlenet_kernel(%arg0: i32, %arg1: memref<1x16x16xbf16, #tpu.memory_space<vmem>>, %arg2: memref<1x16x128xbf16, #tpu.memory_space<vmem>>, %arg3: memref<128x128xbf16, #tpu.memory_space<vmem>>, %arg4: memref<128x128xbf16, #tpu.memory_space<vmem>>, %arg5: memref<128x128xbf16, #tpu.memory_space<vmem>>, %arg6: memref<128x128xbf16, #tpu.memory_space<vmem>>, %arg7: memref<128x128xbf16, #tpu.memory_space<vmem>>, %arg8: memref<128x128xbf16, #tpu.memory_space<vmem>>, %arg9: memref<128x256xbf16, #tpu.memory_space<vmem>>, %arg10: memref<256x128xbf16, #tpu.memory_space<vmem>>, %arg11: memref<128x256xbf16, #tpu.memory_space<vmem>>, %arg12: memref<1x128xf32, #tpu.memory_space<vmem>>, %arg13: memref<1x128xf32, #tpu.memory_space<vmem>>, %arg14: memref<1x128xf32, #tpu.memory_space<vmem>>, %arg15: memref<1x128xf32, #tpu.memory_space<vmem>>, %arg16: memref<1x128xf32, #tpu.memory_space<vmem>>, %arg17: memref<1x128xf32, #tpu.memory_space<vmem>>, %arg18: memref<1x256xf32, #tpu.memory_space<vmem>>, %arg19: memref<1x128xf32, #tpu.memory_space<vmem>>, %arg20: memref<1x256xf32, #tpu.memory_space<vmem>>, %arg21: memref<256x512xbf16, #tpu.memory_space<vmem>>, %arg22: memref<1x512xf32, #tpu.memory_space<vmem>>, %arg23: memref<512x128xbf16, #tpu.memory_space<vmem>>, %arg24: memref<1x128xf32, #tpu.memory_space<vmem>>, %arg25: memref<1x1x128xf32, #tpu.memory_space<vmem>>) attributes {dimension_semantics = [#tpu.dimension_semantics<parallel>], iteration_bounds = array<i64: 4>, scalar_prefetch = 0 : i64, scratch_operands = 0 : i64, tpu.core_type = #tpu.core_type<tc>, window_params = [{transform_indices = @transform_0, window_bounds = array<i64: 1, 16, 16>}, {transform_indices = @transform_1, window_bounds = array<i64: 1, 16, 128>}, {pipeline_mode = #tpu.pipeline_mode<synchronous>, transform_indices = @transform_2, window_bounds = array<i64: 128, 128>}, {pipeline_mode = #tpu.pipeline_mode<synchronous>, transform_indices = @transform_3, window_bounds = array<i64: 128, 128>}, {pipeline_mode = #tpu.pipeline_mode<synchronous>, transform_indices = @transform_4, window_bounds = array<i64: 128, 128>}, {pipeline_mode = #tpu.pipeline_mode<synchronous>, transform_indices = @transform_5, window_bounds = array<i64: 128, 128>}, {pipeline_mode = #tpu.pipeline_mode<synchronous>, transform_indices = @transform_6, window_bounds = array<i64: 128, 128>}, {pipeline_mode = #tpu.pipeline_mode<synchronous>, transform_indices = @transform_7, window_bounds = array<i64: 128, 128>}, {pipeline_mode = #tpu.pipeline_mode<synchronous>, transform_indices = @transform_8, window_bounds = array<i64: 128, 256>}, {pipeline_mode = #tpu.pipeline_mode<synchronous>, transform_indices = @transform_9, window_bounds = array<i64: 256, 128>}, {pipeline_mode = #tpu.pipeline_mode<synchronous>, transform_indices = @transform_10, window_bounds = array<i64: 128, 256>}, {pipeline_mode = #tpu.pipeline_mode<synchronous>, transform_indices = @transform_11, window_bounds = array<i64: 1, 128>}, {pipeline_mode = #tpu.pipeline_mode<synchronous>, transform_indices = @transform_12, window_bounds = array<i64: 1, 128>}, {pipeline_mode = #tpu.pipeline_mode<synchronous>, transform_indices = @transform_13, window_bounds = array<i64: 1, 128>}, {pipeline_mode = #tpu.pipeline_mode<synchronous>, transform_indices = @transform_14, window_bounds = array<i64: 1, 128>}, {pipeline_mode = #tpu.pipeline_mode<synchronous>, transform_indices = @transform_15, window_bounds = array<i64: 1, 128>}, {pipeline_mode = #tpu.pipeline_mode<synchronous>, transform_indices = @transform_16, window_bounds = array<i64: 1, 128>}, {pipeline_mode = #tpu.pipeline_mode<synchronous>, transform_indices = @transform_17, window_bounds = array<i64: 1, 256>}, {pipeline_mode = #tpu.pipeline_mode<synchronous>, transform_indices = @transform_18, window_bounds = array<i64: 1, 128>}, {pipeline_mode = #tpu.pipeline_mode<synchronous>, transform_indices = @transform_19, window_bounds = array<i64: 1, 256>}, {pipeline_mode = #tpu.pipeline_mode<synchronous>, transform_indices = @transform_20, window_bounds = array<i64: 256, 512>}, {pipeline_mode = #tpu.pipeline_mode<synchronous>, transform_indices = @transform_21, window_bounds = array<i64: 1, 512>}, {pipeline_mode = #tpu.pipeline_mode<synchronous>, transform_indices = @transform_22, window_bounds = array<i64: 512, 128>}, {pipeline_mode = #tpu.pipeline_mode<synchronous>, transform_indices = @transform_23, window_bounds = array<i64: 1, 128>}, {transform_indices = @transform_24, window_bounds = array<i64: 1, 1, 128>}]} {
    %c0 = arith.constant 0 : index
    %c0_0 = arith.constant 0 : index
    %c0_1 = arith.constant 0 : index
    %0 = vector.load %arg1[%c0, %c0_0, %c0_1] : memref<1x16x16xbf16, #tpu.memory_space<vmem>>, vector<1x16x16xbf16>
    %1 = vector.shape_cast %0 : vector<1x16x16xbf16> to vector<16x16xbf16>
    %c0_2 = arith.constant 0 : index
    %c0_3 = arith.constant 0 : index
    %c0_4 = arith.constant 0 : index
    %2 = vector.load %arg2[%c0_2, %c0_3, %c0_4] : memref<1x16x128xbf16, #tpu.memory_space<vmem>>, vector<1x16x128xbf16>
    %3 = vector.shape_cast %2 : vector<1x16x128xbf16> to vector<16x128xbf16>
    %c0_5 = arith.constant 0 : index
    %c0_6 = arith.constant 0 : index
    %4 = vector.load %arg3[%c0_5, %c0_6] : memref<128x128xbf16, #tpu.memory_space<vmem>>, vector<128x128xbf16>
    %c0_7 = arith.constant 0 : index
    %c0_8 = arith.constant 0 : index
    %5 = vector.load %arg12[%c0_7, %c0_8] : memref<1x128xf32, #tpu.memory_space<vmem>>, vector<1x128xf32>
    %cst = arith.constant dense<0.000000e+00> : vector<16x128xf32>
    %6 = tpu.matmul %3, %4, %cst {dimension_numbers = #tpu.dot_dimension_numbers<[1], [0], [0], [1], [0, 0, 1, 1], [], []>} : vector<16x128xbf16>, vector<128x128xbf16>, vector<16x128xf32> -> vector<16x128xf32>
    %7 = arith.truncf %6 : vector<16x128xf32> to vector<16x128xbf16>
    %cst_9 = arith.constant dense<0.000000e+00> : vector<16x128xf32>
    %8 = tpu.matmul %1, %7, %cst_9 {dimension_numbers = #tpu.dot_dimension_numbers<[1], [0], [0], [1], [0, 0, 1, 1], [], []>} : vector<16x16xbf16>, vector<16x128xbf16>, vector<16x128xf32> -> vector<16x128xf32>
    %9 = vector.broadcast %5 : vector<1x128xf32> to vector<16x128xf32>
    %10 = arith.addf %8, %9 : vector<16x128xf32>
    %cst_10 = arith.constant 0.000000e+00 : f32
    %11 = vector.broadcast %cst_10 : f32 to vector<16x128xf32>
    %12 = arith.maximumf %10, %11 : vector<16x128xf32>
    %13 = arith.truncf %12 : vector<16x128xf32> to vector<16x128xbf16>
    %c0_11 = arith.constant 0 : index
    %c0_12 = arith.constant 0 : index
    %14 = vector.load %arg4[%c0_11, %c0_12] : memref<128x128xbf16, #tpu.memory_space<vmem>>, vector<128x128xbf16>
    %c0_13 = arith.constant 0 : index
    %c0_14 = arith.constant 0 : index
    %15 = vector.load %arg13[%c0_13, %c0_14] : memref<1x128xf32, #tpu.memory_space<vmem>>, vector<1x128xf32>
    %cst_15 = arith.constant dense<0.000000e+00> : vector<16x128xf32>
    %16 = tpu.matmul %13, %14, %cst_15 {dimension_numbers = #tpu.dot_dimension_numbers<[1], [0], [0], [1], [0, 0, 1, 1], [], []>} : vector<16x128xbf16>, vector<128x128xbf16>, vector<16x128xf32> -> vector<16x128xf32>
    %17 = arith.truncf %16 : vector<16x128xf32> to vector<16x128xbf16>
    %cst_16 = arith.constant dense<0.000000e+00> : vector<16x128xf32>
    %18 = tpu.matmul %1, %17, %cst_16 {dimension_numbers = #tpu.dot_dimension_numbers<[1], [0], [0], [1], [0, 0, 1, 1], [], []>} : vector<16x16xbf16>, vector<16x128xbf16>, vector<16x128xf32> -> vector<16x128xf32>
    %19 = vector.broadcast %15 : vector<1x128xf32> to vector<16x128xf32>
    %20 = arith.addf %18, %19 : vector<16x128xf32>
    %cst_17 = arith.constant 0.000000e+00 : f32
    %21 = vector.broadcast %cst_17 : f32 to vector<16x128xf32>
    %22 = arith.maximumf %20, %21 : vector<16x128xf32>
    %23 = arith.truncf %22 : vector<16x128xf32> to vector<16x128xbf16>
    %c0_18 = arith.constant 0 : index
    %c0_19 = arith.constant 0 : index
    %24 = vector.load %arg5[%c0_18, %c0_19] : memref<128x128xbf16, #tpu.memory_space<vmem>>, vector<128x128xbf16>
    %c0_20 = arith.constant 0 : index
    %c0_21 = arith.constant 0 : index
    %25 = vector.load %arg14[%c0_20, %c0_21] : memref<1x128xf32, #tpu.memory_space<vmem>>, vector<1x128xf32>
    %cst_22 = arith.constant dense<0.000000e+00> : vector<16x128xf32>
    %26 = tpu.matmul %23, %24, %cst_22 {dimension_numbers = #tpu.dot_dimension_numbers<[1], [0], [0], [1], [0, 0, 1, 1], [], []>} : vector<16x128xbf16>, vector<128x128xbf16>, vector<16x128xf32> -> vector<16x128xf32>
    %27 = arith.truncf %26 : vector<16x128xf32> to vector<16x128xbf16>
    %cst_23 = arith.constant dense<0.000000e+00> : vector<16x128xf32>
    %28 = tpu.matmul %1, %27, %cst_23 {dimension_numbers = #tpu.dot_dimension_numbers<[1], [0], [0], [1], [0, 0, 1, 1], [], []>} : vector<16x16xbf16>, vector<16x128xbf16>, vector<16x128xf32> -> vector<16x128xf32>
    %29 = vector.broadcast %25 : vector<1x128xf32> to vector<16x128xf32>
    %30 = arith.addf %28, %29 : vector<16x128xf32>
    %cst_24 = arith.constant 0.000000e+00 : f32
    %31 = vector.broadcast %cst_24 : f32 to vector<16x128xf32>
    %32 = arith.maximumf %30, %31 : vector<16x128xf32>
    %33 = arith.extf %3 : vector<16x128xbf16> to vector<16x128xf32>
    %34 = arith.addf %32, %33 : vector<16x128xf32>
    %35 = arith.truncf %34 : vector<16x128xf32> to vector<16x128xbf16>
    %c0_25 = arith.constant 0 : index
    %c0_26 = arith.constant 0 : index
    %36 = vector.load %arg6[%c0_25, %c0_26] : memref<128x128xbf16, #tpu.memory_space<vmem>>, vector<128x128xbf16>
    %c0_27 = arith.constant 0 : index
    %c0_28 = arith.constant 0 : index
    %37 = vector.load %arg15[%c0_27, %c0_28] : memref<1x128xf32, #tpu.memory_space<vmem>>, vector<1x128xf32>
    %cst_29 = arith.constant dense<0.000000e+00> : vector<16x128xf32>
    %38 = tpu.matmul %35, %36, %cst_29 {dimension_numbers = #tpu.dot_dimension_numbers<[1], [0], [0], [1], [0, 0, 1, 1], [], []>} : vector<16x128xbf16>, vector<128x128xbf16>, vector<16x128xf32> -> vector<16x128xf32>
    %39 = arith.truncf %38 : vector<16x128xf32> to vector<16x128xbf16>
    %cst_30 = arith.constant dense<0.000000e+00> : vector<16x128xf32>
    %40 = tpu.matmul %1, %39, %cst_30 {dimension_numbers = #tpu.dot_dimension_numbers<[1], [0], [0], [1], [0, 0, 1, 1], [], []>} : vector<16x16xbf16>, vector<16x128xbf16>, vector<16x128xf32> -> vector<16x128xf32>
    %41 = vector.broadcast %37 : vector<1x128xf32> to vector<16x128xf32>
    %42 = arith.addf %40, %41 : vector<16x128xf32>
    %cst_31 = arith.constant 0.000000e+00 : f32
    %43 = vector.broadcast %cst_31 : f32 to vector<16x128xf32>
    %44 = arith.maximumf %42, %43 : vector<16x128xf32>
    %45 = arith.truncf %44 : vector<16x128xf32> to vector<16x128xbf16>
    %c0_32 = arith.constant 0 : index
    %c0_33 = arith.constant 0 : index
    %46 = vector.load %arg7[%c0_32, %c0_33] : memref<128x128xbf16, #tpu.memory_space<vmem>>, vector<128x128xbf16>
    %c0_34 = arith.constant 0 : index
    %c0_35 = arith.constant 0 : index
    %47 = vector.load %arg16[%c0_34, %c0_35] : memref<1x128xf32, #tpu.memory_space<vmem>>, vector<1x128xf32>
    %cst_36 = arith.constant dense<0.000000e+00> : vector<16x128xf32>
    %48 = tpu.matmul %45, %46, %cst_36 {dimension_numbers = #tpu.dot_dimension_numbers<[1], [0], [0], [1], [0, 0, 1, 1], [], []>} : vector<16x128xbf16>, vector<128x128xbf16>, vector<16x128xf32> -> vector<16x128xf32>
    %49 = arith.truncf %48 : vector<16x128xf32> to vector<16x128xbf16>
    %cst_37 = arith.constant dense<0.000000e+00> : vector<16x128xf32>
    %50 = tpu.matmul %1, %49, %cst_37 {dimension_numbers = #tpu.dot_dimension_numbers<[1], [0], [0], [1], [0, 0, 1, 1], [], []>} : vector<16x16xbf16>, vector<16x128xbf16>, vector<16x128xf32> -> vector<16x128xf32>
    %51 = vector.broadcast %47 : vector<1x128xf32> to vector<16x128xf32>
    %52 = arith.addf %50, %51 : vector<16x128xf32>
    %cst_38 = arith.constant 0.000000e+00 : f32
    %53 = vector.broadcast %cst_38 : f32 to vector<16x128xf32>
    %54 = arith.maximumf %52, %53 : vector<16x128xf32>
    %55 = arith.truncf %54 : vector<16x128xf32> to vector<16x128xbf16>
    %c0_39 = arith.constant 0 : index
    %c0_40 = arith.constant 0 : index
    %56 = vector.load %arg8[%c0_39, %c0_40] : memref<128x128xbf16, #tpu.memory_space<vmem>>, vector<128x128xbf16>
    %c0_41 = arith.constant 0 : index
    %c0_42 = arith.constant 0 : index
    %57 = vector.load %arg17[%c0_41, %c0_42] : memref<1x128xf32, #tpu.memory_space<vmem>>, vector<1x128xf32>
    %cst_43 = arith.constant dense<0.000000e+00> : vector<16x128xf32>
    %58 = tpu.matmul %55, %56, %cst_43 {dimension_numbers = #tpu.dot_dimension_numbers<[1], [0], [0], [1], [0, 0, 1, 1], [], []>} : vector<16x128xbf16>, vector<128x128xbf16>, vector<16x128xf32> -> vector<16x128xf32>
    %59 = arith.truncf %58 : vector<16x128xf32> to vector<16x128xbf16>
    %cst_44 = arith.constant dense<0.000000e+00> : vector<16x128xf32>
    %60 = tpu.matmul %1, %59, %cst_44 {dimension_numbers = #tpu.dot_dimension_numbers<[1], [0], [0], [1], [0, 0, 1, 1], [], []>} : vector<16x16xbf16>, vector<16x128xbf16>, vector<16x128xf32> -> vector<16x128xf32>
    %61 = vector.broadcast %57 : vector<1x128xf32> to vector<16x128xf32>
    %62 = arith.addf %60, %61 : vector<16x128xf32>
    %cst_45 = arith.constant 0.000000e+00 : f32
    %63 = vector.broadcast %cst_45 : f32 to vector<16x128xf32>
    %64 = arith.maximumf %62, %63 : vector<16x128xf32>
    %65 = arith.truncf %64 : vector<16x128xf32> to vector<16x128xbf16>
    %c0_46 = arith.constant 0 : index
    %c0_47 = arith.constant 0 : index
    %66 = vector.load %arg9[%c0_46, %c0_47] : memref<128x256xbf16, #tpu.memory_space<vmem>>, vector<128x256xbf16>
    %c0_48 = arith.constant 0 : index
    %c0_49 = arith.constant 0 : index
    %67 = vector.load %arg18[%c0_48, %c0_49] : memref<1x256xf32, #tpu.memory_space<vmem>>, vector<1x256xf32>
    %cst_50 = arith.constant dense<0.000000e+00> : vector<16x128xf32>
    %68 = tpu.matmul %1, %65, %cst_50 {dimension_numbers = #tpu.dot_dimension_numbers<[1], [0], [0], [1], [0, 0, 1, 1], [], []>} : vector<16x16xbf16>, vector<16x128xbf16>, vector<16x128xf32> -> vector<16x128xf32>
    %69 = arith.truncf %68 : vector<16x128xf32> to vector<16x128xbf16>
    %cst_51 = arith.constant dense<0.000000e+00> : vector<16x256xf32>
    %70 = tpu.matmul %69, %66, %cst_51 {dimension_numbers = #tpu.dot_dimension_numbers<[1], [0], [0], [1], [0, 0, 1, 1], [], []>} : vector<16x128xbf16>, vector<128x256xbf16>, vector<16x256xf32> -> vector<16x256xf32>
    %71 = vector.broadcast %67 : vector<1x256xf32> to vector<16x256xf32>
    %72 = arith.addf %70, %71 : vector<16x256xf32>
    %cst_52 = arith.constant 0.000000e+00 : f32
    %73 = vector.broadcast %cst_52 : f32 to vector<16x256xf32>
    %74 = arith.maximumf %72, %73 : vector<16x256xf32>
    %75 = arith.truncf %74 : vector<16x256xf32> to vector<16x256xbf16>
    %c0_53 = arith.constant 0 : index
    %c0_54 = arith.constant 0 : index
    %76 = vector.load %arg10[%c0_53, %c0_54] : memref<256x128xbf16, #tpu.memory_space<vmem>>, vector<256x128xbf16>
    %c0_55 = arith.constant 0 : index
    %c0_56 = arith.constant 0 : index
    %77 = vector.load %arg19[%c0_55, %c0_56] : memref<1x128xf32, #tpu.memory_space<vmem>>, vector<1x128xf32>
    %cst_57 = arith.constant dense<0.000000e+00> : vector<16x128xf32>
    %78 = tpu.matmul %75, %76, %cst_57 {dimension_numbers = #tpu.dot_dimension_numbers<[1], [0], [0], [1], [0, 0, 1, 1], [], []>} : vector<16x256xbf16>, vector<256x128xbf16>, vector<16x128xf32> -> vector<16x128xf32>
    %79 = arith.truncf %78 : vector<16x128xf32> to vector<16x128xbf16>
    %cst_58 = arith.constant dense<0.000000e+00> : vector<16x128xf32>
    %80 = tpu.matmul %1, %79, %cst_58 {dimension_numbers = #tpu.dot_dimension_numbers<[1], [0], [0], [1], [0, 0, 1, 1], [], []>} : vector<16x16xbf16>, vector<16x128xbf16>, vector<16x128xf32> -> vector<16x128xf32>
    %81 = vector.broadcast %77 : vector<1x128xf32> to vector<16x128xf32>
    %82 = arith.addf %80, %81 : vector<16x128xf32>
    %cst_59 = arith.constant 0.000000e+00 : f32
    %83 = vector.broadcast %cst_59 : f32 to vector<16x128xf32>
    %84 = arith.maximumf %82, %83 : vector<16x128xf32>
    %85 = arith.truncf %84 : vector<16x128xf32> to vector<16x128xbf16>
    %c0_60 = arith.constant 0 : index
    %c0_61 = arith.constant 0 : index
    %86 = vector.load %arg11[%c0_60, %c0_61] : memref<128x256xbf16, #tpu.memory_space<vmem>>, vector<128x256xbf16>
    %c0_62 = arith.constant 0 : index
    %c0_63 = arith.constant 0 : index
    %87 = vector.load %arg20[%c0_62, %c0_63] : memref<1x256xf32, #tpu.memory_space<vmem>>, vector<1x256xf32>
    %cst_64 = arith.constant dense<0.000000e+00> : vector<16x128xf32>
    %88 = tpu.matmul %1, %85, %cst_64 {dimension_numbers = #tpu.dot_dimension_numbers<[1], [0], [0], [1], [0, 0, 1, 1], [], []>} : vector<16x16xbf16>, vector<16x128xbf16>, vector<16x128xf32> -> vector<16x128xf32>
    %89 = arith.truncf %88 : vector<16x128xf32> to vector<16x128xbf16>
    %cst_65 = arith.constant dense<0.000000e+00> : vector<16x256xf32>
    %90 = tpu.matmul %89, %86, %cst_65 {dimension_numbers = #tpu.dot_dimension_numbers<[1], [0], [0], [1], [0, 0, 1, 1], [], []>} : vector<16x128xbf16>, vector<128x256xbf16>, vector<16x256xf32> -> vector<16x256xf32>
    %91 = vector.broadcast %87 : vector<1x256xf32> to vector<16x256xf32>
    %92 = arith.addf %90, %91 : vector<16x256xf32>
    %cst_66 = arith.constant 0.000000e+00 : f32
    %93 = vector.broadcast %cst_66 : f32 to vector<16x256xf32>
    %94 = arith.maximumf %92, %93 : vector<16x256xf32>
    %95 = arith.truncf %94 : vector<16x256xf32> to vector<16x256xbf16>
    %96 = arith.extf %95 : vector<16x256xbf16> to vector<16x256xf32>
    %cst_67 = arith.constant dense<0.000000e+00> : vector<256xf32>
    %97 = vector.multi_reduction <add>, %96, %cst_67 [0] : vector<16x256xf32> to vector<256xf32>
    %98 = vector.shape_cast %97 : vector<256xf32> to vector<1x256xf32>
    %cst_68 = arith.constant 1.600000e+01 : f32
    %99 = vector.broadcast %cst_68 : f32 to vector<1x256xf32>
    %100 = arith.divf %98, %99 : vector<1x256xf32>
    %101 = arith.truncf %100 : vector<1x256xf32> to vector<1x256xbf16>
    %c0_69 = arith.constant 0 : index
    %c0_70 = arith.constant 0 : index
    %102 = vector.load %arg21[%c0_69, %c0_70] : memref<256x512xbf16, #tpu.memory_space<vmem>>, vector<256x512xbf16>
    %cst_71 = arith.constant dense<0.000000e+00> : vector<1x512xf32>
    %103 = tpu.matmul %101, %102, %cst_71 {dimension_numbers = #tpu.dot_dimension_numbers<[1], [0], [0], [1], [0, 0, 1, 1], [], []>} : vector<1x256xbf16>, vector<256x512xbf16>, vector<1x512xf32> -> vector<1x512xf32>
    %c0_72 = arith.constant 0 : index
    %c0_73 = arith.constant 0 : index
    %104 = vector.load %arg22[%c0_72, %c0_73] : memref<1x512xf32, #tpu.memory_space<vmem>>, vector<1x512xf32>
    %105 = arith.addf %103, %104 : vector<1x512xf32>
    %cst_74 = arith.constant 0.000000e+00 : f32
    %106 = vector.broadcast %cst_74 : f32 to vector<1x512xf32>
    %107 = arith.maximumf %105, %106 : vector<1x512xf32>
    %108 = arith.truncf %107 : vector<1x512xf32> to vector<1x512xbf16>
    %c0_75 = arith.constant 0 : index
    %c0_76 = arith.constant 0 : index
    %109 = vector.load %arg23[%c0_75, %c0_76] : memref<512x128xbf16, #tpu.memory_space<vmem>>, vector<512x128xbf16>
    %cst_77 = arith.constant dense<0.000000e+00> : vector<1x128xf32>
    %110 = tpu.matmul %108, %109, %cst_77 {dimension_numbers = #tpu.dot_dimension_numbers<[1], [0], [0], [1], [0, 0, 1, 1], [], []>} : vector<1x512xbf16>, vector<512x128xbf16>, vector<1x128xf32> -> vector<1x128xf32>
    %c0_78 = arith.constant 0 : index
    %c0_79 = arith.constant 0 : index
    %111 = vector.load %arg24[%c0_78, %c0_79] : memref<1x128xf32, #tpu.memory_space<vmem>>, vector<1x128xf32>
    %112 = arith.addf %110, %111 : vector<1x128xf32>
    %cst_80 = arith.constant 0.000000e+00 : f32
    %113 = vector.broadcast %cst_80 : f32 to vector<1x128xf32>
    %114 = arith.maximumf %112, %113 : vector<1x128xf32>
    %115 = tpu.iota {dimensions = array<i32: 1>} : vector<1x128xi32>
    %c2_i32 = arith.constant 2 : i32
    %116 = vector.broadcast %c2_i32 : i32 to vector<1x128xi32>
    %117 = arith.cmpi slt, %115, %116 : vector<1x128xi32>
    %cst_81 = arith.constant 0xFF800000 : f32
    %118 = vector.broadcast %cst_81 : f32 to vector<1x128xf32>
    %119 = arith.select %117, %114, %118 : vector<1x128xi1>, vector<1x128xf32>
    %cst_82 = arith.constant dense<0xFF800000> : vector<1xf32>
    %120 = vector.multi_reduction <maximumf>, %119, %cst_82 [1] : vector<1x128xf32> to vector<1xf32>
    %121 = vector.shape_cast %120 : vector<1xf32> to vector<1x1xf32>
    %122 = vector.broadcast %121 : vector<1x1xf32> to vector<1x128xf32>
    %123 = arith.subf %119, %122 : vector<1x128xf32>
    %124 = math.exp %123 : vector<1x128xf32>
    %cst_83 = arith.constant dense<0.000000e+00> : vector<1xf32>
    %125 = vector.multi_reduction <add>, %124, %cst_83 [1] : vector<1x128xf32> to vector<1xf32>
    %126 = vector.shape_cast %125 : vector<1xf32> to vector<1x1xf32>
    %127 = math.log %126 : vector<1x1xf32>
    %128 = vector.broadcast %127 : vector<1x1xf32> to vector<1x128xf32>
    %129 = arith.subf %123, %128 : vector<1x128xf32>
    %c0_84 = arith.constant 0 : index
    %c0_85 = arith.constant 0 : index
    %c0_86 = arith.constant 0 : index
    %130 = vector.load %arg25[%c0_84, %c0_85, %c0_86] : memref<1x1x128xf32, #tpu.memory_space<vmem>>, vector<1x1x128xf32>
    %131 = vector.shape_cast %130 : vector<1x1x128xf32> to vector<1x128xf32>
    %132 = vector.shape_cast %129 : vector<1x128xf32> to vector<1x1x128xf32>
    tpu.vector_store %arg25[%c0_84, %c0_85, %c0_86], %132 {strides = array<i32>} : memref<1x1x128xf32, #tpu.memory_space<vmem>>, vector<1x1x128xf32>,
    return
  }
  func.func @transform_0(%arg0: i32) -> (i32, i32, i32) {
    %c0_i32 = arith.constant 0 : i32
    %c0_i32_0 = arith.constant 0 : i32
    %c0_i32_1 = arith.constant 0 : i32
    return %arg0, %c0_i32, %c0_i32_0 : i32, i32, i32
  }
  func.func @transform_1(%arg0: i32) -> (i32, i32, i32) {
    %c0_i32 = arith.constant 0 : i32
    %c0_i32_0 = arith.constant 0 : i32
    %c0_i32_1 = arith.constant 0 : i32
    return %arg0, %c0_i32, %c0_i32_0 : i32, i32, i32
  }
  func.func @transform_2(%arg0: i32) -> (i32, i32) {
    %c0_i32 = arith.constant 0 : i32
    %c0_i32_0 = arith.constant 0 : i32
    %c0_i32_1 = arith.constant 0 : i32
    return %c0_i32, %c0_i32_0 : i32, i32
  }
  func.func @transform_3(%arg0: i32) -> (i32, i32) {
    %c0_i32 = arith.constant 0 : i32
    %c0_i32_0 = arith.constant 0 : i32
    %c0_i32_1 = arith.constant 0 : i32
    return %c0_i32, %c0_i32_0 : i32, i32
  }
  func.func @transform_4(%arg0: i32) -> (i32, i32) {
    %c0_i32 = arith.constant 0 : i32
    %c0_i32_0 = arith.constant 0 : i32
    %c0_i32_1 = arith.constant 0 : i32
    return %c0_i32, %c0_i32_0 : i32, i32
  }
  func.func @transform_5(%arg0: i32) -> (i32, i32) {
    %c0_i32 = arith.constant 0 : i32
    %c0_i32_0 = arith.constant 0 : i32
    %c0_i32_1 = arith.constant 0 : i32
    return %c0_i32, %c0_i32_0 : i32, i32
  }
  func.func @transform_6(%arg0: i32) -> (i32, i32) {
    %c0_i32 = arith.constant 0 : i32
    %c0_i32_0 = arith.constant 0 : i32
    %c0_i32_1 = arith.constant 0 : i32
    return %c0_i32, %c0_i32_0 : i32, i32
  }
  func.func @transform_7(%arg0: i32) -> (i32, i32) {
    %c0_i32 = arith.constant 0 : i32
    %c0_i32_0 = arith.constant 0 : i32
    %c0_i32_1 = arith.constant 0 : i32
    return %c0_i32, %c0_i32_0 : i32, i32
  }
  func.func @transform_8(%arg0: i32) -> (i32, i32) {
    %c0_i32 = arith.constant 0 : i32
    %c0_i32_0 = arith.constant 0 : i32
    %c0_i32_1 = arith.constant 0 : i32
    return %c0_i32, %c0_i32_0 : i32, i32
  }
  func.func @transform_9(%arg0: i32) -> (i32, i32) {
    %c0_i32 = arith.constant 0 : i32
    %c0_i32_0 = arith.constant 0 : i32
    %c0_i32_1 = arith.constant 0 : i32
    return %c0_i32, %c0_i32_0 : i32, i32
  }
  func.func @transform_10(%arg0: i32) -> (i32, i32) {
    %c0_i32 = arith.constant 0 : i32
    %c0_i32_0 = arith.constant 0 : i32
    %c0_i32_1 = arith.constant 0 : i32
    return %c0_i32, %c0_i32_0 : i32, i32
  }
  func.func @transform_11(%arg0: i32) -> (i32, i32) {
    %c0_i32 = arith.constant 0 : i32
    %c0_i32_0 = arith.constant 0 : i32
    %c0_i32_1 = arith.constant 0 : i32
    return %c0_i32, %c0_i32_0 : i32, i32
  }
  func.func @transform_12(%arg0: i32) -> (i32, i32) {
    %c0_i32 = arith.constant 0 : i32
    %c0_i32_0 = arith.constant 0 : i32
    %c0_i32_1 = arith.constant 0 : i32
    return %c0_i32, %c0_i32_0 : i32, i32
  }
  func.func @transform_13(%arg0: i32) -> (i32, i32) {
    %c0_i32 = arith.constant 0 : i32
    %c0_i32_0 = arith.constant 0 : i32
    %c0_i32_1 = arith.constant 0 : i32
    return %c0_i32, %c0_i32_0 : i32, i32
  }
  func.func @transform_14(%arg0: i32) -> (i32, i32) {
    %c0_i32 = arith.constant 0 : i32
    %c0_i32_0 = arith.constant 0 : i32
    %c0_i32_1 = arith.constant 0 : i32
    return %c0_i32, %c0_i32_0 : i32, i32
  }
  func.func @transform_15(%arg0: i32) -> (i32, i32) {
    %c0_i32 = arith.constant 0 : i32
    %c0_i32_0 = arith.constant 0 : i32
    %c0_i32_1 = arith.constant 0 : i32
    return %c0_i32, %c0_i32_0 : i32, i32
  }
  func.func @transform_16(%arg0: i32) -> (i32, i32) {
    %c0_i32 = arith.constant 0 : i32
    %c0_i32_0 = arith.constant 0 : i32
    %c0_i32_1 = arith.constant 0 : i32
    return %c0_i32, %c0_i32_0 : i32, i32
  }
  func.func @transform_17(%arg0: i32) -> (i32, i32) {
    %c0_i32 = arith.constant 0 : i32
    %c0_i32_0 = arith.constant 0 : i32
    %c0_i32_1 = arith.constant 0 : i32
    return %c0_i32, %c0_i32_0 : i32, i32
  }
  func.func @transform_18(%arg0: i32) -> (i32, i32) {
    %c0_i32 = arith.constant 0 : i32
    %c0_i32_0 = arith.constant 0 : i32
    %c0_i32_1 = arith.constant 0 : i32
    return %c0_i32, %c0_i32_0 : i32, i32
  }
  func.func @transform_19(%arg0: i32) -> (i32, i32) {
    %c0_i32 = arith.constant 0 : i32
    %c0_i32_0 = arith.constant 0 : i32
    %c0_i32_1 = arith.constant 0 : i32
    return %c0_i32, %c0_i32_0 : i32, i32
  }
  func.func @transform_20(%arg0: i32) -> (i32, i32) {
    %c0_i32 = arith.constant 0 : i32
    %c0_i32_0 = arith.constant 0 : i32
    %c0_i32_1 = arith.constant 0 : i32
    return %c0_i32, %c0_i32_0 : i32, i32
  }
  func.func @transform_21(%arg0: i32) -> (i32, i32) {
    %c0_i32 = arith.constant 0 : i32
    %c0_i32_0 = arith.constant 0 : i32
    %c0_i32_1 = arith.constant 0 : i32
    return %c0_i32, %c0_i32_0 : i32, i32
  }
  func.func @transform_22(%arg0: i32) -> (i32, i32) {
    %c0_i32 = arith.constant 0 : i32
    %c0_i32_0 = arith.constant 0 : i32
    %c0_i32_1 = arith.constant 0 : i32
    return %c0_i32, %c0_i32_0 : i32, i32
  }
  func.func @transform_23(%arg0: i32) -> (i32, i32) {
    %c0_i32 = arith.constant 0 : i32
    %c0_i32_0 = arith.constant 0 : i32
    %c0_i32_1 = arith.constant 0 : i32
    return %c0_i32, %c0_i32_0 : i32, i32
  }
  func.func @transform_24(%arg0: i32) -> (i32, i32, i32) {
    %c0_i32 = arith.constant 0 : i32
    %c0_i32_0 = arith.constant 0 : i32
    %c0_i32_1 = arith.constant 0 : i32
    return %arg0, %c0_i32, %c0_i32_0 : i32, i32, i32
  }
}

</mosaic_0001>

<llo_original>
// kernel: particlenet_forward.1
$region0: #{particlenet_forward.1}
  #allocation0 [shape = 'u32[]', space=smem, size = 0x4, offset = 0x4, fixed_abs, tag = 'smem constant byte address 0x4 - core index']
  #allocation1 [shape = 'u32[144,128]{1,0:T(1,128)}', space=vmem, size = 0x12000, scoped, tag = 'internal scratch']
  %s0 = inlined_call_operand.vmem [shape: bf16[4,16,16], index: 0, kind: input, shape index: {}]
  %s1 = inlined_call_operand.vmem [shape: bf16[4,16,128], index: 1, kind: input, shape index: {}]
  %s2 = inlined_call_operand.vmem [shape: bf16[128,128], index: 2, kind: input, shape index: {}]
  %s3 = inlined_call_operand.vmem [shape: bf16[128,128], index: 3, kind: input, shape index: {}]
  %s4 = inlined_call_operand.vmem [shape: bf16[128,128], index: 4, kind: input, shape index: {}]
  %s5 = inlined_call_operand.vmem [shape: bf16[128,128], index: 5, kind: input, shape index: {}]
  %s6 = inlined_call_operand.vmem [shape: bf16[128,128], index: 6, kind: input, shape index: {}]
  %s7 = inlined_call_operand.vmem [shape: bf16[128,128], index: 7, kind: input, shape index: {}]
  %s8 = inlined_call_operand.vmem [shape: bf16[128,256], index: 8, kind: input, shape index: {}]
  %s9 = inlined_call_operand.vmem [shape: bf16[256,128], index: 9, kind: input, shape index: {}]
  %s10 = inlined_call_operand.vmem [shape: bf16[128,256], index: 10, kind: input, shape index: {}]
  %s11 = inlined_call_operand.vmem [shape: f32[1,128], index: 11, kind: input, shape index: {}]
  %s12 = inlined_call_operand.vmem [shape: f32[1,128], index: 12, kind: input, shape index: {}]
  %s13 = inlined_call_operand.vmem [shape: f32[1,128], index: 13, kind: input, shape index: {}]
  %s14 = inlined_call_operand.vmem [shape: f32[1,128], index: 14, kind: input, shape index: {}]
  %s15 = inlined_call_operand.vmem [shape: f32[1,128], index: 15, kind: input, shape index: {}]
  %s16 = inlined_call_operand.vmem [shape: f32[1,128], index: 16, kind: input, shape index: {}]
  %s17 = inlined_call_operand.vmem [shape: f32[1,256], index: 17, kind: input, shape index: {}]
  %s18 = inlined_call_operand.vmem [shape: f32[1,128], index: 18, kind: input, shape index: {}]
  %s19 = inlined_call_operand.vmem [shape: f32[1,256], index: 19, kind: input, shape index: {}]
  %s20 = inlined_call_operand.vmem [shape: bf16[256,512], index: 20, kind: input, shape index: {}]
  %s21 = inlined_call_operand.vmem [shape: f32[1,512], index: 21, kind: input, shape index: {}]
  %s22 = inlined_call_operand.vmem [shape: bf16[512,128], index: 22, kind: input, shape index: {}]
  %s23 = inlined_call_operand.vmem [shape: f32[1,128], index: 23, kind: input, shape index: {}]
  %s24 = inlined_call_operand.vmem [shape: f32[4,1,128], index: 24, kind: output, shape index: {}]
  %s25 = sld [smem:[#allocation0]]
  $region129: #{particlenet_forward.1} parent=0
    _
  %s27 = ssub.s32 1, %s25
  %s28 = scalar_select 0, %s27, %s25
  loop: start=0, step=1, limit=6
  $region2: #{particlenet_forward.1} parent=0 // loop_pre_header
    _
  $region3: #{particlenet_forward.1} parent=0 // loop_header
    %s30 = sphi 0, %s34
    %p31 = scmp.ge.s32.totalorder %s30, 6
    %s40 = sphi 0, %s42
    %s43 = sphi 0, %s40
    %s44 = sphi 0, %s43
    %s60 = sphi 0, %s44
    %s66 = sphi 0, %s68
    %s69 = sphi 0, %s66
    %s70 = sphi 0, %s69
    %s86 = sphi 0, %s70
    %s90 = sphi 0, %s90
    %s92 = sphi 0, %s90
    %s93 = sphi 0, %s92
    %s107 = sphi 0, %s93
    %s111 = sphi 0, %s111
    %s113 = sphi 0, %s111
    %s114 = sphi 0, %s113
    %s128 = sphi 0, %s114
    %s132 = sphi 0, %s132
    %s134 = sphi 0, %s132
    %s135 = sphi 0, %s134
    %s149 = sphi 0, %s135
    %s153 = sphi 0, %s153
    %s155 = sphi 0, %s153
    %s156 = sphi 0, %s155
    %s170 = sphi 0, %s156
    %s174 = sphi 0, %s174
    %s176 = sphi 0, %s174
    %s177 = sphi 0, %s176
    %s191 = sphi 0, %s177
    %s195 = sphi 0, %s195
    %s197 = sphi 0, %s195
    %s198 = sphi 0, %s197
    %s212 = sphi 0, %s198
    %s216 = sphi 0, %s216
    %s218 = sphi 0, %s216
    %s219 = sphi 0, %s218
    %s233 = sphi 0, %s219
    %s237 = sphi 0, %s237
    %s239 = sphi 0, %s237
    %s240 = sphi 0, %s239
    %s254 = sphi 0, %s240
    %s258 = sphi 0, %s258
    %s260 = sphi 0, %s258
    %s261 = sphi 0, %s260
    %s275 = sphi 0, %s261
    %s279 = sphi 0, %s279
    %s281 = sphi 0, %s279
    %s282 = sphi 0, %s281
    %s296 = sphi 0, %s282
    %s300 = sphi 0, %s300
    %s302 = sphi 0, %s300
    %s303 = sphi 0, %s302
    %s317 = sphi 0, %s303
    %s321 = sphi 0, %s321
    %s323 = sphi 0, %s321
    %s324 = sphi 0, %s323
    %s338 = sphi 0, %s324
    %s342 = sphi 0, %s342
    %s344 = sphi 0, %s342
    %s345 = sphi 0, %s344
    %s359 = sphi 0, %s345
    %s363 = sphi 0, %s363
    %s365 = sphi 0, %s363
    %s366 = sphi 0, %s365
    %s380 = sphi 0, %s366
    %s384 = sphi 0, %s384
    %s386 = sphi 0, %s384
    %s387 = sphi 0, %s386
    %s401 = sphi 0, %s387
    %s405 = sphi 0, %s405
    %s407 = sphi 0, %s405
    %s408 = sphi 0, %s407
    %s422 = sphi 0, %s408
    %s426 = sphi 0, %s426
    %s428 = sphi 0, %s426
    %s429 = sphi 0, %s428
    %s443 = sphi 0, %s429
    %s447 = sphi 0, %s447
    %s449 = sphi 0, %s447
    %s450 = sphi 0, %s449
    %s464 = sphi 0, %s450
    %s468 = sphi 0, %s468
    %s470 = sphi 0, %s468
    %s471 = sphi 0, %s470
    %s485 = sphi 0, %s471
    %s489 = sphi 0, %s489
    %s491 = sphi 0, %s489
    %s492 = sphi 0, %s491
    %s506 = sphi 0, %s492
    %s510 = sphi 0, %s510
    %s512 = sphi 0, %s510
    %s513 = sphi 0, %s512
    %s527 = sphi 0, %s513
    %s531 = sphi 0, %s531
    %s533 = sphi 0, %s531
    %s534 = sphi 0, %s533
    %s548 = sphi 0, %s534
    %s554 = sphi 0, %s556
    %s557 = sphi 0, %s554
    %s558 = sphi 0, %s557
    %s574 = sphi 0, %s558
  $region4: #{particlenet_forward.1} parent=0 // loop_header_branch
    %33 = sbr.rel (%p31) target = $region8
  $region5: #{particlenet_forward.1} parent=0 // loop_body
    %s35 = ssub.s32 %s30, 1
    %s36 = ssub.s32 %s30, 2
    %s37 = sadd.s32 %s30, 1
    %s38 = ssub.s32 %s30, %s37
    %p39 = scmp.eq.s32.totalorder %s38, 0
    %s41 = sadd.s32 %s40, 1
    %s42 = scalar_select %p39, %s40, %s41
    %p45 = pneg %p39
    %p46 = scmp.eq.s32.totalorder %s30, 3
    %p47 = por %p45, %p46
    %p48 = scmp.ne.s32.totalorder %s40, %s43
    %p49 = scmp.eq.s32.totalorder %s30, 0
    %p50 = por %p48, %p49
    %p51 = scmp.ne.s32.totalorder %s40, %s43
    %p52 = scmp.eq.s32.totalorder %s35, 3
    %p53 = por %p51, %p52
    %p54 = scmp.ne.s32.totalorder %s43, %s44
    %p55 = scmp.eq.s32.totalorder %s35, 0
    %p56 = por %p54, %p55
    %p57 = scmp.ne.s32.totalorder %s43, %s44
    %p58 = scmp.eq.s32.totalorder %s36, 3
    %p59 = por %p57, %p58
    %p61 = scmp.ne.s32.totalorder %s44, %s60
    %p62 = scmp.eq.s32.totalorder %s36, 0
    %p63 = por %p61, %p62
    %s64 = ssub.s32 %s30, %s37
    %p65 = scmp.eq.s32.totalorder %s64, 0
    %s67 = sadd.s32 %s66, 1
    %s68 = scalar_select %p65, %s66, %s67
    %p71 = pneg %p65
    %p72 = scmp.eq.s32.totalorder %s30, 3
    %p73 = por %p71, %p72
    %p74 = scmp.ne.s32.totalorder %s66, %s69
    %p75 = scmp.eq.s32.totalorder %s30, 0
    %p76 = por %p74, %p75
    %p77 = scmp.ne.s32.totalorder %s66, %s69
    %p78 = scmp.eq.s32.totalorder %s35, 3
    %p79 = por %p77, %p78
    %p80 = scmp.ne.s32.totalorder %s69, %s70
    %p81 = scmp.eq.s32.totalorder %s35, 0
    %p82 = por %p80, %p81
    %p83 = scmp.ne.s32.totalorder %s69, %s70
    %p84 = scmp.eq.s32.totalorder %s36, 3
    %p85 = por %p83, %p84
    %p87 = scmp.ne.s32.totalorder %s70, %s86
    %p88 = scmp.eq.s32.totalorder %s36, 0
    %p89 = por %p87, %p88
    %s91 = sadd.s32 %s90, 1
    %p94 = scmp.eq.s32.totalorder %s30, 3
    %p95 = scmp.ne.s32.totalorder %s90, %s92
    %p96 = scmp.eq.s32.totalorder %s30, 0
    %p97 = por %p95, %p96
    %p98 = scmp.ne.s32.totalorder %s90, %s92
    %p99 = scmp.eq.s32.totalorder %s35, 3
    %p100 = por %p98, %p99
    %p101 = scmp.ne.s32.totalorder %s92, %s93
    %p102 = scmp.eq.s32.totalorder %s35, 0
    %p103 = por %p101, %p102
    %p104 = scmp.ne.s32.totalorder %s92, %s93
    %p105 = scmp.eq.s32.totalorder %s36, 3
    %p106 = por %p104, %p105
    %p108 = scmp.ne.s32.totalorder %s93, %s107
    %p109 = scmp.eq.s32.totalorder %s36, 0
    %p110 = por %p108, %p109
    %s112 = sadd.s32 %s111, 1
    %p115 = scmp.eq.s32.totalorder %s30, 3
    %p116 = scmp.ne.s32.totalorder %s111, %s113
    %p117 = scmp.eq.s32.totalorder %s30, 0
    %p118 = por %p116, %p117
    %p119 = scmp.ne.s32.totalorder %s111, %s113
    %p120 = scmp.eq.s32.totalorder %s35, 3
    %p121 = por %p119, %p120
    %p122 = scmp.ne.s32.totalorder %s113, %s114
    %p123 = scmp.eq.s32.totalorder %s35, 0
    %p124 = por %p122, %p123
    %p125 = scmp.ne.s32.totalorder %s113, %s114
    %p126 = scmp.eq.s32.totalorder %s36, 3
    %p127 = por %p125, %p126
    %p129 = scmp.ne.s32.totalorder %s114, %s128
    %p130 = scmp.eq.s32.totalorder %s36, 0
    %p131 = por %p129, %p130
    %s133 = sadd.s32 %s132, 1
    %p136 = scmp.eq.s32.totalorder %s30, 3
    %p137 = scmp.ne.s32.totalorder %s132, %s134
    %p138 = scmp.eq.s32.totalorder %s30, 0
    %p139 = por %p137, %p138
    %p140 = scmp.ne.s32.totalorder %s132, %s134
    %p141 = scmp.eq.s32.totalorder %s35, 3
    %p142 = por %p140, %p141
    %p143 = scmp.ne.s32.totalorder %s134, %s135
    %p144 = scmp.eq.s32.totalorder %s35, 0
    %p145 = por %p143, %p144
    %p146 = scmp.ne.s32.totalorder %s134, %s135
    %p147 = scmp.eq.s32.totalorder %s36, 3
    %p148 = por %p146, %p147
    %p150 = scmp.ne.s32.totalorder %s135, %s149
    %p151 = scmp.eq.s32.totalorder %s36, 0
    %p152 = por %p150, %p151
    %s154 = sadd.s32 %s153, 1
    %p157 = scmp.eq.s32.totalorder %s30, 3
    %p158 = scmp.ne.s32.totalorder %s153, %s155
    %p159 = scmp.eq.s32.totalorder %s30, 0
    %p160 = por %p158, %p159
    %p161 = scmp.ne.s32.totalorder %s153, %s155
    %p162 = scmp.eq.s32.totalorder %s35, 3
    %p163 = por %p161, %p162
    %p164 = scmp.ne.s32.totalorder %s155, %s156
    %p165 = scmp.eq.s32.totalorder %s35, 0
    %p166 = por %p164, %p165
    %p167 = scmp.ne.s32.totalorder %s155, %s156
    %p168 = scmp.eq.s32.totalorder %s36, 3
    %p169 = por %p167, %p168
    %p171 = scmp.ne.s32.totalorder %s156, %s170
    %p172 = scmp.eq.s32.totalorder %s36, 0
    %p173 = por %p171, %p172
    %s175 = sadd.s32 %s174, 1
    %p178 = scmp.eq.s32.totalorder %s30, 3
    %p179 = scmp.ne.s32.totalorder %s174, %s176
    %p180 = scmp.eq.s32.totalorder %s30, 0
    %p181 = por %p179, %p180
    %p182 = scmp.ne.s32.totalorder %s174, %s176
    %p183 = scmp.eq.s32.totalorder %s35, 3
    %p184 = por %p182, %p183
    %p185 = scmp.ne.s32.totalorder %s176, %s177
    %p186 = scmp.eq.s32.totalorder %s35, 0
    %p187 = por %p185, %p186
    %p188 = scmp.ne.s32.totalorder %s176, %s177
    %p189 = scmp.eq.s32.totalorder %s36, 3
    %p190 = por %p188, %p189
    %p192 = scmp.ne.s32.totalorder %s177, %s191
    %p193 = scmp.eq.s32.totalorder %s36, 0
    %p194 = por %p192, %p193
    %s196 = sadd.s32 %s195, 1
    %p199 = scmp.eq.s32.totalorder %s30, 3
    %p200 = scmp.ne.s32.totalorder %s195, %s197
    %p201 = scmp.eq.s32.totalorder %s30, 0
    %p202 = por %p200, %p201
    %p203 = scmp.ne.s32.totalorder %s195, %s197
    %p204 = scmp.eq.s32.totalorder %s35, 3
    %p205 = por %p203, %p204
    %p206 = scmp.ne.s32.totalorder %s197, %s198
    %p207 = scmp.eq.s32.totalorder %s35, 0
    %p208 = por %p206, %p207
    %p209 = scmp.ne.s32.totalorder %s197, %s198
    %p210 = scmp.eq.s32.totalorder %s36, 3
    %p211 = por %p209, %p210
    %p213 = scmp.ne.s32.totalorder %s198, %s212
    %p214 = scmp.eq.s32.totalorder %s36, 0
    %p215 = por %p213, %p214
    %s217 = sadd.s32 %s216, 1
    %p220 = scmp.eq.s32.totalorder %s30, 3
    %p221 = scmp.ne.s32.totalorder %s216, %s218
    %p222 = scmp.eq.s32.totalorder %s30, 0
    %p223 = por %p221, %p222
    %p224 = scmp.ne.s32.totalorder %s216, %s218
    %p225 = scmp.eq.s32.totalorder %s35, 3
    %p226 = por %p224, %p225
    %p227 = scmp.ne.s32.totalorder %s218, %s219
    %p228 = scmp.eq.s32.totalorder %s35, 0
    %p229 = por %p227, %p228
    %p230 = scmp.ne.s32.totalorder %s218, %s219
    %p231 = scmp.eq.s32.totalorder %s36, 3
    %p232 = por %p230, %p231
    %p234 = scmp.ne.s32.totalorder %s219, %s233
    %p235 = scmp.eq.s32.totalorder %s36, 0
    %p236 = por %p234, %p235
    %s238 = sadd.s32 %s237, 1
    %p241 = scmp.eq.s32.totalorder %s30, 3
    %p242 = scmp.ne.s32.totalorder %s237, %s239
    %p243 = scmp.eq.s32.totalorder %s30, 0
    %p244 = por %p242, %p243
    %p245 = scmp.ne.s32.totalorder %s237, %s239
    %p246 = scmp.eq.s32.totalorder %s35, 3
    %p247 = por %p245, %p246
    %p248 = scmp.ne.s32.totalorder %s239, %s240
    %p249 = scmp.eq.s32.totalorder %s35, 0
    %p250 = por %p248, %p249
    %p251 = scmp.ne.s32.totalorder %s239, %s240
    %p252 = scmp.eq.s32.totalorder %s36, 3
    %p253 = por %p251, %p252
    %p255 = scmp.ne.s32.totalorder %s240, %s254
    %p256 = scmp.eq.s32.totalorder %s36, 0
    %p257 = por %p255, %p256
    %s259 = sadd.s32 %s258, 1
    %p262 = scmp.eq.s32.totalorder %s30, 3
    %p263 = scmp.ne.s32.totalorder %s258, %s260
    %p264 = scmp.eq.s32.totalorder %s30, 0
    %p265 = por %p263, %p264
    %p266 = scmp.ne.s32.totalorder %s258, %s260
    %p267 = scmp.eq.s32.totalorder %s35, 3
    %p268 = por %p266, %p267
    %p269 = scmp.ne.s32.totalorder %s260, %s261
    %p270 = scmp.eq.s32.totalorder %s35, 0
    %p271 = por %p269, %p270
    %p272 = scmp.ne.s32.totalorder %s260, %s261
    %p273 = scmp.eq.s32.totalorder %s36, 3
    %p274 = por %p272, %p273
    %p276 = scmp.ne.s32.totalorder %s261, %s275
    %p277 = scmp.eq.s32.totalorder %s36, 0
    %p278 = por %p276, %p277
    %s280 = sadd.s32 %s279, 1
    %p283 = scmp.eq.s32.totalorder %s30, 3
    %p284 = scmp.ne.s32.totalorder %s279, %s281
    %p285 = scmp.eq.s32.totalorder %s30, 0
    %p286 = por %p284, %p285
    %p287 = scmp.ne.s32.totalorder %s279, %s281
    %p288 = scmp.eq.s32.totalorder %s35, 3
    %p289 = por %p287, %p288
    %p290 = scmp.ne.s32.totalorder %s281, %s282
    %p291 = scmp.eq.s32.totalorder %s35, 0
    %p292 = por %p290, %p291
    %p293 = scmp.ne.s32.totalorder %s281, %s282
    %p294 = scmp.eq.s32.totalorder %s36, 3
    %p295 = por %p293, %p294
    %p297 = scmp.ne.s32.totalorder %s282, %s296
    %p298 = scmp.eq.s32.totalorder %s36, 0
    %p299 = por %p297, %p298
    %s301 = sadd.s32 %s300, 1
    %p304 = scmp.eq.s32.totalorder %s30, 3
    %p305 = scmp.ne.s32.totalorder %s300, %s302
    %p306 = scmp.eq.s32.totalorder %s30, 0
    %p307 = por %p305, %p306
    %p308 = scmp.ne.s32.totalorder %s300, %s302
    %p309 = scmp.eq.s32.totalorder %s35, 3
    %p310 = por %p308, %p309
    %p311 = scmp.ne.s32.totalorder %s302, %s303
    %p312 = scmp.eq.s32.totalorder %s35, 0
    %p313 = por %p311, %p312
    %p314 = scmp.ne.s32.totalorder %s302, %s303
    %p315 = scmp.eq.s32.totalorder %s36, 3
    %p316 = por %p314, %p315
    %p318 = scmp.ne.s32.totalorder %s303, %s317
    %p319 = scmp.eq.s32.totalorder %s36, 0
    %p320 = por %p318, %p319
    %s322 = sadd.s32 %s321, 1
    %p325 = scmp.eq.s32.totalorder %s30, 3
    %p326 = scmp.ne.s32.totalorder %s321, %s323
    %p327 = scmp.eq.s32.totalorder %s30, 0
    %p328 = por %p326, %p327
    %p329 = scmp.ne.s32.totalorder %s321, %s323
    %p330 = scmp.eq.s32.totalorder %s35, 3
    %p331 = por %p329, %p330
    %p332 = scmp.ne.s32.totalorder %s323, %s324
    %p333 = scmp.eq.s32.totalorder %s35, 0
    %p334 = por %p332, %p333
    %p335 = scmp.ne.s32.totalorder %s323, %s324
    %p336 = scmp.eq.s32.totalorder %s36, 3
    %p337 = por %p335, %p336
    %p339 = scmp.ne.s32.totalorder %s324, %s338
    %p340 = scmp.eq.s32.totalorder %s36, 0
    %p341 = por %p339, %p340
    %s343 = sadd.s32 %s342, 1
    %p346 = scmp.eq.s32.totalorder %s30, 3
    %p347 = scmp.ne.s32.totalorder %s342, %s344
    %p348 = scmp.eq.s32.totalorder %s30, 0
    %p349 = por %p347, %p348
    %p350 = scmp.ne.s32.totalorder %s342, %s344
    %p351 = scmp.eq.s32.totalorder %s35, 3
    %p352 = por %p350, %p351
    %p353 = scmp.ne.s32.totalorder %s344, %s345
    %p354 = scmp.eq.s32.totalorder %s35, 0
    %p355 = por %p353, %p354
    %p356 = scmp.ne.s32.totalorder %s344, %s345
    %p357 = scmp.eq.s32.totalorder %s36, 3
    %p358 = por %p356, %p357
    %p360 = scmp.ne.s32.totalorder %s345, %s359
    %p361 = scmp.eq.s32.totalorder %s36, 0
    %p362 = por %p360, %p361
    %s364 = sadd.s32 %s363, 1
    %p367 = scmp.eq.s32.totalorder %s30, 3
    %p368 = scmp.ne.s32.totalorder %s363, %s365
    %p369 = scmp.eq.s32.totalorder %s30, 0
    %p370 = por %p368, %p369
    %p371 = scmp.ne.s32.totalorder %s363, %s365
    %p372 = scmp.eq.s32.totalorder %s35, 3
    %p373 = por %p371, %p372
    %p374 = scmp.ne.s32.totalorder %s365, %s366
    %p375 = scmp.eq.s32.totalorder %s35, 0
    %p376 = por %p374, %p375
    %p377 = scmp.ne.s32.totalorder %s365, %s366
    %p378 = scmp.eq.s32.totalorder %s36, 3
    %p379 = por %p377, %p378
    %p381 = scmp.ne.s32.totalorder %s366, %s380
    %p382 = scmp.eq.s32.totalorder %s36, 0
    %p383 = por %p381, %p382
    %s385 = sadd.s32 %s384, 1
    %p388 = scmp.eq.s32.totalorder %s30, 3
    %p389 = scmp.ne.s32.totalorder %s384, %s386
    %p390 = scmp.eq.s32.totalorder %s30, 0
    %p391 = por %p389, %p390
    %p392 = scmp.ne.s32.totalorder %s384, %s386
    %p393 = scmp.eq.s32.totalorder %s35, 3
    %p394 = por %p392, %p393
    %p395 = scmp.ne.s32.totalorder %s386, %s387
    %p396 = scmp.eq.s32.totalorder %s35, 0
    %p397 = por %p395, %p396
    %p398 = scmp.ne.s32.totalorder %s386, %s387
    %p399 = scmp.eq.s32.totalorder %s36, 3
    %p400 = por %p398, %p399
    %p402 = scmp.ne.s32.totalorder %s387, %s401
    %p403 = scmp.eq.s32.totalorder %s36, 0
    %p404 = por %p402, %p403
    %s406 = sadd.s32 %s405, 1
    %p409 = scmp.eq.s32.totalorder %s30, 3
    %p410 = scmp.ne.s32.totalorder %s405, %s407
    %p411 = scmp.eq.s32.totalorder %s30, 0
    %p412 = por %p410, %p411
    %p413 = scmp.ne.s32.totalorder %s405, %s407
    %p414 = scmp.eq.s32.totalorder %s35, 3
    %p415 = por %p413, %p414
    %p416 = scmp.ne.s32.totalorder %s407, %s408
    %p417 = scmp.eq.s32.totalorder %s35, 0
    %p418 = por %p416, %p417
    %p419 = scmp.ne.s32.totalorder %s407, %s408
    %p420 = scmp.eq.s32.totalorder %s36, 3
    %p421 = por %p419, %p420
    %p423 = scmp.ne.s32.totalorder %s408, %s422
    %p424 = scmp.eq.s32.totalorder %s36, 0
    %p425 = por %p423, %p424
    %s427 = sadd.s32 %s426, 1
    %p430 = scmp.eq.s32.totalorder %s30, 3
    %p431 = scmp.ne.s32.totalorder %s426, %s428
    %p432 = scmp.eq.s32.totalorder %s30, 0
    %p433 = por %p431, %p432
    %p434 = scmp.ne.s32.totalorder %s426, %s428
    %p435 = scmp.eq.s32.totalorder %s35, 3
    %p436 = por %p434, %p435
    %p437 = scmp.ne.s32.totalorder %s428, %s429
    %p438 = scmp.eq.s32.totalorder %s35, 0
    %p439 = por %p437, %p438
    %p440 = scmp.ne.s32.totalorder %s428, %s429
    %p441 = scmp.eq.s32.totalorder %s36, 3
    %p442 = por %p440, %p441
    %p444 = scmp.ne.s32.totalorder %s429, %s443
    %p445 = scmp.eq.s32.totalorder %s36, 0
    %p446 = por %p444, %p445
    %s448 = sadd.s32 %s447, 1
    %p451 = scmp.eq.s32.totalorder %s30, 3
    %p452 = scmp.ne.s32.totalorder %s447, %s449
    %p453 = scmp.eq.s32.totalorder %s30, 0
    %p454 = por %p452, %p453
    %p455 = scmp.ne.s32.totalorder %s447, %s449
    %p456 = scmp.eq.s32.totalorder %s35, 3
    %p457 = por %p455, %p456
    %p458 = scmp.ne.s32.totalorder %s449, %s450
    %p459 = scmp.eq.s32.totalorder %s35, 0
    %p460 = por %p458, %p459
    %p461 = scmp.ne.s32.totalorder %s449, %s450
    %p462 = scmp.eq.s32.totalorder %s36, 3
    %p463 = por %p461, %p462
    %p465 = scmp.ne.s32.totalorder %s450, %s464
    %p466 = scmp.eq.s32.totalorder %s36, 0
    %p467 = por %p465, %p466
    %s469 = sadd.s32 %s468, 1
    %p472 = scmp.eq.s32.totalorder %s30, 3
    %p473 = scmp.ne.s32.totalorder %s468, %s470
    %p474 = scmp.eq.s32.totalorder %s30, 0
    %p475 = por %p473, %p474
    %p476 = scmp.ne.s32.totalorder %s468, %s470
    %p477 = scmp.eq.s32.totalorder %s35, 3
    %p478 = por %p476, %p477
    %p479 = scmp.ne.s32.totalorder %s470, %s471
    %p480 = scmp.eq.s32.totalorder %s35, 0
    %p481 = por %p479, %p480
    %p482 = scmp.ne.s32.totalorder %s470, %s471
    %p483 = scmp.eq.s32.totalorder %s36, 3
    %p484 = por %p482, %p483
    %p486 = scmp.ne.s32.totalorder %s471, %s485
    %p487 = scmp.eq.s32.totalorder %s36, 0
    %p488 = por %p486, %p487
    %s490 = sadd.s32 %s489, 1
    %p493 = scmp.eq.s32.totalorder %s30, 3
    %p494 = scmp.ne.s32.totalorder %s489, %s491
    %p495 = scmp.eq.s32.totalorder %s30, 0
    %p496 = por %p494, %p495
    %p497 = scmp.ne.s32.totalorder %s489, %s491
    %p498 = scmp.eq.s32.totalorder %s35, 3
    %p499 = por %p497, %p498
    %p500 = scmp.ne.s32.totalorder %s491, %s492
    %p501 = scmp.eq.s32.totalorder %s35, 0
    %p502 = por %p500, %p501
    %p503 = scmp.ne.s32.totalorder %s491, %s492
    %p504 = scmp.eq.s32.totalorder %s36, 3
    %p505 = por %p503, %p504
    %p507 = scmp.ne.s32.totalorder %s492, %s506
    %p508 = scmp.eq.s32.totalorder %s36, 0
    %p509 = por %p507, %p508
    %s511 = sadd.s32 %s510, 1
    %p514 = scmp.eq.s32.totalorder %s30, 3
    %p515 = scmp.ne.s32.totalorder %s510, %s512
    %p516 = scmp.eq.s32.totalorder %s30, 0
    %p517 = por %p515, %p516
    %p518 = scmp.ne.s32.totalorder %s510, %s512
    %p519 = scmp.eq.s32.totalorder %s35, 3
    %p520 = por %p518, %p519
    %p521 = scmp.ne.s32.totalorder %s512, %s513
    %p522 = scmp.eq.s32.totalorder %s35, 0
    %p523 = por %p521, %p522
    %p524 = scmp.ne.s32.totalorder %s512, %s513
    %p525 = scmp.eq.s32.totalorder %s36, 3
    %p526 = por %p524, %p525
    %p528 = scmp.ne.s32.totalorder %s513, %s527
    %p529 = scmp.eq.s32.totalorder %s36, 0
    %p530 = por %p528, %p529
    %s532 = sadd.s32 %s531, 1
    %p535 = scmp.eq.s32.totalorder %s30, 3
    %p536 = scmp.ne.s32.totalorder %s531, %s533
    %p537 = scmp.eq.s32.totalorder %s30, 0
    %p538 = por %p536, %p537
    %p539 = scmp.ne.s32.totalorder %s531, %s533
    %p540 = scmp.eq.s32.totalorder %s35, 3
    %p541 = por %p539, %p540
    %p542 = scmp.ne.s32.totalorder %s533, %s534
    %p543 = scmp.eq.s32.totalorder %s35, 0
    %p544 = por %p542, %p543
    %p545 = scmp.ne.s32.totalorder %s533, %s534
    %p546 = scmp.eq.s32.totalorder %s36, 3
    %p547 = por %p545, %p546
    %p549 = scmp.ne.s32.totalorder %s534, %s548
    %p550 = scmp.eq.s32.totalorder %s36, 0
    %p551 = por %p549, %p550
    %s552 = ssub.s32 %s30, %s37
    %p553 = scmp.eq.s32.totalorder %s552, 0
    %s555 = sadd.s32 %s554, 1
    %s556 = scalar_select %p553, %s554, %s555
    %p559 = pneg %p553
    %p560 = scmp.eq.s32.totalorder %s30, 3
    %p561 = por %p559, %p560
    %p562 = scmp.ne.s32.totalorder %s554, %s557
    %p563 = scmp.eq.s32.totalorder %s30, 0
    %p564 = por %p562, %p563
    %p565 = scmp.ne.s32.totalorder %s554, %s557
    %p566 = scmp.eq.s32.totalorder %s35, 3
    %p567 = por %p565, %p566
    %p568 = scmp.ne.s32.totalorder %s557, %s558
    %p569 = scmp.eq.s32.totalorder %s35, 0
    %p570 = por %p568, %p569
    %p571 = scmp.ne.s32.totalorder %s557, %s558
    %p572 = scmp.eq.s32.totalorder %s36, 3
    %p573 = por %p571, %p572
    %p575 = scmp.ne.s32.totalorder %s558, %s574
    %p576 = scmp.eq.s32.totalorder %s36, 0
    %p577 = por %p575, %p576
    %p578 = scmp.le.s32.totalorder 1, %s30
    %p579 = scmp.lt.s32.totalorder %s30, 5
    %p580 = pnand %p578, %p579
    %p581 = pneg %p580
    // Predicated region
    $region9: #{particlenet_forward.1} parent=5 // pred_check
      _
    $region10: #{particlenet_forward.1} parent=5 // pred_check_branch
      %583 = sbr.rel (%p580) target = $region12
    $region11: #{particlenet_forward.1} parent=5 // pred_region
      %s584 = ssub.s32 %s30, 1
      // Predicated region
      $region13: #{particlenet_forward.1} parent=11 // pred_check
        %p585 = pneg %p103
      $region14: #{particlenet_forward.1} parent=11 // pred_check_branch
        %587 = sbr.rel (%p585) target = $region16
      $region15: #{particlenet_forward.1} parent=11 // pred_region
        _
      $region16: #{particlenet_forward.1} parent=11 // pred_fallthru
        _
      // Predicated region
      $region17: #{particlenet_forward.1} parent=11 // pred_check
        %p588 = pneg %p124
      $region18: #{particlenet_forward.1} parent=11 // pred_check_branch
        %590 = sbr.rel (%p588) target = $region20
      $region19: #{particlenet_forward.1} parent=11 // pred_region
        _
      $region20: #{particlenet_forward.1} parent=11 // pred_fallthru
        _
      // Predicated region
      $region21: #{particlenet_forward.1} parent=11 // pred_check
        %p591 = pneg %p145
      $region22: #{particlenet_forward.1} parent=11 // pred_check_branch
        %593 = sbr.rel (%p591) target = $region24
      $region23: #{particlenet_forward.1} parent=11 // pred_region
        _
      $region24: #{particlenet_forward.1} parent=11 // pred_fallthru
        _
      // Predicated region
      $region25: #{particlenet_forward.1} parent=11 // pred_check
        %p594 = pneg %p166
      $region26: #{particlenet_forward.1} parent=11 // pred_check_branch
        %596 = sbr.rel (%p594) target = $region28
      $region27: #{particlenet_forward.1} parent=11 // pred_region
        _
      $region28: #{particlenet_forward.1} parent=11 // pred_fallthru
        _
      // Predicated region
      $region29: #{particlenet_forward.1} parent=11 // pred_check
        %p597 = pneg %p187
      $region30: #{particlenet_forward.1} parent=11 // pred_check_branch
        %599 = sbr.rel (%p597) target = $region32
      $region31: #{particlenet_forward.1} parent=11 // pred_region
        _
      $region32: #{particlenet_forward.1} parent=11 // pred_fallthru
        _
      // Predicated region
      $region33: #{particlenet_forward.1} parent=11 // pred_check
        %p600 = pneg %p208
      $region34: #{particlenet_forward.1} parent=11 // pred_check_branch
        %602 = sbr.rel (%p600) target = $region36
      $region35: #{particlenet_forward.1} parent=11 // pred_region
        _
      $region36: #{particlenet_forward.1} parent=11 // pred_fallthru
        _
      // Predicated region
      $region37: #{particlenet_forward.1} parent=11 // pred_check
        %p603 = pneg %p229
      $region38: #{particlenet_forward.1} parent=11 // pred_check_branch
        %605 = sbr.rel (%p603) target = $region40
      $region39: #{particlenet_forward.1} parent=11 // pred_region
        _
      $region40: #{particlenet_forward.1} parent=11 // pred_fallthru
        _
      // Predicated region
      $region41: #{particlenet_forward.1} parent=11 // pred_check
        %p606 = pneg %p250
      $region42: #{particlenet_forward.1} parent=11 // pred_check_branch
        %608 = sbr.rel (%p606) target = $region44
      $region43: #{particlenet_forward.1} parent=11 // pred_region
        _
      $region44: #{particlenet_forward.1} parent=11 // pred_fallthru
        _
      // Predicated region
      $region45: #{particlenet_forward.1} parent=11 // pred_check
        %p609 = pneg %p271
      $region46: #{particlenet_forward.1} parent=11 // pred_check_branch
        %611 = sbr.rel (%p609) target = $region48
      $region47: #{particlenet_forward.1} parent=11 // pred_region
        _
      $region48: #{particlenet_forward.1} parent=11 // pred_fallthru
        _
      // Predicated region
      $region49: #{particlenet_forward.1} parent=11 // pred_check
        %p612 = pneg %p292
      $region50: #{particlenet_forward.1} parent=11 // pred_check_branch
        %614 = sbr.rel (%p612) target = $region52
      $region51: #{particlenet_forward.1} parent=11 // pred_region
        _
      $region52: #{particlenet_forward.1} parent=11 // pred_fallthru
        _
      // Predicated region
      $region53: #{particlenet_forward.1} parent=11 // pred_check
        %p615 = pneg %p313
      $region54: #{particlenet_forward.1} parent=11 // pred_check_branch
        %617 = sbr.rel (%p615) target = $region56
      $region55: #{particlenet_forward.1} parent=11 // pred_region
        _
      $region56: #{particlenet_forward.1} parent=11 // pred_fallthru
        _
      // Predicated region
      $region57: #{particlenet_forward.1} parent=11 // pred_check
        %p618 = pneg %p334
      $region58: #{particlenet_forward.1} parent=11 // pred_check_branch
        %620 = sbr.rel (%p618) target = $region60
      $region59: #{particlenet_forward.1} parent=11 // pred_region
        _
      $region60: #{particlenet_forward.1} parent=11 // pred_fallthru
        _
      // Predicated region
      $region61: #{particlenet_forward.1} parent=11 // pred_check
        %p621 = pneg %p355
      $region62: #{particlenet_forward.1} parent=11 // pred_check_branch
        %623 = sbr.rel (%p621) target = $region64
      $region63: #{particlenet_forward.1} parent=11 // pred_region
        _
      $region64: #{particlenet_forward.1} parent=11 // pred_fallthru
        _
      // Predicated region
      $region65: #{particlenet_forward.1} parent=11 // pred_check
        %p624 = pneg %p376
      $region66: #{particlenet_forward.1} parent=11 // pred_check_branch
        %626 = sbr.rel (%p624) target = $region68
      $region67: #{particlenet_forward.1} parent=11 // pred_region
        _
      $region68: #{particlenet_forward.1} parent=11 // pred_fallthru
        _
      // Predicated region
      $region69: #{particlenet_forward.1} parent=11 // pred_check
        %p627 = pneg %p397
      $region70: #{particlenet_forward.1} parent=11 // pred_check_branch
        %629 = sbr.rel (%p627) target = $region72
      $region71: #{particlenet_forward.1} parent=11 // pred_region
        _
      $region72: #{particlenet_forward.1} parent=11 // pred_fallthru
        _
      // Predicated region
      $region73: #{particlenet_forward.1} parent=11 // pred_check
        %p630 = pneg %p418
      $region74: #{particlenet_forward.1} parent=11 // pred_check_branch
        %632 = sbr.rel (%p630) target = $region76
      $region75: #{particlenet_forward.1} parent=11 // pred_region
        _
      $region76: #{particlenet_forward.1} parent=11 // pred_fallthru
        _
      // Predicated region
      $region77: #{particlenet_forward.1} parent=11 // pred_check
        %p633 = pneg %p439
      $region78: #{particlenet_forward.1} parent=11 // pred_check_branch
        %635 = sbr.rel (%p633) target = $region80
      $region79: #{particlenet_forward.1} parent=11 // pred_region
        _
      $region80: #{particlenet_forward.1} parent=11 // pred_fallthru
        _
      // Predicated region
      $region81: #{particlenet_forward.1} parent=11 // pred_check
        %p636 = pneg %p460
      $region82: #{particlenet_forward.1} parent=11 // pred_check_branch
        %638 = sbr.rel (%p636) target = $region84
      $region83: #{particlenet_forward.1} parent=11 // pred_region
        _
      $region84: #{particlenet_forward.1} parent=11 // pred_fallthru
        _
      // Predicated region
      $region85: #{particlenet_forward.1} parent=11 // pred_check
        %p639 = pneg %p481
      $region86: #{particlenet_forward.1} parent=11 // pred_check_branch
        %641 = sbr.rel (%p639) target = $region88
      $region87: #{particlenet_forward.1} parent=11 // pred_region
        _
      $region88: #{particlenet_forward.1} parent=11 // pred_fallthru
        _
      // Predicated region
      $region89: #{particlenet_forward.1} parent=11 // pred_check
        %p642 = pneg %p502
      $region90: #{particlenet_forward.1} parent=11 // pred_check_branch
        %644 = sbr.rel (%p642) target = $region92
      $region91: #{particlenet_forward.1} parent=11 // pred_region
        _
      $region92: #{particlenet_forward.1} parent=11 // pred_fallthru
        _
      // Predicated region
      $region93: #{particlenet_forward.1} parent=11 // pred_check
        %p645 = pneg %p523
      $region94: #{particlenet_forward.1} parent=11 // pred_check_branch
        %647 = sbr.rel (%p645) target = $region96
      $region95: #{particlenet_forward.1} parent=11 // pred_region
        _
      $region96: #{particlenet_forward.1} parent=11 // pred_fallthru
        _
      // Predicated region
      $region97: #{particlenet_forward.1} parent=11 // pred_check
        %p648 = pneg %p544
      $region98: #{particlenet_forward.1} parent=11 // pred_check_branch
        %650 = sbr.rel (%p648) target = $region100
      $region99: #{particlenet_forward.1} parent=11 // pred_region
        _
      $region100: #{particlenet_forward.1} parent=11 // pred_fallthru
        _
    $region12: #{particlenet_forward.1} parent=5 // pred_fallthru
      _
    %p651 = scmp.lt.s32.totalorder %s30, 4
    // Predicated region
    $region101: #{particlenet_forward.1} parent=5 // pred_check
      %p652 = pneg %p651
    $region102: #{particlenet_forward.1} parent=5 // pred_check_branch
      %654 = sbr.rel (%p652) target = $region104
    $region103: #{particlenet_forward.1} parent=5 // pred_region
      // Predicated region
      $region105: #{particlenet_forward.1} parent=103 // pred_check
        %p655 = pneg %p50
      $region106: #{particlenet_forward.1} parent=103 // pred_check_branch
        %657 = sbr.rel (%p655) target = $region108
      $region107: #{particlenet_forward.1} parent=103 // pred_region
        %p658 = scmp.lt.s32.totalorder %s30, 3
        %s659 = scalar_select %p658, %s30, 3
        %s660 = smul.addr %s659, 2
        %s661 = smul.addr %s660, 4
        %s662 = scalar_lea.vmem %s0, %s661
      $region108: #{particlenet_forward.1} parent=103 // pred_fallthru
        _
      // Predicated region
      $region109: #{particlenet_forward.1} parent=103 // pred_check
        %p663 = pneg %p76
      $region110: #{particlenet_forward.1} parent=103 // pred_check_branch
        %665 = sbr.rel (%p663) target = $region112
      $region111: #{particlenet_forward.1} parent=103 // pred_region
        %p666 = scmp.lt.s32.totalorder %s30, 3
        %s667 = scalar_select %p666, %s30, 3
        %s668 = smul.addr %s667, 2
        %s669 = smul.addr %s668, 4
        %s670 = scalar_lea.vmem %s1, %s669
      $region112: #{particlenet_forward.1} parent=103 // pred_fallthru
        _
    $region104: #{particlenet_forward.1} parent=5 // pred_fallthru
      _
    %p671 = scmp.le.s32.totalorder 1, %s30
    %p672 = scmp.lt.s32.totalorder %s30, 5
    %p673 = pnand %p671, %p672
    %p674 = pneg %p673
    // Predicated region
    $region113: #{particlenet_forward.1} parent=5 // pred_check
      _
    $region114: #{particlenet_forward.1} parent=5 // pred_check_branch
      %676 = sbr.rel (%p673) target = $region116
    $region115: #{particlenet_forward.1} parent=5 // pred_region
      %s677 = ssub.s32 %s30, 1
      %p678 = scmp.lt.s32.totalorder %s35, 3
      %s679 = scalar_select %p678, %s35, 3
      %s680 = smul.addr %s679, 2
      %s681 = smul.addr %s680, 4
      %s682 = scalar_lea.vmem %s0, %s681
      %p683 = pneg %p56
      %p684 = pneg %p53
      %p685 = scmp.lt.s32.totalorder %s35, 3
      %s686 = scalar_select %p685, %s35, 3
      %s687 = smul.addr %s686, 2
      %s688 = smul.addr %s687, 4
      %s689 = scalar_lea.vmem %s1, %s688
      %p690 = pneg %p82
      %p691 = pneg %p79
      %p692 = pneg %p103
      %p693 = pneg %p100
      %p694 = pneg %p124
      %p695 = pneg %p121
      %p696 = pneg %p145
      %p697 = pneg %p142
      %p698 = pneg %p166
      %p699 = pneg %p163
      %p700 = pneg %p187
      %p701 = pneg %p184
      %p702 = pneg %p208
      %p703 = pneg %p205
      %p704 = pneg %p229
      %p705 = pneg %p226
      %p706 = pneg %p250
      %p707 = pneg %p247
      %p708 = pneg %p271
      %p709 = pneg %p268
      %p710 = pneg %p292
      %p711 = pneg %p289
      %p712 = pneg %p313
      %p713 = pneg %p310
      %p714 = pneg %p334
      %p715 = pneg %p331
      %p716 = pneg %p355
      %p717 = pneg %p352
      %p718 = pneg %p376
      %p719 = pneg %p373
      %p720 = pneg %p397
      %p721 = pneg %p394
      %p722 = pneg %p418
      %p723 = pneg %p415
      %p724 = pneg %p439
      %p725 = pneg %p436
      %p726 = pneg %p460
      %p727 = pneg %p457
      %p728 = pneg %p481
      %p729 = pneg %p478
      %p730 = pneg %p502
      %p731 = pneg %p499
      %p732 = pneg %p523
      %p733 = pneg %p520
      %p734 = pneg %p544
      %p735 = pneg %p541
      %p736 = pneg %p570
      %p737 = pneg %p567
      %p738 = scmp.lt.s32.totalorder %s35, 3
      %s739 = scalar_select %p738, %s35, 3
      %s740 = scalar_lea.vmem %s24, %s739
      %p741 = scmp.lt.s32.totalorder %s35, 3
      %s742 = scalar_select %p741, %s35, 3
      %s743 = smul.addr %s742, 2
      %s744 = smul.addr %s743, 4
      %s745 = scalar_lea.vmem %s0, %s744
      %p746 = scmp.lt.s32.totalorder %s35, 3
      %s747 = scalar_select %p746, %s35, 3
      %s748 = smul.addr %s747, 2
      %s749 = smul.addr %s748, 4
      %s750 = scalar_lea.vmem %s1, %s749
      %p751 = scmp.lt.s32.totalorder %s35, 3
      %s752 = scalar_select %p751, %s35, 3
      %s753 = scalar_lea.vmem %s24, %s752
      %v755 = vld [vmem:[%s745] sm:$0xf]
      %v756 = vld [vmem:[%s745 + $0x4] sm:$0xf]
      %v757 = vld [vmem:[%s750] sm:$0xf]
      %v758 = vld [vmem:[%s750 + $0x4] sm:$0xf]
      %v759 = vld [vmem:[%s2] sm:$0xf]
      %v760 = vld [vmem:[%s2 + $0x4] sm:$0xf]
      %v761 = vld [vmem:[%s2 + $0x8] sm:$0xf]
      %v762 = vld [vmem:[%s2 + $0xc] sm:$0xf]
      %v763 = vld [vmem:[%s2 + $0x10] sm:$0xf]
      %v764 = vld [vmem:[%s2 + $0x14] sm:$0xf]
      %v765 = vld [vmem:[%s2 + $0x18] sm:$0xf]
      %v766 = vld [vmem:[%s2 + $0x1c] sm:$0xf]
      %v767 = vld [vmem:[%s2 + $0x20] sm:$0xf]
      %v768 = vld [vmem:[%s2 + $0x24] sm:$0xf]
      %v769 = vld [vmem:[%s2 + $0x28] sm:$0xf]
      %v770 = vld [vmem:[%s2 + $0x2c] sm:$0xf]
      %v771 = vld [vmem:[%s2 + $0x30] sm:$0xf]
      %v772 = vld [vmem:[%s2 + $0x34] sm:$0xf]
      %v773 = vld [vmem:[%s2 + $0x38] sm:$0xf]
      %v774 = vld [vmem:[%s2 + $0x3c] sm:$0xf]
      %v775 = vld [vmem:[%s11] sm:$0x1]
      %v778 = vunpack.c.l.b16 %v757
      %v779 = vunpack.c.l.b16 %v758
      %v780 = vpack.c.b16 %v779, %v778
      %v798 = vunpack.c.l.b16 %v759
      %v799 = vunpack.c.l.b16 %v760
      %v800 = vunpack.c.l.b16 %v761
      %v801 = vunpack.c.l.b16 %v762
      %v802 = vunpack.c.l.b16 %v763
      %v803 = vunpack.c.l.b16 %v764
      %v804 = vunpack.c.l.b16 %v765
      %v805 = vunpack.c.l.b16 %v766
      %v806 = vunpack.c.l.b16 %v767
      %v807 = vunpack.c.l.b16 %v768
      %v808 = vunpack.c.l.b16 %v769
      %v809 = vunpack.c.l.b16 %v770
      %v810 = vunpack.c.l.b16 %v771
      %v811 = vunpack.c.l.b16 %v772
      %v812 = vunpack.c.l.b16 %v773
      %v813 = vunpack.c.l.b16 %v774
      %v814 = vpack.c.b16 %v799, %v798
      %v815 = vpack.c.b16 %v801, %v800
      %v816 = vpack.c.b16 %v803, %v802
      %v817 = vpack.c.b16 %v805, %v804
      %v818 = vpack.c.b16 %v807, %v806
      %v819 = vpack.c.b16 %v809, %v808
      %v820 = vpack.c.b16 %v811, %v810
      %v821 = vpack.c.b16 %v813, %v812
      %830 = vmatprep.subr.bf16.mxu0 0
      %831 = vmatpush1.bf16.msra.mxu0 %v821
      %832 = vmatprep.subr.bf16.mxu0 0
      %833 = vmatpush1.bf16.msra.mxu0 %v820
      %834 = vmatprep.subr.bf16.mxu0 0
      %835 = vmatpush1.bf16.msra.mxu0 %v819
      %836 = vmatprep.subr.bf16.mxu0 0
      %837 = vmatpush1.bf16.msra.mxu0 %v818
      %838 = vmatprep.subr.bf16.mxu0 0
      %839 = vmatpush1.bf16.msra.mxu0 %v817
      %840 = vmatprep.subr.bf16.mxu0 0
      %841 = vmatpush1.bf16.msra.mxu0 %v816
      %842 = vmatprep.subr.bf16.mxu0 0
      %843 = vmatpush1.bf16.msra.mxu0 %v815
      %844 = vmatprep.subr.bf16.mxu0 0
      %845 = vmatpush1.bf16.msra.mxu0 %v814
      %846 = vmatprep.subr.bf16.mxu0 0
      %847 = vmatpush2.bf16.msra.mxu0 0
      %848 = vmatprep.subr.bf16.mxu0 0
      %849 = vmatpush2.bf16.msra.mxu0 0
      %850 = vmatprep.subr.bf16.mxu0 0
      %851 = vmatpush2.bf16.msra.mxu0 0
      %852 = vmatprep.subr.bf16.mxu0 0
      %853 = vmatpush2.bf16.msra.mxu0 0
      %854 = vmatprep.subr.bf16.mxu0 0
      %855 = vmatpush2.bf16.msra.mxu0 0
      %856 = vmatprep.subr.bf16.mxu0 0
      %857 = vmatpush2.bf16.msra.mxu0 0
      %858 = vmatprep.subr.bf16.mxu0 0
      %859 = vmatpush2.bf16.msra.mxu0 0
      %860 = vmatprep.subr.bf16.mxu0 0
      %861 = vmatpush2.bf16.msra.mxu0 0
      %862 = vmatprep.mubr.bf16.mxu0 0
      %863 = vmatmul.mubr.bf16.gmra.mxu0 %v780
      %v864 = vpop.f32.mrf.mxu0
      %v865 = vadd.f32 0.0, %v864
      %v866 = vpop.f32.mrf.mxu0
      %v867 = vpop.f32.mrf.mxu0
      %v868 = vadd.f32 0.0, %v867
      %v869 = vpop.f32.mrf.mxu0
      %870 = vdwg.mxu0
      %v871 = vpack.c.bf16 %v868, %v865
      %v873 = vlaneseq
      %v874 = vshrl.u32 %v873, 7
      %v875 = vsub.s32 0, %v874
      %v876 = vrot.slane %v775, %v875
      %v880 = vunpack.c.l.b16 %v755
      %v881 = vunpack.c.l.b16 %v756
      %v882 = vpack.c.b16 %v881, %v880
      %vm883 = vcmask 130048
      %v885 = vsel %vm883, %v882, 0
      %887 = vmatprep.subr.bf16.mxu0 0
      %888 = vmatpush1.bf16.msra.mxu0 0
      %889 = vmatprep.subr.bf16.mxu0 0
      %890 = vmatpush1.bf16.msra.mxu0 0
      %891 = vmatprep.subr.bf16.mxu0 0
      %892 = vmatpush1.bf16.msra.mxu0 0
      %893 = vmatprep.subr.bf16.mxu0 0
      %894 = vmatpush1.bf16.msra.mxu0 0
      %895 = vmatprep.subr.bf16.mxu0 0
      %896 = vmatpush1.bf16.msra.mxu0 0
      %897 = vmatprep.subr.bf16.mxu0 0
      %898 = vmatpush1.bf16.msra.mxu0 0
      %899 = vmatprep.subr.bf16.mxu0 0
      %900 = vmatpush1.bf16.msra.mxu0 0
      %901 = vmatprep.subr.bf16.mxu0 0
      %902 = vmatpush1.bf16.msra.mxu0 %v871
      %903 = vmatprep.subr.bf16.mxu0 0
      %904 = vmatpush2.bf16.msra.mxu0 0
      %905 = vmatprep.subr.bf16.mxu0 0
      %906 = vmatpush2.bf16.msra.mxu0 0
      %907 = vmatprep.subr.bf16.mxu0 0
      %908 = vmatpush2.bf16.msra.mxu0 0
      %909 = vmatprep.subr.bf16.mxu0 0
      %910 = vmatpush2.bf16.msra.mxu0 0
      %911 = vmatprep.subr.bf16.mxu0 0
      %912 = vmatpush2.bf16.msra.mxu0 0
      %913 = vmatprep.subr.bf16.mxu0 0
      %914 = vmatpush2.bf16.msra.mxu0 0
      %915 = vmatprep.subr.bf16.mxu0 0
      %916 = vmatpush2.bf16.msra.mxu0 0
      %917 = vmatprep.subr.bf16.mxu0 0
      %918 = vmatpush2.bf16.msra.mxu0 0
      %919 = vmatprep.mubr.bf16.mxu0 0
      %920 = vmatmul.mubr.bf16.gmra.mxu0 %v885
      %v921 = vpop.f32.mrf.mxu0
      %v922 = vadd.f32 %v876, %v921
      %v923 = vpop.f32.mrf.mxu0
      %v924 = vpop.f32.mrf.mxu0
      %v925 = vadd.f32 %v876, %v924
      %v926 = vpop.f32.mrf.mxu0
      %927 = vdwg.mxu0
      %v928 = vmax.f32 %v922, 0.0
      %v929 = vmax.f32 %v925, 0.0
      %v930 = vpack.c.bf16 %v929, %v928
      %v931 = vld [vmem:[%s3] sm:$0xf]
      %v932 = vld [vmem:[%s3 + $0x4] sm:$0xf]
      %v933 = vld [vmem:[%s3 + $0x8] sm:$0xf]
      %v934 = vld [vmem:[%s3 + $0xc] sm:$0xf]
      %v935 = vld [vmem:[%s3 + $0x10] sm:$0xf]
      %v936 = vld [vmem:[%s3 + $0x14] sm:$0xf]
      %v937 = vld [vmem:[%s3 + $0x18] sm:$0xf]
      %v938 = vld [vmem:[%s3 + $0x1c] sm:$0xf]
      %v939 = vld [vmem:[%s3 + $0x20] sm:$0xf]
      %v940 = vld [vmem:[%s3 + $0x24] sm:$0xf]
      %v941 = vld [vmem:[%s3 + $0x28] sm:$0xf]
      %v942 = vld [vmem:[%s3 + $0x2c] sm:$0xf]
      %v943 = vld [vmem:[%s3 + $0x30] sm:$0xf]
      %v944 = vld [vmem:[%s3 + $0x34] sm:$0xf]
      %v945 = vld [vmem:[%s3 + $0x38] sm:$0xf]
      %v946 = vld [vmem:[%s3 + $0x3c] sm:$0xf]
      %v947 = vld [vmem:[%s12] sm:$0x1]
      %v964 = vunpack.c.l.b16 %v931
      %v965 = vunpack.c.l.b16 %v932
      %v966 = vunpack.c.l.b16 %v933
      %v967 = vunpack.c.l.b16 %v934
      %v968 = vunpack.c.l.b16 %v935
      %v969 = vunpack.c.l.b16 %v936
      %v970 = vunpack.c.l.b16 %v937
      %v971 = vunpack.c.l.b16 %v938
      %v972 = vunpack.c.l.b16 %v939
      %v973 = vunpack.c.l.b16 %v940
      %v974 = vunpack.c.l.b16 %v941
      %v975 = vunpack.c.l.b16 %v942
      %v976 = vunpack.c.l.b16 %v943
      %v977 = vunpack.c.l.b16 %v944
      %v978 = vunpack.c.l.b16 %v945
      %v979 = vunpack.c.l.b16 %v946
      %v980 = vpack.c.b16 %v965, %v964
      %v981 = vpack.c.b16 %v967, %v966
      %v982 = vpack.c.b16 %v969, %v968
      %v983 = vpack.c.b16 %v971, %v970
      %v984 = vpack.c.b16 %v973, %v972
      %v985 = vpack.c.b16 %v975, %v974
      %v986 = vpack.c.b16 %v977, %v976
      %v987 = vpack.c.b16 %v979, %v978
      %996 = vmatprep.subr.bf16.mxu0 0
      %997 = vmatpush1.bf16.msra.mxu0 %v987
      %998 = vmatprep.subr.bf16.mxu0 0
      %999 = vmatpush1.bf16.msra.mxu0 %v986
      %1000 = vmatprep.subr.bf16.mxu0 0
      %1001 = vmatpush1.bf16.msra.mxu0 %v985
      %1002 = vmatprep.subr.bf16.mxu0 0
      %1003 = vmatpush1.bf16.msra.mxu0 %v984
      %1004 = vmatprep.subr.bf16.mxu0 0
      %1005 = vmatpush1.bf16.msra.mxu0 %v983
      %1006 = vmatprep.subr.bf16.mxu0 0
      %1007 = vmatpush1.bf16.msra.mxu0 %v982
      %1008 = vmatprep.subr.bf16.mxu0 0
      %1009 = vmatpush1.bf16.msra.mxu0 %v981
      %1010 = vmatprep.subr.bf16.mxu0 0
      %1011 = vmatpush1.bf16.msra.mxu0 %v980
      %1012 = vmatprep.subr.bf16.mxu0 0
      %1013 = vmatpush2.bf16.msra.mxu0 0
      %1014 = vmatprep.subr.bf16.mxu0 0
      %1015 = vmatpush2.bf16.msra.mxu0 0
      %1016 = vmatprep.subr.bf16.mxu0 0
      %1017 = vmatpush2.bf16.msra.mxu0 0
      %1018 = vmatprep.subr.bf16.mxu0 0
      %1019 = vmatpush2.bf16.msra.mxu0 0
      %1020 = vmatprep.subr.bf16.mxu0 0
      %1021 = vmatpush2.bf16.msra.mxu0 0
      %1022 = vmatprep.subr.bf16.mxu0 0
      %1023 = vmatpush2.bf16.msra.mxu0 0
      %1024 = vmatprep.subr.bf16.mxu0 0
      %1025 = vmatpush2.bf16.msra.mxu0 0
      %1026 = vmatprep.subr.bf16.mxu0 0
      %1027 = vmatpush2.bf16.msra.mxu0 0
      %1028 = vmatprep.mubr.bf16.mxu0 0
      %1029 = vmatmul.mubr.bf16.gmra.mxu0 %v930
      %v1030 = vpop.f32.mrf.mxu0
      %v1031 = vadd.f32 0.0, %v1030
      %v1032 = vpop.f32.mrf.mxu0
      %v1033 = vpop.f32.mrf.mxu0
      %v1034 = vadd.f32 0.0, %v1033
      %v1035 = vpop.f32.mrf.mxu0
      %1036 = vdwg.mxu0
      %v1037 = vpack.c.bf16 %v1034, %v1031
      %v1039 = vlaneseq
      %v1040 = vshrl.u32 %v1039, 7
      %v1041 = vsub.s32 0, %v1040
      %v1042 = vrot.slane %v947, %v1041
      %1044 = vmatprep.subr.bf16.mxu0 0
      %1045 = vmatpush1.bf16.msra.mxu0 0
      %1046 = vmatprep.subr.bf16.mxu0 0
      %1047 = vmatpush1.bf16.msra.mxu0 0
      %1048 = vmatprep.subr.bf16.mxu0 0
      %1049 = vmatpush1.bf16.msra.mxu0 0
      %1050 = vmatprep.subr.bf16.mxu0 0
      %1051 = vmatpush1.bf16.msra.mxu0 0
      %1052 = vmatprep.subr.bf16.mxu0 0
      %1053 = vmatpush1.bf16.msra.mxu0 0
      %1054 = vmatprep.subr.bf16.mxu0 0
      %1055 = vmatpush1.bf16.msra.mxu0 0
      %1056 = vmatprep.subr.bf16.mxu0 0
      %1057 = vmatpush1.bf16.msra.mxu0 0
      %1058 = vmatprep.subr.bf16.mxu0 0
      %1059 = vmatpush1.bf16.msra.mxu0 %v1037
      %1060 = vmatprep.subr.bf16.mxu0 0
      %1061 = vmatpush2.bf16.msra.mxu0 0
      %1062 = vmatprep.subr.bf16.mxu0 0
      %1063 = vmatpush2.bf16.msra.mxu0 0
      %1064 = vmatprep.subr.bf16.mxu0 0
      %1065 = vmatpush2.bf16.msra.mxu0 0
      %1066 = vmatprep.subr.bf16.mxu0 0
      %1067 = vmatpush2.bf16.msra.mxu0 0
      %1068 = vmatprep.subr.bf16.mxu0 0
      %1069 = vmatpush2.bf16.msra.mxu0 0
      %1070 = vmatprep.subr.bf16.mxu0 0
      %1071 = vmatpush2.bf16.msra.mxu0 0
      %1072 = vmatprep.subr.bf16.mxu0 0
      %1073 = vmatpush2.bf16.msra.mxu0 0
      %1074 = vmatprep.subr.bf16.mxu0 0
      %1075 = vmatpush2.bf16.msra.mxu0 0
      %1076 = vmatprep.mubr.bf16.mxu0 0
      %1077 = vmatmul.mubr.bf16.gmra.mxu0 %v885
      %v1078 = vpop.f32.mrf.mxu0
      %v1079 = vadd.f32 %v1042, %v1078
      %v1080 = vpop.f32.mrf.mxu0
      %v1081 = vpop.f32.mrf.mxu0
      %v1082 = vadd.f32 %v1042, %v1081
      %v1083 = vpop.f32.mrf.mxu0
      %1084 = vdwg.mxu0
      %v1085 = vmax.f32 %v1079, 0.0
      %v1086 = vmax.f32 %v1082, 0.0
      %v1087 = vpack.c.bf16 %v1086, %v1085
      %v1088 = vld [vmem:[%s4] sm:$0xf]
      %v1089 = vld [vmem:[%s4 + $0x4] sm:$0xf]
      %v1090 = vld [vmem:[%s4 + $0x8] sm:$0xf]
      %v1091 = vld [vmem:[%s4 + $0xc] sm:$0xf]
      %v1092 = vld [vmem:[%s4 + $0x10] sm:$0xf]
      %v1093 = vld [vmem:[%s4 + $0x14] sm:$0xf]
      %v1094 = vld [vmem:[%s4 + $0x18] sm:$0xf]
      %v1095 = vld [vmem:[%s4 + $0x1c] sm:$0xf]
      %v1096 = vld [vmem:[%s4 + $0x20] sm:$0xf]
      %v1097 = vld [vmem:[%s4 + $0x24] sm:$0xf]
      %v1098 = vld [vmem:[%s4 + $0x28] sm:$0xf]
      %v1099 = vld [vmem:[%s4 + $0x2c] sm:$0xf]
      %v1100 = vld [vmem:[%s4 + $0x30] sm:$0xf]
      %v1101 = vld [vmem:[%s4 + $0x34] sm:$0xf]
      %v1102 = vld [vmem:[%s4 + $0x38] sm:$0xf]
      %v1103 = vld [vmem:[%s4 + $0x3c] sm:$0xf]
      %v1104 = vld [vmem:[%s13] sm:$0x1]
      %v1121 = vunpack.c.l.b16 %v1088
      %v1122 = vunpack.c.l.b16 %v1089
      %v1123 = vunpack.c.l.b16 %v1090
      %v1124 = vunpack.c.l.b16 %v1091
      %v1125 = vunpack.c.l.b16 %v1092
      %v1126 = vunpack.c.l.b16 %v1093
      %v1127 = vunpack.c.l.b16 %v1094
      %v1128 = vunpack.c.l.b16 %v1095
      %v1129 = vunpack.c.l.b16 %v1096
      %v1130 = vunpack.c.l.b16 %v1097
      %v1131 = vunpack.c.l.b16 %v1098
      %v1132 = vunpack.c.l.b16 %v1099
      %v1133 = vunpack.c.l.b16 %v1100
      %v1134 = vunpack.c.l.b16 %v1101
      %v1135 = vunpack.c.l.b16 %v1102
      %v1136 = vunpack.c.l.b16 %v1103
      %v1137 = vpack.c.b16 %v1122, %v1121
      %v1138 = vpack.c.b16 %v1124, %v1123
      %v1139 = vpack.c.b16 %v1126, %v1125
      %v1140 = vpack.c.b16 %v1128, %v1127
      %v1141 = vpack.c.b16 %v1130, %v1129
      %v1142 = vpack.c.b16 %v1132, %v1131
      %v1143 = vpack.c.b16 %v1134, %v1133
      %v1144 = vpack.c.b16 %v1136, %v1135
      %1153 = vmatprep.subr.bf16.mxu0 0
      %1154 = vmatpush1.bf16.msra.mxu0 %v1144
      %1155 = vmatprep.subr.bf16.mxu0 0
      %1156 = vmatpush1.bf16.msra.mxu0 %v1143
      %1157 = vmatprep.subr.bf16.mxu0 0
      %1158 = vmatpush1.bf16.msra.mxu0 %v1142
      %1159 = vmatprep.subr.bf16.mxu0 0
      %1160 = vmatpush1.bf16.msra.mxu0 %v1141
      %1161 = vmatprep.subr.bf16.mxu0 0
      %1162 = vmatpush1.bf16.msra.mxu0 %v1140
      %1163 = vmatprep.subr.bf16.mxu0 0
      %1164 = vmatpush1.bf16.msra.mxu0 %v1139
      %1165 = vmatprep.subr.bf16.mxu0 0
      %1166 = vmatpush1.bf16.msra.mxu0 %v1138
      %1167 = vmatprep.subr.bf16.mxu0 0
      %1168 = vmatpush1.bf16.msra.mxu0 %v1137
      %1169 = vmatprep.subr.bf16.mxu0 0
      %1170 = vmatpush2.bf16.msra.mxu0 0
      %1171 = vmatprep.subr.bf16.mxu0 0
      %1172 = vmatpush2.bf16.msra.mxu0 0
      %1173 = vmatprep.subr.bf16.mxu0 0
      %1174 = vmatpush2.bf16.msra.mxu0 0
      %1175 = vmatprep.subr.bf16.mxu0 0
      %1176 = vmatpush2.bf16.msra.mxu0 0
      %1177 = vmatprep.subr.bf16.mxu0 0
      %1178 = vmatpush2.bf16.msra.mxu0 0
      %1179 = vmatprep.subr.bf16.mxu0 0
      %1180 = vmatpush2.bf16.msra.mxu0 0
      %1181 = vmatprep.subr.bf16.mxu0 0
      %1182 = vmatpush2.bf16.msra.mxu0 0
      %1183 = vmatprep.subr.bf16.mxu0 0
      %1184 = vmatpush2.bf16.msra.mxu0 0
      %1185 = vmatprep.mubr.bf16.mxu0 0
      %1186 = vmatmul.mubr.bf16.gmra.mxu0 %v1087
      %v1187 = vpop.f32.mrf.mxu0
      %v1188 = vadd.f32 0.0, %v1187
      %v1189 = vpop.f32.mrf.mxu0
      %v1190 = vpop.f32.mrf.mxu0
      %v1191 = vadd.f32 0.0, %v1190
      %v1192 = vpop.f32.mrf.mxu0
      %1193 = vdwg.mxu0
      %v1194 = vpack.c.bf16 %v1191, %v1188
      %v1196 = vlaneseq
      %v1197 = vshrl.u32 %v1196, 7
      %v1198 = vsub.s32 0, %v1197
      %v1199 = vrot.slane %v1104, %v1198
      %1201 = vmatprep.subr.bf16.mxu0 0
      %1202 = vmatpush1.bf16.msra.mxu0 0
      %1203 = vmatprep.subr.bf16.mxu0 0
      %1204 = vmatpush1.bf16.msra.mxu0 0
      %1205 = vmatprep.subr.bf16.mxu0 0
      %1206 = vmatpush1.bf16.msra.mxu0 0
      %1207 = vmatprep.subr.bf16.mxu0 0
      %1208 = vmatpush1.bf16.msra.mxu0 0
      %1209 = vmatprep.subr.bf16.mxu0 0
      %1210 = vmatpush1.bf16.msra.mxu0 0
      %1211 = vmatprep.subr.bf16.mxu0 0
      %1212 = vmatpush1.bf16.msra.mxu0 0
      %1213 = vmatprep.subr.bf16.mxu0 0
      %1214 = vmatpush1.bf16.msra.mxu0 0
      %1215 = vmatprep.subr.bf16.mxu0 0
      %1216 = vmatpush1.bf16.msra.mxu0 %v1194
      %1217 = vmatprep.subr.bf16.mxu0 0
      %1218 = vmatpush2.bf16.msra.mxu0 0
      %1219 = vmatprep.subr.bf16.mxu0 0
      %1220 = vmatpush2.bf16.msra.mxu0 0
      %1221 = vmatprep.subr.bf16.mxu0 0
      %1222 = vmatpush2.bf16.msra.mxu0 0
      %1223 = vmatprep.subr.bf16.mxu0 0
      %1224 = vmatpush2.bf16.msra.mxu0 0
      %1225 = vmatprep.subr.bf16.mxu0 0
      %1226 = vmatpush2.bf16.msra.mxu0 0
      %1227 = vmatprep.subr.bf16.mxu0 0
      %1228 = vmatpush2.bf16.msra.mxu0 0
      %1229 = vmatprep.subr.bf16.mxu0 0
      %1230 = vmatpush2.bf16.msra.mxu0 0
      %1231 = vmatprep.subr.bf16.mxu0 0
      %1232 = vmatpush2.bf16.msra.mxu0 0
      %1233 = vmatprep.mubr.bf16.mxu0 0
      %1234 = vmatmul.mubr.bf16.gmra.mxu0 %v885
      %v1235 = vpop.f32.mrf.mxu0
      %v1236 = vadd.f32 %v1199, %v1235
      %v1237 = vpop.f32.mrf.mxu0
      %v1238 = vpop.f32.mrf.mxu0
      %v1239 = vadd.f32 %v1199, %v1238
      %v1240 = vpop.f32.mrf.mxu0
      %1241 = vdwg.mxu0
      %v1242 = vmax.f32 %v1236, 0.0
      %v1243 = vmax.f32 %v1239, 0.0
      %v1244 = vunpack.c.l.bf16 %v757
      %v1245 = vunpack.c.l.bf16 %v758
      %v1246 = vadd.f32 %v1242, %v1244
      %v1247 = vadd.f32 %v1243, %v1245
      %v1248 = vpack.c.bf16 %v1247, %v1246
      %v1249 = vld [vmem:[%s5] sm:$0xf]
      %v1250 = vld [vmem:[%s5 + $0x4] sm:$0xf]
      %v1251 = vld [vmem:[%s5 + $0x8] sm:$0xf]
      %v1252 = vld [vmem:[%s5 + $0xc] sm:$0xf]
      %v1253 = vld [vmem:[%s5 + $0x10] sm:$0xf]
      %v1254 = vld [vmem:[%s5 + $0x14] sm:$0xf]
      %v1255 = vld [vmem:[%s5 + $0x18] sm:$0xf]
      %v1256 = vld [vmem:[%s5 + $0x1c] sm:$0xf]
      %v1257 = vld [vmem:[%s5 + $0x20] sm:$0xf]
      %v1258 = vld [vmem:[%s5 + $0x24] sm:$0xf]
      %v1259 = vld [vmem:[%s5 + $0x28] sm:$0xf]
      %v1260 = vld [vmem:[%s5 + $0x2c] sm:$0xf]
      %v1261 = vld [vmem:[%s5 + $0x30] sm:$0xf]
      %v1262 = vld [vmem:[%s5 + $0x34] sm:$0xf]
      %v1263 = vld [vmem:[%s5 + $0x38] sm:$0xf]
      %v1264 = vld [vmem:[%s5 + $0x3c] sm:$0xf]
      %v1265 = vld [vmem:[%s14] sm:$0x1]
      %v1282 = vunpack.c.l.b16 %v1249
      %v1283 = vunpack.c.l.b16 %v1250
      %v1284 = vunpack.c.l.b16 %v1251
      %v1285 = vunpack.c.l.b16 %v1252
      %v1286 = vunpack.c.l.b16 %v1253
      %v1287 = vunpack.c.l.b16 %v1254
      %v1288 = vunpack.c.l.b16 %v1255
      %v1289 = vunpack.c.l.b16 %v1256
      %v1290 = vunpack.c.l.b16 %v1257
      %v1291 = vunpack.c.l.b16 %v1258
      %v1292 = vunpack.c.l.b16 %v1259
      %v1293 = vunpack.c.l.b16 %v1260
      %v1294 = vunpack.c.l.b16 %v1261
      %v1295 = vunpack.c.l.b16 %v1262
      %v1296 = vunpack.c.l.b16 %v1263
      %v1297 = vunpack.c.l.b16 %v1264
      %v1298 = vpack.c.b16 %v1283, %v1282
      %v1299 = vpack.c.b16 %v1285, %v1284
      %v1300 = vpack.c.b16 %v1287, %v1286
      %v1301 = vpack.c.b16 %v1289, %v1288
      %v1302 = vpack.c.b16 %v1291, %v1290
      %v1303 = vpack.c.b16 %v1293, %v1292
      %v1304 = vpack.c.b16 %v1295, %v1294
      %v1305 = vpack.c.b16 %v1297, %v1296
      %1314 = vmatprep.subr.bf16.mxu0 0
      %1315 = vmatpush1.bf16.msra.mxu0 %v1305
      %1316 = vmatprep.subr.bf16.mxu0 0
      %1317 = vmatpush1.bf16.msra.mxu0 %v1304
      %1318 = vmatprep.subr.bf16.mxu0 0
      %1319 = vmatpush1.bf16.msra.mxu0 %v1303
      %1320 = vmatprep.subr.bf16.mxu0 0
      %1321 = vmatpush1.bf16.msra.mxu0 %v1302
      %1322 = vmatprep.subr.bf16.mxu0 0
      %1323 = vmatpush1.bf16.msra.mxu0 %v1301
      %1324 = vmatprep.subr.bf16.mxu0 0
      %1325 = vmatpush1.bf16.msra.mxu0 %v1300
      %1326 = vmatprep.subr.bf16.mxu0 0
      %1327 = vmatpush1.bf16.msra.mxu0 %v1299
      %1328 = vmatprep.subr.bf16.mxu0 0
      %1329 = vmatpush1.bf16.msra.mxu0 %v1298
      %1330 = vmatprep.subr.bf16.mxu0 0
      %1331 = vmatpush2.bf16.msra.mxu0 0
      %1332 = vmatprep.subr.bf16.mxu0 0
      %1333 = vmatpush2.bf16.msra.mxu0 0
      %1334 = vmatprep.subr.bf16.mxu0 0
      %1335 = vmatpush2.bf16.msra.mxu0 0
      %1336 = vmatprep.subr.bf16.mxu0 0
      %1337 = vmatpush2.bf16.msra.mxu0 0
      %1338 = vmatprep.subr.bf16.mxu0 0
      %1339 = vmatpush2.bf16.msra.mxu0 0
      %1340 = vmatprep.subr.bf16.mxu0 0
      %1341 = vmatpush2.bf16.msra.mxu0 0
      %1342 = vmatprep.subr.bf16.mxu0 0
      %1343 = vmatpush2.bf16.msra.mxu0 0
      %1344 = vmatprep.subr.bf16.mxu0 0
      %1345 = vmatpush2.bf16.msra.mxu0 0
      %1346 = vmatprep.mubr.bf16.mxu0 0
      %1347 = vmatmul.mubr.bf16.gmra.mxu0 %v1248
      %v1348 = vpop.f32.mrf.mxu0
      %v1349 = vadd.f32 0.0, %v1348
      %v1350 = vpop.f32.mrf.mxu0
      %v1351 = vpop.f32.mrf.mxu0
      %v1352 = vadd.f32 0.0, %v1351
      %v1353 = vpop.f32.mrf.mxu0
      %1354 = vdwg.mxu0
      %v1355 = vpack.c.bf16 %v1352, %v1349
      %v1357 = vlaneseq
      %v1358 = vshrl.u32 %v1357, 7
      %v1359 = vsub.s32 0, %v1358
      %v1360 = vrot.slane %v1265, %v1359
      %1362 = vmatprep.subr.bf16.mxu0 0
      %1363 = vmatpush1.bf16.msra.mxu0 0
      %1364 = vmatprep.subr.bf16.mxu0 0
      %1365 = vmatpush1.bf16.msra.mxu0 0
      %1366 = vmatprep.subr.bf16.mxu0 0
      %1367 = vmatpush1.bf16.msra.mxu0 0
      %1368 = vmatprep.subr.bf16.mxu0 0
      %1369 = vmatpush1.bf16.msra.mxu0 0
      %1370 = vmatprep.subr.bf16.mxu0 0
      %1371 = vmatpush1.bf16.msra.mxu0 0
      %1372 = vmatprep.subr.bf16.mxu0 0
      %1373 = vmatpush1.bf16.msra.mxu0 0
      %1374 = vmatprep.subr.bf16.mxu0 0
      %1375 = vmatpush1.bf16.msra.mxu0 0
      %1376 = vmatprep.subr.bf16.mxu0 0
      %1377 = vmatpush1.bf16.msra.mxu0 %v1355
      %1378 = vmatprep.subr.bf16.mxu0 0
      %1379 = vmatpush2.bf16.msra.mxu0 0
      %1380 = vmatprep.subr.bf16.mxu0 0
      %1381 = vmatpush2.bf16.msra.mxu0 0
      %1382 = vmatprep.subr.bf16.mxu0 0
      %1383 = vmatpush2.bf16.msra.mxu0 0
      %1384 = vmatprep.subr.bf16.mxu0 0
      %1385 = vmatpush2.bf16.msra.mxu0 0
      %1386 = vmatprep.subr.bf16.mxu0 0
      %1387 = vmatpush2.bf16.msra.mxu0 0
      %1388 = vmatprep.subr.bf16.mxu0 0
      %1389 = vmatpush2.bf16.msra.mxu0 0
      %1390 = vmatprep.subr.bf16.mxu0 0
      %1391 = vmatpush2.bf16.msra.mxu0 0
      %1392 = vmatprep.subr.bf16.mxu0 0
      %1393 = vmatpush2.bf16.msra.mxu0 0
      %1394 = vmatprep.mubr.bf16.mxu0 0
      %1395 = vmatmul.mubr.bf16.gmra.mxu0 %v885
      %v1396 = vpop.f32.mrf.mxu0
      %v1397 = vadd.f32 %v1360, %v1396
      %v1398 = vpop.f32.mrf.mxu0
      %v1399 = vpop.f32.mrf.mxu0
      %v1400 = vadd.f32 %v1360, %v1399
      %v1401 = vpop.f32.mrf.mxu0
      %1402 = vdwg.mxu0
      %v1403 = vmax.f32 %v1397, 0.0
      %v1404 = vmax.f32 %v1400, 0.0
      %v1405 = vpack.c.bf16 %v1404, %v1403
      %v1406 = vld [vmem:[%s6] sm:$0xf]
      %v1407 = vld [vmem:[%s6 + $0x4] sm:$0xf]
      %v1408 = vld [vmem:[%s6 + $0x8] sm:$0xf]
      %v1409 = vld [vmem:[%s6 + $0xc] sm:$0xf]
      %v1410 = vld [vmem:[%s6 + $0x10] sm:$0xf]
      %v1411 = vld [vmem:[%s6 + $0x14] sm:$0xf]
      %v1412 = vld [vmem:[%s6 + $0x18] sm:$0xf]
      %v1413 = vld [vmem:[%s6 + $0x1c] sm:$0xf]
      %v1414 = vld [vmem:[%s6 + $0x20] sm:$0xf]
      %v1415 = vld [vmem:[%s6 + $0x24] sm:$0xf]
      %v1416 = vld [vmem:[%s6 + $0x28] sm:$0xf]
      %v1417 = vld [vmem:[%s6 + $0x2c] sm:$0xf]
      %v1418 = vld [vmem:[%s6 + $0x30] sm:$0xf]
      %v1419 = vld [vmem:[%s6 + $0x34] sm:$0xf]
      %v1420 = vld [vmem:[%s6 + $0x38] sm:$0xf]
      %v1421 = vld [vmem:[%s6 + $0x3c] sm:$0xf]
      %v1422 = vld [vmem:[%s15] sm:$0x1]
      %v1439 = vunpack.c.l.b16 %v1406
      %v1440 = vunpack.c.l.b16 %v1407
      %v1441 = vunpack.c.l.b16 %v1408
      %v1442 = vunpack.c.l.b16 %v1409
      %v1443 = vunpack.c.l.b16 %v1410
      %v1444 = vunpack.c.l.b16 %v1411
      %v1445 = vunpack.c.l.b16 %v1412
      %v1446 = vunpack.c.l.b16 %v1413
      %v1447 = vunpack.c.l.b16 %v1414
      %v1448 = vunpack.c.l.b16 %v1415
      %v1449 = vunpack.c.l.b16 %v1416
      %v1450 = vunpack.c.l.b16 %v1417
      %v1451 = vunpack.c.l.b16 %v1418
      %v1452 = vunpack.c.l.b16 %v1419
      %v1453 = vunpack.c.l.b16 %v1420
      %v1454 = vunpack.c.l.b16 %v1421
      %v1455 = vpack.c.b16 %v1440, %v1439
      %v1456 = vpack.c.b16 %v1442, %v1441
      %v1457 = vpack.c.b16 %v1444, %v1443
      %v1458 = vpack.c.b16 %v1446, %v1445
      %v1459 = vpack.c.b16 %v1448, %v1447
      %v1460 = vpack.c.b16 %v1450, %v1449
      %v1461 = vpack.c.b16 %v1452, %v1451
      %v1462 = vpack.c.b16 %v1454, %v1453
      %1471 = vmatprep.subr.bf16.mxu0 0
      %1472 = vmatpush1.bf16.msra.mxu0 %v1462
      %1473 = vmatprep.subr.bf16.mxu0 0
      %1474 = vmatpush1.bf16.msra.mxu0 %v1461
      %1475 = vmatprep.subr.bf16.mxu0 0
      %1476 = vmatpush1.bf16.msra.mxu0 %v1460
      %1477 = vmatprep.subr.bf16.mxu0 0
      %1478 = vmatpush1.bf16.msra.mxu0 %v1459
      %1479 = vmatprep.subr.bf16.mxu0 0
      %1480 = vmatpush1.bf16.msra.mxu0 %v1458
      %1481 = vmatprep.subr.bf16.mxu0 0
      %1482 = vmatpush1.bf16.msra.mxu0 %v1457
      %1483 = vmatprep.subr.bf16.mxu0 0
      %1484 = vmatpush1.bf16.msra.mxu0 %v1456
      %1485 = vmatprep.subr.bf16.mxu0 0
      %1486 = vmatpush1.bf16.msra.mxu0 %v1455
      %1487 = vmatprep.subr.bf16.mxu0 0
      %1488 = vmatpush2.bf16.msra.mxu0 0
      %1489 = vmatprep.subr.bf16.mxu0 0
      %1490 = vmatpush2.bf16.msra.mxu0 0
      %1491 = vmatprep.subr.bf16.mxu0 0
      %1492 = vmatpush2.bf16.msra.mxu0 0
      %1493 = vmatprep.subr.bf16.mxu0 0
      %1494 = vmatpush2.bf16.msra.mxu0 0
      %1495 = vmatprep.subr.bf16.mxu0 0
      %1496 = vmatpush2.bf16.msra.mxu0 0
      %1497 = vmatprep.subr.bf16.mxu0 0
      %1498 = vmatpush2.bf16.msra.mxu0 0
      %1499 = vmatprep.subr.bf16.mxu0 0
      %1500 = vmatpush2.bf16.msra.mxu0 0
      %1501 = vmatprep.subr.bf16.mxu0 0
      %1502 = vmatpush2.bf16.msra.mxu0 0
      %1503 = vmatprep.mubr.bf16.mxu0 0
      %1504 = vmatmul.mubr.bf16.gmra.mxu0 %v1405
      %v1505 = vpop.f32.mrf.mxu0
      %v1506 = vadd.f32 0.0, %v1505
      %v1507 = vpop.f32.mrf.mxu0
      %v1508 = vpop.f32.mrf.mxu0
      %v1509 = vadd.f32 0.0, %v1508
      %v1510 = vpop.f32.mrf.mxu0
      %1511 = vdwg.mxu0
      %v1512 = vpack.c.bf16 %v1509, %v1506
      %v1514 = vlaneseq
      %v1515 = vshrl.u32 %v1514, 7
      %v1516 = vsub.s32 0, %v1515
      %v1517 = vrot.slane %v1422, %v1516
      %1519 = vmatprep.subr.bf16.mxu0 0
      %1520 = vmatpush1.bf16.msra.mxu0 0
      %1521 = vmatprep.subr.bf16.mxu0 0
      %1522 = vmatpush1.bf16.msra.mxu0 0
      %1523 = vmatprep.subr.bf16.mxu0 0
      %1524 = vmatpush1.bf16.msra.mxu0 0
      %1525 = vmatprep.subr.bf16.mxu0 0
      %1526 = vmatpush1.bf16.msra.mxu0 0
      %1527 = vmatprep.subr.bf16.mxu0 0
      %1528 = vmatpush1.bf16.msra.mxu0 0
      %1529 = vmatprep.subr.bf16.mxu0 0
      %1530 = vmatpush1.bf16.msra.mxu0 0
      %1531 = vmatprep.subr.bf16.mxu0 0
      %1532 = vmatpush1.bf16.msra.mxu0 0
      %1533 = vmatprep.subr.bf16.mxu0 0
      %1534 = vmatpush1.bf16.msra.mxu0 %v1512
      %1535 = vmatprep.subr.bf16.mxu0 0
      %1536 = vmatpush2.bf16.msra.mxu0 0
      %1537 = vmatprep.subr.bf16.mxu0 0
      %1538 = vmatpush2.bf16.msra.mxu0 0
      %1539 = vmatprep.subr.bf16.mxu0 0
      %1540 = vmatpush2.bf16.msra.mxu0 0
      %1541 = vmatprep.subr.bf16.mxu0 0
      %1542 = vmatpush2.bf16.msra.mxu0 0
      %1543 = vmatprep.subr.bf16.mxu0 0
      %1544 = vmatpush2.bf16.msra.mxu0 0
      %1545 = vmatprep.subr.bf16.mxu0 0
      %1546 = vmatpush2.bf16.msra.mxu0 0
      %1547 = vmatprep.subr.bf16.mxu0 0
      %1548 = vmatpush2.bf16.msra.mxu0 0
      %1549 = vmatprep.subr.bf16.mxu0 0
      %1550 = vmatpush2.bf16.msra.mxu0 0
      %1551 = vmatprep.mubr.bf16.mxu0 0
      %1552 = vmatmul.mubr.bf16.gmra.mxu0 %v885
      %v1553 = vpop.f32.mrf.mxu0
      %v1554 = vadd.f32 %v1517, %v1553
      %v1555 = vpop.f32.mrf.mxu0
      %v1556 = vpop.f32.mrf.mxu0
      %v1557 = vadd.f32 %v1517, %v1556
      %v1558 = vpop.f32.mrf.mxu0
      %1559 = vdwg.mxu0
      %v1560 = vmax.f32 %v1554, 0.0
      %v1561 = vmax.f32 %v1557, 0.0
      %v1562 = vpack.c.bf16 %v1561, %v1560
      %v1563 = vld [vmem:[%s7] sm:$0xf]
      %v1564 = vld [vmem:[%s7 + $0x4] sm:$0xf]
      %v1565 = vld [vmem:[%s7 + $0x8] sm:$0xf]
      %v1566 = vld [vmem:[%s7 + $0xc] sm:$0xf]
      %v1567 = vld [vmem:[%s7 + $0x10] sm:$0xf]
      %v1568 = vld [vmem:[%s7 + $0x14] sm:$0xf]
      %v1569 = vld [vmem:[%s7 + $0x18] sm:$0xf]
      %v1570 = vld [vmem:[%s7 + $0x1c] sm:$0xf]
      %v1571 = vld [vmem:[%s7 + $0x20] sm:$0xf]
      %v1572 = vld [vmem:[%s7 + $0x24] sm:$0xf]
      %v1573 = vld [vmem:[%s7 + $0x28] sm:$0xf]
      %v1574 = vld [vmem:[%s7 + $0x2c] sm:$0xf]
      %v1575 = vld [vmem:[%s7 + $0x30] sm:$0xf]
      %v1576 = vld [vmem:[%s7 + $0x34] sm:$0xf]
      %v1577 = vld [vmem:[%s7 + $0x38] sm:$0xf]
      %v1578 = vld [vmem:[%s7 + $0x3c] sm:$0xf]
      %v1579 = vld [vmem:[%s16] sm:$0x1]
      %v1596 = vunpack.c.l.b16 %v1563
      %v1597 = vunpack.c.l.b16 %v1564
      %v1598 = vunpack.c.l.b16 %v1565
      %v1599 = vunpack.c.l.b16 %v1566
      %v1600 = vunpack.c.l.b16 %v1567
      %v1601 = vunpack.c.l.b16 %v1568
      %v1602 = vunpack.c.l.b16 %v1569
      %v1603 = vunpack.c.l.b16 %v1570
      %v1604 = vunpack.c.l.b16 %v1571
      %v1605 = vunpack.c.l.b16 %v1572
      %v1606 = vunpack.c.l.b16 %v1573
      %v1607 = vunpack.c.l.b16 %v1574
      %v1608 = vunpack.c.l.b16 %v1575
      %v1609 = vunpack.c.l.b16 %v1576
      %v1610 = vunpack.c.l.b16 %v1577
      %v1611 = vunpack.c.l.b16 %v1578
      %v1612 = vpack.c.b16 %v1597, %v1596
      %v1613 = vpack.c.b16 %v1599, %v1598
      %v1614 = vpack.c.b16 %v1601, %v1600
      %v1615 = vpack.c.b16 %v1603, %v1602
      %v1616 = vpack.c.b16 %v1605, %v1604
      %v1617 = vpack.c.b16 %v1607, %v1606
      %v1618 = vpack.c.b16 %v1609, %v1608
      %v1619 = vpack.c.b16 %v1611, %v1610
      %1628 = vmatprep.subr.bf16.mxu0 0
      %1629 = vmatpush1.bf16.msra.mxu0 %v1619
      %1630 = vmatprep.subr.bf16.mxu0 0
      %1631 = vmatpush1.bf16.msra.mxu0 %v1618
      %1632 = vmatprep.subr.bf16.mxu0 0
      %1633 = vmatpush1.bf16.msra.mxu0 %v1617
      %1634 = vmatprep.subr.bf16.mxu0 0
      %1635 = vmatpush1.bf16.msra.mxu0 %v1616
      %1636 = vmatprep.subr.bf16.mxu0 0
      %1637 = vmatpush1.bf16.msra.mxu0 %v1615
      %1638 = vmatprep.subr.bf16.mxu0 0
      %1639 = vmatpush1.bf16.msra.mxu0 %v1614
      %1640 = vmatprep.subr.bf16.mxu0 0
      %1641 = vmatpush1.bf16.msra.mxu0 %v1613
      %1642 = vmatprep.subr.bf16.mxu0 0
      %1643 = vmatpush1.bf16.msra.mxu0 %v1612
      %1644 = vmatprep.subr.bf16.mxu0 0
      %1645 = vmatpush2.bf16.msra.mxu0 0
      %1646 = vmatprep.subr.bf16.mxu0 0
      %1647 = vmatpush2.bf16.msra.mxu0 0
      %1648 = vmatprep.subr.bf16.mxu0 0
      %1649 = vmatpush2.bf16.msra.mxu0 0
      %1650 = vmatprep.subr.bf16.mxu0 0
      %1651 = vmatpush2.bf16.msra.mxu0 0
      %1652 = vmatprep.subr.bf16.mxu0 0
      %1653 = vmatpush2.bf16.msra.mxu0 0
      %1654 = vmatprep.subr.bf16.mxu0 0
      %1655 = vmatpush2.bf16.msra.mxu0 0
      %1656 = vmatprep.subr.bf16.mxu0 0
      %1657 = vmatpush2.bf16.msra.mxu0 0
      %1658 = vmatprep.subr.bf16.mxu0 0
      %1659 = vmatpush2.bf16.msra.mxu0 0
      %1660 = vmatprep.mubr.bf16.mxu0 0
      %1661 = vmatmul.mubr.bf16.gmra.mxu0 %v1562
      %v1662 = vpop.f32.mrf.mxu0
      %v1663 = vadd.f32 0.0, %v1662
      %v1664 = vpop.f32.mrf.mxu0
      %v1665 = vpop.f32.mrf.mxu0
      %v1666 = vadd.f32 0.0, %v1665
      %v1667 = vpop.f32.mrf.mxu0
      %1668 = vdwg.mxu0
      %v1669 = vpack.c.bf16 %v1666, %v1663
      %v1671 = vlaneseq
      %v1672 = vshrl.u32 %v1671, 7
      %v1673 = vsub.s32 0, %v1672
      %v1674 = vrot.slane %v1579, %v1673
      %1676 = vmatprep.subr.bf16.mxu0 0
      %1677 = vmatpush1.bf16.msra.mxu0 0
      %1678 = vmatprep.subr.bf16.mxu0 0
      %1679 = vmatpush1.bf16.msra.mxu0 0
      %1680 = vmatprep.subr.bf16.mxu0 0
      %1681 = vmatpush1.bf16.msra.mxu0 0
      %1682 = vmatprep.subr.bf16.mxu0 0
      %1683 = vmatpush1.bf16.msra.mxu0 0
      %1684 = vmatprep.subr.bf16.mxu0 0
      %1685 = vmatpush1.bf16.msra.mxu0 0
      %1686 = vmatprep.subr.bf16.mxu0 0
      %1687 = vmatpush1.bf16.msra.mxu0 0
      %1688 = vmatprep.subr.bf16.mxu0 0
      %1689 = vmatpush1.bf16.msra.mxu0 0
      %1690 = vmatprep.subr.bf16.mxu0 0
      %1691 = vmatpush1.bf16.msra.mxu0 %v1669
      %1692 = vmatprep.subr.bf16.mxu0 0
      %1693 = vmatpush2.bf16.msra.mxu0 0
      %1694 = vmatprep.subr.bf16.mxu0 0
      %1695 = vmatpush2.bf16.msra.mxu0 0
      %1696 = vmatprep.subr.bf16.mxu0 0
      %1697 = vmatpush2.bf16.msra.mxu0 0
      %1698 = vmatprep.subr.bf16.mxu0 0
      %1699 = vmatpush2.bf16.msra.mxu0 0
      %1700 = vmatprep.subr.bf16.mxu0 0
      %1701 = vmatpush2.bf16.msra.mxu0 0
      %1702 = vmatprep.subr.bf16.mxu0 0
      %1703 = vmatpush2.bf16.msra.mxu0 0
      %1704 = vmatprep.subr.bf16.mxu0 0
      %1705 = vmatpush2.bf16.msra.mxu0 0
      %1706 = vmatprep.subr.bf16.mxu0 0
      %1707 = vmatpush2.bf16.msra.mxu0 0
      %1708 = vmatprep.mubr.bf16.mxu0 0
      %1709 = vmatmul.mubr.bf16.gmra.mxu0 %v885
      %v1710 = vpop.f32.mrf.mxu0
      %v1711 = vadd.f32 %v1674, %v1710
      %v1712 = vpop.f32.mrf.mxu0
      %v1713 = vpop.f32.mrf.mxu0
      %v1714 = vadd.f32 %v1674, %v1713
      %v1715 = vpop.f32.mrf.mxu0
      %1716 = vdwg.mxu0
      %v1717 = vmax.f32 %v1711, 0.0
      %v1718 = vmax.f32 %v1714, 0.0
      %v1719 = vpack.c.bf16 %v1718, %v1717
      %v1720 = vld [vmem:[%s8] sm:$0xff]
      %v1721 = vld [vmem:[%s8 + $0x8] sm:$0xff]
      %v1722 = vld [vmem:[%s8 + $0x10] sm:$0xff]
      %v1723 = vld [vmem:[%s8 + $0x18] sm:$0xff]
      %v1724 = vld [vmem:[%s8 + $0x20] sm:$0xff]
      %v1725 = vld [vmem:[%s8 + $0x28] sm:$0xff]
      %v1726 = vld [vmem:[%s8 + $0x30] sm:$0xff]
      %v1727 = vld [vmem:[%s8 + $0x38] sm:$0xff]
      %v1728 = vld [vmem:[%s8 + $0x40] sm:$0xff]
      %v1729 = vld [vmem:[%s8 + $0x48] sm:$0xff]
      %v1730 = vld [vmem:[%s8 + $0x50] sm:$0xff]
      %v1731 = vld [vmem:[%s8 + $0x58] sm:$0xff]
      %v1732 = vld [vmem:[%s8 + $0x60] sm:$0xff]
      %v1733 = vld [vmem:[%s8 + $0x68] sm:$0xff]
      %v1734 = vld [vmem:[%s8 + $0x70] sm:$0xff]
      %v1735 = vld [vmem:[%s8 + $0x78] sm:$0xff]
      %v1736 = vld [vmem:[%s17] sm:$0x3]
      %1737 = vmatprep.subr.bf16.mxu0 0
      %1738 = vmatpush1.bf16.msra.mxu0 0
      %1739 = vmatprep.subr.bf16.mxu0 0
      %1740 = vmatpush1.bf16.msra.mxu0 0
      %1741 = vmatprep.subr.bf16.mxu0 0
      %1742 = vmatpush1.bf16.msra.mxu0 0
      %1743 = vmatprep.subr.bf16.mxu0 0
      %1744 = vmatpush1.bf16.msra.mxu0 0
      %1745 = vmatprep.subr.bf16.mxu0 0
      %1746 = vmatpush1.bf16.msra.mxu0 0
      %1747 = vmatprep.subr.bf16.mxu0 0
      %1748 = vmatpush1.bf16.msra.mxu0 0
      %1749 = vmatprep.subr.bf16.mxu0 0
      %1750 = vmatpush1.bf16.msra.mxu0 0
      %1751 = vmatprep.subr.bf16.mxu0 0
      %1752 = vmatpush1.bf16.msra.mxu0 %v1719
      %1753 = vmatprep.subr.bf16.mxu0 0
      %1754 = vmatpush2.bf16.msra.mxu0 0
      %1755 = vmatprep.subr.bf16.mxu0 0
      %1756 = vmatpush2.bf16.msra.mxu0 0
      %1757 = vmatprep.subr.bf16.mxu0 0
      %1758 = vmatpush2.bf16.msra.mxu0 0
      %1759 = vmatprep.subr.bf16.mxu0 0
      %1760 = vmatpush2.bf16.msra.mxu0 0
      %1761 = vmatprep.subr.bf16.mxu0 0
      %1762 = vmatpush2.bf16.msra.mxu0 0
      %1763 = vmatprep.subr.bf16.mxu0 0
      %1764 = vmatpush2.bf16.msra.mxu0 0
      %1765 = vmatprep.subr.bf16.mxu0 0
      %1766 = vmatpush2.bf16.msra.mxu0 0
      %1767 = vmatprep.subr.bf16.mxu0 0
      %1768 = vmatpush2.bf16.msra.mxu0 0
      %1769 = vmatprep.mubr.bf16.mxu0 0
      %1770 = vmatmul.mubr.bf16.gmra.mxu0 %v885
      %v1771 = vpop.f32.mrf.mxu0
      %v1772 = vadd.f32 0.0, %v1771
      %v1773 = vpop.f32.mrf.mxu0
      %v1774 = vpop.f32.mrf.mxu0
      %v1775 = vadd.f32 0.0, %v1774
      %v1776 = vpop.f32.mrf.mxu0
      %1777 = vdwg.mxu0
      %v1778 = vpack.c.bf16 %v1775, %v1772
      %v1780 = vlaneseq
      %v1781 = vshrl.u32 %v1780, 7
      %v1782 = vsub.s32 0, %v1781
      %v1783 = vrot.slane %v1736, %v1782
      %v1784 = vlaneseq
      %v1785 = vshrl.u32 %v1784, 7
      %v1786 = vsub.s32 1, %v1785
      %v1787 = vrot.slane %v1736, %v1786
      %v1806 = vunpack.c.l.b16 %v1720
      %v1807 = vunpack.c.h.b16 %v1720
      %v1808 = vunpack.c.l.b16 %v1721
      %v1809 = vunpack.c.h.b16 %v1721
      %v1810 = vunpack.c.l.b16 %v1722
      %v1811 = vunpack.c.h.b16 %v1722
      %v1812 = vunpack.c.l.b16 %v1723
      %v1813 = vunpack.c.h.b16 %v1723
      %v1814 = vunpack.c.l.b16 %v1724
      %v1815 = vunpack.c.h.b16 %v1724
      %v1816 = vunpack.c.l.b16 %v1725
      %v1817 = vunpack.c.h.b16 %v1725
      %v1818 = vunpack.c.l.b16 %v1726
      %v1819 = vunpack.c.h.b16 %v1726
      %v1820 = vunpack.c.l.b16 %v1727
      %v1821 = vunpack.c.h.b16 %v1727
      %v1822 = vunpack.c.l.b16 %v1728
      %v1823 = vunpack.c.h.b16 %v1728
      %v1824 = vunpack.c.l.b16 %v1729
      %v1825 = vunpack.c.h.b16 %v1729
      %v1826 = vunpack.c.l.b16 %v1730
      %v1827 = vunpack.c.h.b16 %v1730
      %v1828 = vunpack.c.l.b16 %v1731
      %v1829 = vunpack.c.h.b16 %v1731
      %v1830 = vunpack.c.l.b16 %v1732
      %v1831 = vunpack.c.h.b16 %v1732
      %v1832 = vunpack.c.l.b16 %v1733
      %v1833 = vunpack.c.h.b16 %v1733
      %v1834 = vunpack.c.l.b16 %v1734
      %v1835 = vunpack.c.h.b16 %v1734
      %v1836 = vunpack.c.l.b16 %v1735
      %v1837 = vunpack.c.h.b16 %v1735
      %v1838 = vpack.c.b16 %v1808, %v1806
      %v1839 = vpack.c.b16 %v1809, %v1807
      %v1840 = vpack.c.b16 %v1812, %v1810
      %v1841 = vpack.c.b16 %v1813, %v1811
      %v1842 = vpack.c.b16 %v1816, %v1814
      %v1843 = vpack.c.b16 %v1817, %v1815
      %v1844 = vpack.c.b16 %v1820, %v1818
      %v1845 = vpack.c.b16 %v1821, %v1819
      %v1846 = vpack.c.b16 %v1824, %v1822
      %v1847 = vpack.c.b16 %v1825, %v1823
      %v1848 = vpack.c.b16 %v1828, %v1826
      %v1849 = vpack.c.b16 %v1829, %v1827
      %v1850 = vpack.c.b16 %v1832, %v1830
      %v1851 = vpack.c.b16 %v1833, %v1831
      %v1852 = vpack.c.b16 %v1836, %v1834
      %v1853 = vpack.c.b16 %v1837, %v1835
      %1870 = vmatprep.subr.bf16.mxu0 %v1853
      %1871 = vmatpush1.bf16.msra.mxu0 %v1852
      %1872 = vmatprep.subr.bf16.mxu0 %v1851
      %1873 = vmatpush1.bf16.msra.mxu0 %v1850
      %1874 = vmatprep.subr.bf16.mxu0 %v1849
      %1875 = vmatpush1.bf16.msra.mxu0 %v1848
      %1876 = vmatprep.subr.bf16.mxu0 %v1847
      %1877 = vmatpush1.bf16.msra.mxu0 %v1846
      %1878 = vmatprep.subr.bf16.mxu0 %v1845
      %1879 = vmatpush1.bf16.msra.mxu0 %v1844
      %1880 = vmatprep.subr.bf16.mxu0 %v1843
      %1881 = vmatpush1.bf16.msra.mxu0 %v1842
      %1882 = vmatprep.subr.bf16.mxu0 %v1841
      %1883 = vmatpush1.bf16.msra.mxu0 %v1840
      %1884 = vmatprep.subr.bf16.mxu0 %v1839
      %1885 = vmatpush1.bf16.msra.mxu0 %v1838
      %1886 = vmatprep.subr.bf16.mxu0 0
      %1887 = vmatpush2.bf16.msra.mxu0 0
      %1888 = vmatprep.subr.bf16.mxu0 0
      %1889 = vmatpush2.bf16.msra.mxu0 0
      %1890 = vmatprep.subr.bf16.mxu0 0
      %1891 = vmatpush2.bf16.msra.mxu0 0
      %1892 = vmatprep.subr.bf16.mxu0 0
      %1893 = vmatpush2.bf16.msra.mxu0 0
      %1894 = vmatprep.subr.bf16.mxu0 0
      %1895 = vmatpush2.bf16.msra.mxu0 0
      %1896 = vmatprep.subr.bf16.mxu0 0
      %1897 = vmatpush2.bf16.msra.mxu0 0
      %1898 = vmatprep.subr.bf16.mxu0 0
      %1899 = vmatpush2.bf16.msra.mxu0 0
      %1900 = vmatprep.subr.bf16.mxu0 0
      %1901 = vmatpush2.bf16.msra.mxu0 0
      %1902 = vmatprep.mubr.bf16.mxu0 0
      %1903 = vmatmul.mubr.bf16.gmra.mxu0 %v1778
      %v1904 = vpop.f32.mrf.mxu0
      %v1905 = vadd.f32 %v1783, %v1904
      %v1906 = vpop.f32.mrf.mxu0
      %v1907 = vadd.f32 %v1787, %v1906
      %v1908 = vpop.f32.mrf.mxu0
      %v1909 = vadd.f32 %v1783, %v1908
      %v1910 = vpop.f32.mrf.mxu0
      %v1911 = vadd.f32 %v1787, %v1910
      %1912 = vdwg.mxu0
      %v1913 = vmax.f32 %v1905, 0.0
      %v1914 = vmax.f32 %v1907, 0.0
      %v1915 = vmax.f32 %v1909, 0.0
      %v1916 = vmax.f32 %v1911, 0.0
      %v1917 = vpack.c.bf16 %v1915, %v1913
      %v1918 = vpack.c.bf16 %v1916, %v1914
      %v1919 = vld [vmem:[%s9] sm:$0xf]
      %v1920 = vld [vmem:[%s9 + $0x4] sm:$0xf]
      %v1921 = vld [vmem:[%s9 + $0x8] sm:$0xf]
      %v1922 = vld [vmem:[%s9 + $0xc] sm:$0xf]
      %v1923 = vld [vmem:[%s9 + $0x10] sm:$0xf]
      %v1924 = vld [vmem:[%s9 + $0x14] sm:$0xf]
      %v1925 = vld [vmem:[%s9 + $0x18] sm:$0xf]
      %v1926 = vld [vmem:[%s9 + $0x1c] sm:$0xf]
      %v1927 = vld [vmem:[%s9 + $0x20] sm:$0xf]
      %v1928 = vld [vmem:[%s9 + $0x24] sm:$0xf]
      %v1929 = vld [vmem:[%s9 + $0x28] sm:$0xf]
      %v1930 = vld [vmem:[%s9 + $0x2c] sm:$0xf]
      %v1931 = vld [vmem:[%s9 + $0x30] sm:$0xf]
      %v1932 = vld [vmem:[%s9 + $0x34] sm:$0xf]
      %v1933 = vld [vmem:[%s9 + $0x38] sm:$0xf]
      %v1934 = vld [vmem:[%s9 + $0x3c] sm:$0xf]
      %v1935 = vld [vmem:[%s9 + $0x40] sm:$0xf]
      %v1936 = vld [vmem:[%s9 + $0x44] sm:$0xf]
      %v1937 = vld [vmem:[%s9 + $0x48] sm:$0xf]
      %v1938 = vld [vmem:[%s9 + $0x4c] sm:$0xf]
      %v1939 = vld [vmem:[%s9 + $0x50] sm:$0xf]
      %v1940 = vld [vmem:[%s9 + $0x54] sm:$0xf]
      %v1941 = vld [vmem:[%s9 + $0x58] sm:$0xf]
      %v1942 = vld [vmem:[%s9 + $0x5c] sm:$0xf]
      %v1943 = vld [vmem:[%s9 + $0x60] sm:$0xf]
      %v1944 = vld [vmem:[%s9 + $0x64] sm:$0xf]
      %v1945 = vld [vmem:[%s9 + $0x68] sm:$0xf]
      %v1946 = vld [vmem:[%s9 + $0x6c] sm:$0xf]
      %v1947 = vld [vmem:[%s9 + $0x70] sm:$0xf]
      %v1948 = vld [vmem:[%s9 + $0x74] sm:$0xf]
      %v1949 = vld [vmem:[%s9 + $0x78] sm:$0xf]
      %v1950 = vld [vmem:[%s9 + $0x7c] sm:$0xf]
      %v1951 = vld [vmem:[%s18] sm:$0x1]
      %v1984 = vunpack.c.l.b16 %v1919
      %v1985 = vunpack.c.l.b16 %v1920
      %v1986 = vunpack.c.l.b16 %v1921
      %v1987 = vunpack.c.l.b16 %v1922
      %v1988 = vunpack.c.l.b16 %v1923
      %v1989 = vunpack.c.l.b16 %v1924
      %v1990 = vunpack.c.l.b16 %v1925
      %v1991 = vunpack.c.l.b16 %v1926
      %v1992 = vunpack.c.l.b16 %v1927
      %v1993 = vunpack.c.l.b16 %v1928
      %v1994 = vunpack.c.l.b16 %v1929
      %v1995 = vunpack.c.l.b16 %v1930
      %v1996 = vunpack.c.l.b16 %v1931
      %v1997 = vunpack.c.l.b16 %v1932
      %v1998 = vunpack.c.l.b16 %v1933
      %v1999 = vunpack.c.l.b16 %v1934
      %v2000 = vunpack.c.l.b16 %v1935
      %v2001 = vunpack.c.l.b16 %v1936
      %v2002 = vunpack.c.l.b16 %v1937
      %v2003 = vunpack.c.l.b16 %v1938
      %v2004 = vunpack.c.l.b16 %v1939
      %v2005 = vunpack.c.l.b16 %v1940
      %v2006 = vunpack.c.l.b16 %v1941
      %v2007 = vunpack.c.l.b16 %v1942
      %v2008 = vunpack.c.l.b16 %v1943
      %v2009 = vunpack.c.l.b16 %v1944
      %v2010 = vunpack.c.l.b16 %v1945
      %v2011 = vunpack.c.l.b16 %v1946
      %v2012 = vunpack.c.l.b16 %v1947
      %v2013 = vunpack.c.l.b16 %v1948
      %v2014 = vunpack.c.l.b16 %v1949
      %v2015 = vunpack.c.l.b16 %v1950
      %v2016 = vpack.c.b16 %v1985, %v1984
      %v2017 = vpack.c.b16 %v1987, %v1986
      %v2018 = vpack.c.b16 %v1989, %v1988
      %v2019 = vpack.c.b16 %v1991, %v1990
      %v2020 = vpack.c.b16 %v1993, %v1992
      %v2021 = vpack.c.b16 %v1995, %v1994
      %v2022 = vpack.c.b16 %v1997, %v1996
      %v2023 = vpack.c.b16 %v1999, %v1998
      %v2024 = vpack.c.b16 %v2001, %v2000
      %v2025 = vpack.c.b16 %v2003, %v2002
      %v2026 = vpack.c.b16 %v2005, %v2004
      %v2027 = vpack.c.b16 %v2007, %v2006
      %v2028 = vpack.c.b16 %v2009, %v2008
      %v2029 = vpack.c.b16 %v2011, %v2010
      %v2030 = vpack.c.b16 %v2013, %v2012
      %v2031 = vpack.c.b16 %v2015, %v2014
      %2048 = vmatprep.subr.bf16.mxu0 0
      %2049 = vmatpush1.bf16.msra.mxu0 %v2023
      %2050 = vmatprep.subr.bf16.mxu0 0
      %2051 = vmatpush1.bf16.msra.mxu0 %v2022
      %2052 = vmatprep.subr.bf16.mxu0 0
      %2053 = vmatpush1.bf16.msra.mxu0 %v2021
      %2054 = vmatprep.subr.bf16.mxu0 0
      %2055 = vmatpush1.bf16.msra.mxu0 %v2020
      %2056 = vmatprep.subr.bf16.mxu0 0
      %2057 = vmatpush1.bf16.msra.mxu0 %v2019
      %2058 = vmatprep.subr.bf16.mxu0 0
      %2059 = vmatpush1.bf16.msra.mxu0 %v2018
      %2060 = vmatprep.subr.bf16.mxu0 0
      %2061 = vmatpush1.bf16.msra.mxu0 %v2017
      %2062 = vmatprep.subr.bf16.mxu0 0
      %2063 = vmatpush1.bf16.msra.mxu0 %v2016
      %2064 = vmatprep.subr.bf16.mxu0 0
      %2065 = vmatpush2.bf16.msra.mxu0 %v2031
      %2066 = vmatprep.subr.bf16.mxu0 0
      %2067 = vmatpush2.bf16.msra.mxu0 %v2030
      %2068 = vmatprep.subr.bf16.mxu0 0
      %2069 = vmatpush2.bf16.msra.mxu0 %v2029
      %2070 = vmatprep.subr.bf16.mxu0 0
      %2071 = vmatpush2.bf16.msra.mxu0 %v2028
      %2072 = vmatprep.subr.bf16.mxu0 0
      %2073 = vmatpush2.bf16.msra.mxu0 %v2027
      %2074 = vmatprep.subr.bf16.mxu0 0
      %2075 = vmatpush2.bf16.msra.mxu0 %v2026
      %2076 = vmatprep.subr.bf16.mxu0 0
      %2077 = vmatpush2.bf16.msra.mxu0 %v2025
      %2078 = vmatprep.subr.bf16.mxu0 0
      %2079 = vmatpush2.bf16.msra.mxu0 %v2024
      %2080 = vmatprep.mubr.bf16.mxu0 %v1918
      %2081 = vmatmul.mubr.bf16.gmra.mxu0 %v1917
      %v2082 = vpop.f32.mrf.mxu0
      %v2083 = vadd.f32 0.0, %v2082
      %v2084 = vpop.f32.mrf.mxu0
      %v2085 = vpop.f32.mrf.mxu0
      %v2086 = vadd.f32 0.0, %v2085
      %v2087 = vpop.f32.mrf.mxu0
      %2088 = vdwg.mxu0
      %v2089 = vpack.c.bf16 %v2086, %v2083
      %v2091 = vlaneseq
      %v2092 = vshrl.u32 %v2091, 7
      %v2093 = vsub.s32 0, %v2092
      %v2094 = vrot.slane %v1951, %v2093
      %2096 = vmatprep.subr.bf16.mxu0 0
      %2097 = vmatpush1.bf16.msra.mxu0 0
      %2098 = vmatprep.subr.bf16.mxu0 0
      %2099 = vmatpush1.bf16.msra.mxu0 0
      %2100 = vmatprep.subr.bf16.mxu0 0
      %2101 = vmatpush1.bf16.msra.mxu0 0
      %2102 = vmatprep.subr.bf16.mxu0 0
      %2103 = vmatpush1.bf16.msra.mxu0 0
      %2104 = vmatprep.subr.bf16.mxu0 0
      %2105 = vmatpush1.bf16.msra.mxu0 0
      %2106 = vmatprep.subr.bf16.mxu0 0
      %2107 = vmatpush1.bf16.msra.mxu0 0
      %2108 = vmatprep.subr.bf16.mxu0 0
      %2109 = vmatpush1.bf16.msra.mxu0 0
      %2110 = vmatprep.subr.bf16.mxu0 0
      %2111 = vmatpush1.bf16.msra.mxu0 %v2089
      %2112 = vmatprep.subr.bf16.mxu0 0
      %2113 = vmatpush2.bf16.msra.mxu0 0
      %2114 = vmatprep.subr.bf16.mxu0 0
      %2115 = vmatpush2.bf16.msra.mxu0 0
      %2116 = vmatprep.subr.bf16.mxu0 0
      %2117 = vmatpush2.bf16.msra.mxu0 0
      %2118 = vmatprep.subr.bf16.mxu0 0
      %2119 = vmatpush2.bf16.msra.mxu0 0
      %2120 = vmatprep.subr.bf16.mxu0 0
      %2121 = vmatpush2.bf16.msra.mxu0 0
      %2122 = vmatprep.subr.bf16.mxu0 0
      %2123 = vmatpush2.bf16.msra.mxu0 0
      %2124 = vmatprep.subr.bf16.mxu0 0
      %2125 = vmatpush2.bf16.msra.mxu0 0
      %2126 = vmatprep.subr.bf16.mxu0 0
      %2127 = vmatpush2.bf16.msra.mxu0 0
      %2128 = vmatprep.mubr.bf16.mxu0 0
      %2129 = vmatmul.mubr.bf16.gmra.mxu0 %v885
      %v2130 = vpop.f32.mrf.mxu0
      %v2131 = vadd.f32 %v2094, %v2130
      %v2132 = vpop.f32.mrf.mxu0
      %v2133 = vpop.f32.mrf.mxu0
      %v2134 = vadd.f32 %v2094, %v2133
      %v2135 = vpop.f32.mrf.mxu0
      %2136 = vdwg.mxu0
      %v2137 = vmax.f32 %v2131, 0.0
      %v2138 = vmax.f32 %v2134, 0.0
      %v2139 = vpack.c.bf16 %v2138, %v2137
      %v2140 = vld [vmem:[%s10] sm:$0xff]
      %v2141 = vld [vmem:[%s10 + $0x8] sm:$0xff]
      %v2142 = vld [vmem:[%s10 + $0x10] sm:$0xff]
      %v2143 = vld [vmem:[%s10 + $0x18] sm:$0xff]
      %v2144 = vld [vmem:[%s10 + $0x20] sm:$0xff]
      %v2145 = vld [vmem:[%s10 + $0x28] sm:$0xff]
      %v2146 = vld [vmem:[%s10 + $0x30] sm:$0xff]
      %v2147 = vld [vmem:[%s10 + $0x38] sm:$0xff]
      %v2148 = vld [vmem:[%s10 + $0x40] sm:$0xff]
      %v2149 = vld [vmem:[%s10 + $0x48] sm:$0xff]
      %v2150 = vld [vmem:[%s10 + $0x50] sm:$0xff]
      %v2151 = vld [vmem:[%s10 + $0x58] sm:$0xff]
      %v2152 = vld [vmem:[%s10 + $0x60] sm:$0xff]
      %v2153 = vld [vmem:[%s10 + $0x68] sm:$0xff]
      %v2154 = vld [vmem:[%s10 + $0x70] sm:$0xff]
      %v2155 = vld [vmem:[%s10 + $0x78] sm:$0xff]
      %v2156 = vld [vmem:[%s19] sm:$0x3]
      %2157 = vmatprep.subr.bf16.mxu0 0
      %2158 = vmatpush1.bf16.msra.mxu0 0
      %2159 = vmatprep.subr.bf16.mxu0 0
      %2160 = vmatpush1.bf16.msra.mxu0 0
      %2161 = vmatprep.subr.bf16.mxu0 0
      %2162 = vmatpush1.bf16.msra.mxu0 0
      %2163 = vmatprep.subr.bf16.mxu0 0
      %2164 = vmatpush1.bf16.msra.mxu0 0
      %2165 = vmatprep.subr.bf16.mxu0 0
      %2166 = vmatpush1.bf16.msra.mxu0 0
      %2167 = vmatprep.subr.bf16.mxu0 0
      %2168 = vmatpush1.bf16.msra.mxu0 0
      %2169 = vmatprep.subr.bf16.mxu0 0
      %2170 = vmatpush1.bf16.msra.mxu0 0
      %2171 = vmatprep.subr.bf16.mxu0 0
      %2172 = vmatpush1.bf16.msra.mxu0 %v2139
      %2173 = vmatprep.subr.bf16.mxu0 0
      %2174 = vmatpush2.bf16.msra.mxu0 0
      %2175 = vmatprep.subr.bf16.mxu0 0
      %2176 = vmatpush2.bf16.msra.mxu0 0
      %2177 = vmatprep.subr.bf16.mxu0 0
      %2178 = vmatpush2.bf16.msra.mxu0 0
      %2179 = vmatprep.subr.bf16.mxu0 0
      %2180 = vmatpush2.bf16.msra.mxu0 0
      %2181 = vmatprep.subr.bf16.mxu0 0
      %2182 = vmatpush2.bf16.msra.mxu0 0
      %2183 = vmatprep.subr.bf16.mxu0 0
      %2184 = vmatpush2.bf16.msra.mxu0 0
      %2185 = vmatprep.subr.bf16.mxu0 0
      %2186 = vmatpush2.bf16.msra.mxu0 0
      %2187 = vmatprep.subr.bf16.mxu0 0
      %2188 = vmatpush2.bf16.msra.mxu0 0
      %2189 = vmatprep.mubr.bf16.mxu0 0
      %2190 = vmatmul.mubr.bf16.gmra.mxu0 %v885
      %v2191 = vpop.f32.mrf.mxu0
      %v2192 = vadd.f32 0.0, %v2191
      %v2193 = vpop.f32.mrf.mxu0
      %v2194 = vpop.f32.mrf.mxu0
      %v2195 = vadd.f32 0.0, %v2194
      %v2196 = vpop.f32.mrf.mxu0
      %2197 = vdwg.mxu0
      %v2198 = vpack.c.bf16 %v2195, %v2192
      %v2200 = vlaneseq
      %v2201 = vshrl.u32 %v2200, 7
      %v2202 = vsub.s32 0, %v2201
      %v2203 = vrot.slane %v2156, %v2202
      %v2204 = vlaneseq
      %v2205 = vshrl.u32 %v2204, 7
      %v2206 = vsub.s32 1, %v2205
      %v2207 = vrot.slane %v2156, %v2206
      %v2226 = vunpack.c.l.b16 %v2140
      %v2227 = vunpack.c.h.b16 %v2140
      %v2228 = vunpack.c.l.b16 %v2141
      %v2229 = vunpack.c.h.b16 %v2141
      %v2230 = vunpack.c.l.b16 %v2142
      %v2231 = vunpack.c.h.b16 %v2142
      %v2232 = vunpack.c.l.b16 %v2143
      %v2233 = vunpack.c.h.b16 %v2143
      %v2234 = vunpack.c.l.b16 %v2144
      %v2235 = vunpack.c.h.b16 %v2144
      %v2236 = vunpack.c.l.b16 %v2145
      %v2237 = vunpack.c.h.b16 %v2145
      %v2238 = vunpack.c.l.b16 %v2146
      %v2239 = vunpack.c.h.b16 %v2146
      %v2240 = vunpack.c.l.b16 %v2147
      %v2241 = vunpack.c.h.b16 %v2147
      %v2242 = vunpack.c.l.b16 %v2148
      %v2243 = vunpack.c.h.b16 %v2148
      %v2244 = vunpack.c.l.b16 %v2149
      %v2245 = vunpack.c.h.b16 %v2149
      %v2246 = vunpack.c.l.b16 %v2150
      %v2247 = vunpack.c.h.b16 %v2150
      %v2248 = vunpack.c.l.b16 %v2151
      %v2249 = vunpack.c.h.b16 %v2151
      %v2250 = vunpack.c.l.b16 %v2152
      %v2251 = vunpack.c.h.b16 %v2152
      %v2252 = vunpack.c.l.b16 %v2153
      %v2253 = vunpack.c.h.b16 %v2153
      %v2254 = vunpack.c.l.b16 %v2154
      %v2255 = vunpack.c.h.b16 %v2154
      %v2256 = vunpack.c.l.b16 %v2155
      %v2257 = vunpack.c.h.b16 %v2155
      %v2258 = vpack.c.b16 %v2228, %v2226
      %v2259 = vpack.c.b16 %v2229, %v2227
      %v2260 = vpack.c.b16 %v2232, %v2230
      %v2261 = vpack.c.b16 %v2233, %v2231
      %v2262 = vpack.c.b16 %v2236, %v2234
      %v2263 = vpack.c.b16 %v2237, %v2235
      %v2264 = vpack.c.b16 %v2240, %v2238
      %v2265 = vpack.c.b16 %v2241, %v2239
      %v2266 = vpack.c.b16 %v2244, %v2242
      %v2267 = vpack.c.b16 %v2245, %v2243
      %v2268 = vpack.c.b16 %v2248, %v2246
      %v2269 = vpack.c.b16 %v2249, %v2247
      %v2270 = vpack.c.b16 %v2252, %v2250
      %v2271 = vpack.c.b16 %v2253, %v2251
      %v2272 = vpack.c.b16 %v2256, %v2254
      %v2273 = vpack.c.b16 %v2257, %v2255
      %2290 = vmatprep.subr.bf16.mxu0 %v2273
      %2291 = vmatpush1.bf16.msra.mxu0 %v2272
      %2292 = vmatprep.subr.bf16.mxu0 %v2271
      %2293 = vmatpush1.bf16.msra.mxu0 %v2270
      %2294 = vmatprep.subr.bf16.mxu0 %v2269
      %2295 = vmatpush1.bf16.msra.mxu0 %v2268
      %2296 = vmatprep.subr.bf16.mxu0 %v2267
      %2297 = vmatpush1.bf16.msra.mxu0 %v2266
      %2298 = vmatprep.subr.bf16.mxu0 %v2265
      %2299 = vmatpush1.bf16.msra.mxu0 %v2264
      %2300 = vmatprep.subr.bf16.mxu0 %v2263
      %2301 = vmatpush1.bf16.msra.mxu0 %v2262
      %2302 = vmatprep.subr.bf16.mxu0 %v2261
      %2303 = vmatpush1.bf16.msra.mxu0 %v2260
      %2304 = vmatprep.subr.bf16.mxu0 %v2259
      %2305 = vmatpush1.bf16.msra.mxu0 %v2258
      %2306 = vmatprep.subr.bf16.mxu0 0
      %2307 = vmatpush2.bf16.msra.mxu0 0
      %2308 = vmatprep.subr.bf16.mxu0 0
      %2309 = vmatpush2.bf16.msra.mxu0 0
      %2310 = vmatprep.subr.bf16.mxu0 0
      %2311 = vmatpush2.bf16.msra.mxu0 0
      %2312 = vmatprep.subr.bf16.mxu0 0
      %2313 = vmatpush2.bf16.msra.mxu0 0
      %2314 = vmatprep.subr.bf16.mxu0 0
      %2315 = vmatpush2.bf16.msra.mxu0 0
      %2316 = vmatprep.subr.bf16.mxu0 0
      %2317 = vmatpush2.bf16.msra.mxu0 0
      %2318 = vmatprep.subr.bf16.mxu0 0
      %2319 = vmatpush2.bf16.msra.mxu0 0
      %2320 = vmatprep.subr.bf16.mxu0 0
      %2321 = vmatpush2.bf16.msra.mxu0 0
      %2322 = vmatprep.mubr.bf16.mxu0 0
      %2323 = vmatmul.mubr.bf16.gmra.mxu0 %v2198
      %v2324 = vpop.f32.mrf.mxu0
      %v2325 = vadd.f32 %v2203, %v2324
      %v2326 = vpop.f32.mrf.mxu0
      %v2327 = vadd.f32 %v2207, %v2326
      %v2328 = vpop.f32.mrf.mxu0
      %v2329 = vadd.f32 %v2203, %v2328
      %v2330 = vpop.f32.mrf.mxu0
      %v2331 = vadd.f32 %v2207, %v2330
      %2332 = vdwg.mxu0
      %v2333 = vmax.f32 %v2325, 0.0
      %v2334 = vmax.f32 %v2327, 0.0
      %v2335 = vmax.f32 %v2329, 0.0
      %v2336 = vmax.f32 %v2331, 0.0
      %v2337 = vpack.c.bf16 %v2335, %v2333
      %v2338 = vpack.c.bf16 %v2336, %v2334
      %v2339 = vunpack.c.l.bf16 %v2337
      %v2340 = vunpack.c.l.bf16 %v2338
      %v2341 = vunpack.c.h.bf16 %v2337
      %v2342 = vunpack.c.h.bf16 %v2338
      %v2343 = vadd.f32 %v2339, %v2341
      %v2344 = vrot.slane %v2343, 4
      %v2345 = vadd.f32 %v2343, %v2344
      %v2346 = vrot.slane %v2345, 2
      %v2347 = vadd.f32 %v2345, %v2346
      %v2348 = vrot.slane %v2347, 1
      %v2349 = vadd.f32 %v2347, %v2348
      %v2350 = vadd.f32 %v2340, %v2342
      %v2351 = vrot.slane %v2350, 4
      %v2352 = vadd.f32 %v2350, %v2351
      %v2353 = vrot.slane %v2352, 2
      %v2354 = vadd.f32 %v2352, %v2353
      %v2355 = vrot.slane %v2354, 1
      %v2356 = vadd.f32 %v2354, %v2355
      %v2357 = vrcp.pop 16.0
      %v2358 = vmul.f32 %v2349, %v2357
      %v2359 = vmul.f32 %v2356, %v2357
      %v2360 = vpack.c.bf16 %v2358, %v2358
      %v2361 = vpack.c.bf16 %v2359, %v2359
      %v2362 = vld [vmem:[%s20] sm:$0xff]
      %v2363 = vld [vmem:[%s20 + $0x8] sm:$0xff]
      %v2364 = vld [vmem:[%s20 + $0x10] sm:$0xff]
      %v2365 = vld [vmem:[%s20 + $0x18] sm:$0xff]
      %v2366 = vld [vmem:[%s20 + $0x20] sm:$0xff]
      %v2367 = vld [vmem:[%s20 + $0x28] sm:$0xff]
      %v2368 = vld [vmem:[%s20 + $0x30] sm:$0xff]
      %v2369 = vld [vmem:[%s20 + $0x38] sm:$0xff]
      %v2370 = vld [vmem:[%s20 + $0x40] sm:$0xff]
      %v2371 = vld [vmem:[%s20 + $0x48] sm:$0xff]
      %v2372 = vld [vmem:[%s20 + $0x50] sm:$0xff]
      %v2373 = vld [vmem:[%s20 + $0x58] sm:$0xff]
      %v2374 = vld [vmem:[%s20 + $0x60] sm:$0xff]
      %v2375 = vld [vmem:[%s20 + $0x68] sm:$0xff]
      %v2376 = vld [vmem:[%s20 + $0x70] sm:$0xff]
      %v2377 = vld [vmem:[%s20 + $0x78] sm:$0xff]
      %v2378 = vld [vmem:[%s20 + $0x80] sm:$0xff]
      %v2379 = vld [vmem:[%s20 + $0x88] sm:$0xff]
      %v2380 = vld [vmem:[%s20 + $0x90] sm:$0xff]
      %v2381 = vld [vmem:[%s20 + $0x98] sm:$0xff]
      %v2382 = vld [vmem:[%s20 + $0xa0] sm:$0xff]
      %v2383 = vld [vmem:[%s20 + $0xa8] sm:$0xff]
      %v2384 = vld [vmem:[%s20 + $0xb0] sm:$0xff]
      %v2385 = vld [vmem:[%s20 + $0xb8] sm:$0xff]
      %v2386 = vld [vmem:[%s20 + $0xc0] sm:$0xff]
      %v2387 = vld [vmem:[%s20 + $0xc8] sm:$0xff]
      %v2388 = vld [vmem:[%s20 + $0xd0] sm:$0xff]
      %v2389 = vld [vmem:[%s20 + $0xd8] sm:$0xff]
      %v2390 = vld [vmem:[%s20 + $0xe0] sm:$0xff]
      %v2391 = vld [vmem:[%s20 + $0xe8] sm:$0xff]
      %v2392 = vld [vmem:[%s20 + $0xf0] sm:$0xff]
      %v2393 = vld [vmem:[%s20 + $0xf8] sm:$0xff]
      %v2394 = vld [vmem:[%s20 + $0x100] sm:$0xff]
      %v2395 = vld [vmem:[%s20 + $0x108] sm:$0xff]
      %v2396 = vld [vmem:[%s20 + $0x110] sm:$0xff]
      %v2397 = vld [vmem:[%s20 + $0x118] sm:$0xff]
      %v2398 = vld [vmem:[%s20 + $0x120] sm:$0xff]
      %v2399 = vld [vmem:[%s20 + $0x128] sm:$0xff]
      %v2400 = vld [vmem:[%s20 + $0x130] sm:$0xff]
      %v2401 = vld [vmem:[%s20 + $0x138] sm:$0xff]
      %v2402 = vld [vmem:[%s20 + $0x140] sm:$0xff]
      %v2403 = vld [vmem:[%s20 + $0x148] sm:$0xff]
      %v2404 = vld [vmem:[%s20 + $0x150] sm:$0xff]
      %v2405 = vld [vmem:[%s20 + $0x158] sm:$0xff]
      %v2406 = vld [vmem:[%s20 + $0x160] sm:$0xff]
      %v2407 = vld [vmem:[%s20 + $0x168] sm:$0xff]
      %v2408 = vld [vmem:[%s20 + $0x170] sm:$0xff]
      %v2409 = vld [vmem:[%s20 + $0x178] sm:$0xff]
      %v2410 = vld [vmem:[%s20 + $0x180] sm:$0xff]
      %v2411 = vld [vmem:[%s20 + $0x188] sm:$0xff]
      %v2412 = vld [vmem:[%s20 + $0x190] sm:$0xff]
      %v2413 = vld [vmem:[%s20 + $0x198] sm:$0xff]
      %v2414 = vld [vmem:[%s20 + $0x1a0] sm:$0xff]
      %v2415 = vld [vmem:[%s20 + $0x1a8] sm:$0xff]
      %v2416 = vld [vmem:[%s20 + $0x1b0] sm:$0xff]
      %v2417 = vld [vmem:[%s20 + $0x1b8] sm:$0xff]
      %v2418 = vld [vmem:[%s20 + $0x1c0] sm:$0xff]
      %v2419 = vld [vmem:[%s20 + $0x1c8] sm:$0xff]
      %v2420 = vld [vmem:[%s20 + $0x1d0] sm:$0xff]
      %v2421 = vld [vmem:[%s20 + $0x1d8] sm:$0xff]
      %v2422 = vld [vmem:[%s20 + $0x1e0] sm:$0xff]
      %v2423 = vld [vmem:[%s20 + $0x1e8] sm:$0xff]
      %v2424 = vld [vmem:[%s20 + $0x1f0] sm:$0xff]
      %v2425 = vld [vmem:[%s20 + $0x1f8] sm:$0xff]
      %v2426 = vld [vmem:[%s21] sm:$0xf]
      %v2491 = vunpack.c.l.b16 %v2362
      %v2492 = vunpack.c.h.b16 %v2362
      %v2493 = vunpack.c.l.b16 %v2363
      %v2494 = vunpack.c.h.b16 %v2363
      %v2495 = vunpack.c.l.b16 %v2364
      %v2496 = vunpack.c.h.b16 %v2364
      %v2497 = vunpack.c.l.b16 %v2365
      %v2498 = vunpack.c.h.b16 %v2365
      %v2499 = vunpack.c.l.b16 %v2366
      %v2500 = vunpack.c.h.b16 %v2366
      %v2501 = vunpack.c.l.b16 %v2367
      %v2502 = vunpack.c.h.b16 %v2367
      %v2503 = vunpack.c.l.b16 %v2368
      %v2504 = vunpack.c.h.b16 %v2368
      %v2505 = vunpack.c.l.b16 %v2369
      %v2506 = vunpack.c.h.b16 %v2369
      %v2507 = vunpack.c.l.b16 %v2370
      %v2508 = vunpack.c.h.b16 %v2370
      %v2509 = vunpack.c.l.b16 %v2371
      %v2510 = vunpack.c.h.b16 %v2371
      %v2511 = vunpack.c.l.b16 %v2372
      %v2512 = vunpack.c.h.b16 %v2372
      %v2513 = vunpack.c.l.b16 %v2373
      %v2514 = vunpack.c.h.b16 %v2373
      %v2515 = vunpack.c.l.b16 %v2374
      %v2516 = vunpack.c.h.b16 %v2374
      %v2517 = vunpack.c.l.b16 %v2375
      %v2518 = vunpack.c.h.b16 %v2375
      %v2519 = vunpack.c.l.b16 %v2376
      %v2520 = vunpack.c.h.b16 %v2376
      %v2521 = vunpack.c.l.b16 %v2377
      %v2522 = vunpack.c.h.b16 %v2377
      %v2523 = vunpack.c.l.b16 %v2378
      %v2524 = vunpack.c.h.b16 %v2378
      %v2525 = vunpack.c.l.b16 %v2379
      %v2526 = vunpack.c.h.b16 %v2379
      %v2527 = vunpack.c.l.b16 %v2380
      %v2528 = vunpack.c.h.b16 %v2380
      %v2529 = vunpack.c.l.b16 %v2381
      %v2530 = vunpack.c.h.b16 %v2381
      %v2531 = vunpack.c.l.b16 %v2382
      %v2532 = vunpack.c.h.b16 %v2382
      %v2533 = vunpack.c.l.b16 %v2383
      %v2534 = vunpack.c.h.b16 %v2383
      %v2535 = vunpack.c.l.b16 %v2384
      %v2536 = vunpack.c.h.b16 %v2384
      %v2537 = vunpack.c.l.b16 %v2385
      %v2538 = vunpack.c.h.b16 %v2385
      %v2539 = vunpack.c.l.b16 %v2386
      %v2540 = vunpack.c.h.b16 %v2386
      %v2541 = vunpack.c.l.b16 %v2387
      %v2542 = vunpack.c.h.b16 %v2387
      %v2543 = vunpack.c.l.b16 %v2388
      %v2544 = vunpack.c.h.b16 %v2388
      %v2545 = vunpack.c.l.b16 %v2389
      %v2546 = vunpack.c.h.b16 %v2389
      %v2547 = vunpack.c.l.b16 %v2390
      %v2548 = vunpack.c.h.b16 %v2390
      %v2549 = vunpack.c.l.b16 %v2391
      %v2550 = vunpack.c.h.b16 %v2391
      %v2551 = vunpack.c.l.b16 %v2392
      %v2552 = vunpack.c.h.b16 %v2392
      %v2553 = vunpack.c.l.b16 %v2393
      %v2554 = vunpack.c.h.b16 %v2393
      %v2555 = vunpack.c.l.b16 %v2394
      %v2556 = vunpack.c.h.b16 %v2394
      %v2557 = vunpack.c.l.b16 %v2395
      %v2558 = vunpack.c.h.b16 %v2395
      %v2559 = vunpack.c.l.b16 %v2396
      %v2560 = vunpack.c.h.b16 %v2396
      %v2561 = vunpack.c.l.b16 %v2397
      %v2562 = vunpack.c.h.b16 %v2397
      %v2563 = vunpack.c.l.b16 %v2398
      %v2564 = vunpack.c.h.b16 %v2398
      %v2565 = vunpack.c.l.b16 %v2399
      %v2566 = vunpack.c.h.b16 %v2399
      %v2567 = vunpack.c.l.b16 %v2400
      %v2568 = vunpack.c.h.b16 %v2400
      %v2569 = vunpack.c.l.b16 %v2401
      %v2570 = vunpack.c.h.b16 %v2401
      %v2571 = vunpack.c.l.b16 %v2402
      %v2572 = vunpack.c.h.b16 %v2402
      %v2573 = vunpack.c.l.b16 %v2403
      %v2574 = vunpack.c.h.b16 %v2403
      %v2575 = vunpack.c.l.b16 %v2404
      %v2576 = vunpack.c.h.b16 %v2404
      %v2577 = vunpack.c.l.b16 %v2405
      %v2578 = vunpack.c.h.b16 %v2405
      %v2579 = vunpack.c.l.b16 %v2406
      %v2580 = vunpack.c.h.b16 %v2406
      %v2581 = vunpack.c.l.b16 %v2407
      %v2582 = vunpack.c.h.b16 %v2407
      %v2583 = vunpack.c.l.b16 %v2408
      %v2584 = vunpack.c.h.b16 %v2408
      %v2585 = vunpack.c.l.b16 %v2409
      %v2586 = vunpack.c.h.b16 %v2409
      %v2587 = vunpack.c.l.b16 %v2410
      %v2588 = vunpack.c.h.b16 %v2410
      %v2589 = vunpack.c.l.b16 %v2411
      %v2590 = vunpack.c.h.b16 %v2411
      %v2591 = vunpack.c.l.b16 %v2412
      %v2592 = vunpack.c.h.b16 %v2412
      %v2593 = vunpack.c.l.b16 %v2413
      %v2594 = vunpack.c.h.b16 %v2413
      %v2595 = vunpack.c.l.b16 %v2414
      %v2596 = vunpack.c.h.b16 %v2414
      %v2597 = vunpack.c.l.b16 %v2415
      %v2598 = vunpack.c.h.b16 %v2415
      %v2599 = vunpack.c.l.b16 %v2416
      %v2600 = vunpack.c.h.b16 %v2416
      %v2601 = vunpack.c.l.b16 %v2417
      %v2602 = vunpack.c.h.b16 %v2417
      %v2603 = vunpack.c.l.b16 %v2418
      %v2604 = vunpack.c.h.b16 %v2418
      %v2605 = vunpack.c.l.b16 %v2419
      %v2606 = vunpack.c.h.b16 %v2419
      %v2607 = vunpack.c.l.b16 %v2420
      %v2608 = vunpack.c.h.b16 %v2420
      %v2609 = vunpack.c.l.b16 %v2421
      %v2610 = vunpack.c.h.b16 %v2421
      %v2611 = vunpack.c.l.b16 %v2422
      %v2612 = vunpack.c.h.b16 %v2422
      %v2613 = vunpack.c.l.b16 %v2423
      %v2614 = vunpack.c.h.b16 %v2423
      %v2615 = vunpack.c.l.b16 %v2424
      %v2616 = vunpack.c.h.b16 %v2424
      %v2617 = vunpack.c.l.b16 %v2425
      %v2618 = vunpack.c.h.b16 %v2425
      %v2619 = vpack.c.b16 %v2495, %v2491
      %v2620 = vpack.c.b16 %v2496, %v2492
      %v2621 = vpack.c.b16 %v2497, %v2493
      %v2622 = vpack.c.b16 %v2498, %v2494
      %v2623 = vpack.c.b16 %v2503, %v2499
      %v2624 = vpack.c.b16 %v2504, %v2500
      %v2625 = vpack.c.b16 %v2505, %v2501
      %v2626 = vpack.c.b16 %v2506, %v2502
      %v2627 = vpack.c.b16 %v2511, %v2507
      %v2628 = vpack.c.b16 %v2512, %v2508
      %v2629 = vpack.c.b16 %v2513, %v2509
      %v2630 = vpack.c.b16 %v2514, %v2510
      %v2631 = vpack.c.b16 %v2519, %v2515
      %v2632 = vpack.c.b16 %v2520, %v2516
      %v2633 = vpack.c.b16 %v2521, %v2517
      %v2634 = vpack.c.b16 %v2522, %v2518
      %v2635 = vpack.c.b16 %v2527, %v2523
      %v2636 = vpack.c.b16 %v2528, %v2524
      %v2637 = vpack.c.b16 %v2529, %v2525
      %v2638 = vpack.c.b16 %v2530, %v2526
      %v2639 = vpack.c.b16 %v2535, %v2531
      %v2640 = vpack.c.b16 %v2536, %v2532
      %v2641 = vpack.c.b16 %v2537, %v2533
      %v2642 = vpack.c.b16 %v2538, %v2534
      %v2643 = vpack.c.b16 %v2543, %v2539
      %v2644 = vpack.c.b16 %v2544, %v2540
      %v2645 = vpack.c.b16 %v2545, %v2541
      %v2646 = vpack.c.b16 %v2546, %v2542
      %v2647 = vpack.c.b16 %v2551, %v2547
      %v2648 = vpack.c.b16 %v2552, %v2548
      %v2649 = vpack.c.b16 %v2553, %v2549
      %v2650 = vpack.c.b16 %v2554, %v2550
      %v2651 = vpack.c.b16 %v2559, %v2555
      %v2652 = vpack.c.b16 %v2560, %v2556
      %v2653 = vpack.c.b16 %v2561, %v2557
      %v2654 = vpack.c.b16 %v2562, %v2558
      %v2655 = vpack.c.b16 %v2567, %v2563
      %v2656 = vpack.c.b16 %v2568, %v2564
      %v2657 = vpack.c.b16 %v2569, %v2565
      %v2658 = vpack.c.b16 %v2570, %v2566
      %v2659 = vpack.c.b16 %v2575, %v2571
      %v2660 = vpack.c.b16 %v2576, %v2572
      %v2661 = vpack.c.b16 %v2577, %v2573
      %v2662 = vpack.c.b16 %v2578, %v2574
      %v2663 = vpack.c.b16 %v2583, %v2579
      %v2664 = vpack.c.b16 %v2584, %v2580
      %v2665 = vpack.c.b16 %v2585, %v2581
      %v2666 = vpack.c.b16 %v2586, %v2582
      %v2667 = vpack.c.b16 %v2591, %v2587
      %v2668 = vpack.c.b16 %v2592, %v2588
      %v2669 = vpack.c.b16 %v2593, %v2589
      %v2670 = vpack.c.b16 %v2594, %v2590
      %v2671 = vpack.c.b16 %v2599, %v2595
      %v2672 = vpack.c.b16 %v2600, %v2596
      %v2673 = vpack.c.b16 %v2601, %v2597
      %v2674 = vpack.c.b16 %v2602, %v2598
      %v2675 = vpack.c.b16 %v2607, %v2603
      %v2676 = vpack.c.b16 %v2608, %v2604
      %v2677 = vpack.c.b16 %v2609, %v2605
      %v2678 = vpack.c.b16 %v2610, %v2606
      %v2679 = vpack.c.b16 %v2615, %v2611
      %v2680 = vpack.c.b16 %v2616, %v2612
      %v2681 = vpack.c.b16 %v2617, %v2613
      %v2682 = vpack.c.b16 %v2618, %v2614
      %v2748 = vlaneseq
      %v2749 = vshrl.u32 %v2748, 7
      %v2750 = vsub.s32 0, %v2749
      %v2751 = vrot.slane %v2426, %v2750
      %v2752 = vlaneseq
      %v2753 = vshrl.u32 %v2752, 7
      %v2754 = vsub.s32 1, %v2753
      %v2755 = vrot.slane %v2426, %v2754
      %v2756 = vlaneseq
      %v2757 = vshrl.u32 %v2756, 7
      %v2758 = vsub.s32 2, %v2757
      %v2759 = vrot.slane %v2426, %v2758
      %v2760 = vlaneseq
      %v2761 = vshrl.u32 %v2760, 7
      %v2762 = vsub.s32 3, %v2761
      %v2763 = vrot.slane %v2426, %v2762
      %2768 = vmatprep.subr.bf16.mxu0 %v2648
      %2769 = vmatpush1.bf16.msra.mxu0 %v2647
      %2770 = vmatprep.subr.bf16.mxu0 %v2644
      %2771 = vmatpush1.bf16.msra.mxu0 %v2643
      %2772 = vmatprep.subr.bf16.mxu0 %v2640
      %2773 = vmatpush1.bf16.msra.mxu0 %v2639
      %2774 = vmatprep.subr.bf16.mxu0 %v2636
      %2775 = vmatpush1.bf16.msra.mxu0 %v2635
      %2776 = vmatprep.subr.bf16.mxu0 %v2632
      %2777 = vmatpush1.bf16.msra.mxu0 %v2631
      %2778 = vmatprep.subr.bf16.mxu0 %v2628
      %2779 = vmatpush1.bf16.msra.mxu0 %v2627
      %2780 = vmatprep.subr.bf16.mxu0 %v2624
      %2781 = vmatpush1.bf16.msra.mxu0 %v2623
      %2782 = vmatprep.subr.bf16.mxu0 %v2620
      %2783 = vmatpush1.bf16.msra.mxu0 %v2619
      %2784 = vmatprep.subr.bf16.mxu0 %v2680
      %2785 = vmatpush2.bf16.msra.mxu0 %v2679
      %2786 = vmatprep.subr.bf16.mxu0 %v2676
      %2787 = vmatpush2.bf16.msra.mxu0 %v2675
      %2788 = vmatprep.subr.bf16.mxu0 %v2672
      %2789 = vmatpush2.bf16.msra.mxu0 %v2671
      %2790 = vmatprep.subr.bf16.mxu0 %v2668
      %2791 = vmatpush2.bf16.msra.mxu0 %v2667
      %2792 = vmatprep.subr.bf16.mxu0 %v2664
      %2793 = vmatpush2.bf16.msra.mxu0 %v2663
      %2794 = vmatprep.subr.bf16.mxu0 %v2660
      %2795 = vmatpush2.bf16.msra.mxu0 %v2659
      %2796 = vmatprep.subr.bf16.mxu0 %v2656
      %2797 = vmatpush2.bf16.msra.mxu0 %v2655
      %2798 = vmatprep.subr.bf16.mxu0 %v2652
      %2799 = vmatpush2.bf16.msra.mxu0 %v2651
      %2800 = vmatprep.mubr.bf16.mxu0 %v2361
      %2801 = vmatmul.mubr.bf16.gmra.mxu0 %v2360
      %v2802 = vpop.f32.mrf.mxu0
      %v2803 = vadd.f32 %v2751, %v2802
      %v2804 = vpop.f32.mrf.mxu0
      %v2805 = vadd.f32 %v2755, %v2804
      %v2806 = vpop.f32.mrf.mxu0
      %v2807 = vpop.f32.mrf.mxu0
      %2808 = vdwg.mxu0
      %2809 = vmatprep.subr.bf16.mxu0 %v2650
      %2810 = vmatpush1.bf16.msra.mxu0 %v2649
      %2811 = vmatprep.subr.bf16.mxu0 %v2646
      %2812 = vmatpush1.bf16.msra.mxu0 %v2645
      %2813 = vmatprep.subr.bf16.mxu0 %v2642
      %2814 = vmatpush1.bf16.msra.mxu0 %v2641
      %2815 = vmatprep.subr.bf16.mxu0 %v2638
      %2816 = vmatpush1.bf16.msra.mxu0 %v2637
      %2817 = vmatprep.subr.bf16.mxu0 %v2634
      %2818 = vmatpush1.bf16.msra.mxu0 %v2633
      %2819 = vmatprep.subr.bf16.mxu0 %v2630
      %2820 = vmatpush1.bf16.msra.mxu0 %v2629
      %2821 = vmatprep.subr.bf16.mxu0 %v2626
      %2822 = vmatpush1.bf16.msra.mxu0 %v2625
      %2823 = vmatprep.subr.bf16.mxu0 %v2622
      %2824 = vmatpush1.bf16.msra.mxu0 %v2621
      %2825 = vmatprep.subr.bf16.mxu0 %v2682
      %2826 = vmatpush2.bf16.msra.mxu0 %v2681
      %2827 = vmatprep.subr.bf16.mxu0 %v2678
      %2828 = vmatpush2.bf16.msra.mxu0 %v2677
      %2829 = vmatprep.subr.bf16.mxu0 %v2674
      %2830 = vmatpush2.bf16.msra.mxu0 %v2673
      %2831 = vmatprep.subr.bf16.mxu0 %v2670
      %2832 = vmatpush2.bf16.msra.mxu0 %v2669
      %2833 = vmatprep.subr.bf16.mxu0 %v2666
      %2834 = vmatpush2.bf16.msra.mxu0 %v2665
      %2835 = vmatprep.subr.bf16.mxu0 %v2662
      %2836 = vmatpush2.bf16.msra.mxu0 %v2661
      %2837 = vmatprep.subr.bf16.mxu0 %v2658
      %2838 = vmatpush2.bf16.msra.mxu0 %v2657
      %2839 = vmatprep.subr.bf16.mxu0 %v2654
      %2840 = vmatpush2.bf16.msra.mxu0 %v2653
      %2841 = vmatprep.mubr.bf16.mxu0 %v2361
      %2842 = vmatmul.mubr.bf16.gmra.mxu0 %v2360
      %v2843 = vpop.f32.mrf.mxu0
      %v2844 = vadd.f32 %v2759, %v2843
      %v2845 = vpop.f32.mrf.mxu0
      %v2846 = vadd.f32 %v2763, %v2845
      %v2847 = vpop.f32.mrf.mxu0
      %v2848 = vpop.f32.mrf.mxu0
      %2849 = vdwg.mxu0
      %v2850 = vmax.f32 %v2803, 0.0
      %v2851 = vmax.f32 %v2805, 0.0
      %v2852 = vmax.f32 %v2844, 0.0
      %v2853 = vmax.f32 %v2846, 0.0
      %v2854 = vpack.c.bf16 %v2850, %v2850
      %v2855 = vpack.c.bf16 %v2851, %v2851
      %v2856 = vpack.c.bf16 %v2852, %v2852
      %v2857 = vpack.c.bf16 %v2853, %v2853
      %v2858 = vld [vmem:[%s22] sm:$0xf]
      %v2859 = vld [vmem:[%s22 + $0x4] sm:$0xf]
      %v2860 = vld [vmem:[%s22 + $0x8] sm:$0xf]
      %v2861 = vld [vmem:[%s22 + $0xc] sm:$0xf]
      %v2862 = vld [vmem:[%s22 + $0x10] sm:$0xf]
      %v2863 = vld [vmem:[%s22 + $0x14] sm:$0xf]
      %v2864 = vld [vmem:[%s22 + $0x18] sm:$0xf]
      %v2865 = vld [vmem:[%s22 + $0x1c] sm:$0xf]
      %v2866 = vld [vmem:[%s22 + $0x20] sm:$0xf]
      %v2867 = vld [vmem:[%s22 + $0x24] sm:$0xf]
      %v2868 = vld [vmem:[%s22 + $0x28] sm:$0xf]
      %v2869 = vld [vmem:[%s22 + $0x2c] sm:$0xf]
      %v2870 = vld [vmem:[%s22 + $0x30] sm:$0xf]
      %v2871 = vld [vmem:[%s22 + $0x34] sm:$0xf]
      %v2872 = vld [vmem:[%s22 + $0x38] sm:$0xf]
      %v2873 = vld [vmem:[%s22 + $0x3c] sm:$0xf]
      %v2874 = vld [vmem:[%s22 + $0x40] sm:$0xf]
      %v2875 = vld [vmem:[%s22 + $0x44] sm:$0xf]
      %v2876 = vld [vmem:[%s22 + $0x48] sm:$0xf]
      %v2877 = vld [vmem:[%s22 + $0x4c] sm:$0xf]
      %v2878 = vld [vmem:[%s22 + $0x50] sm:$0xf]
      %v2879 = vld [vmem:[%s22 + $0x54] sm:$0xf]
      %v2880 = vld [vmem:[%s22 + $0x58] sm:$0xf]
      %v2881 = vld [vmem:[%s22 + $0x5c] sm:$0xf]
      %v2882 = vld [vmem:[%s22 + $0x60] sm:$0xf]
      %v2883 = vld [vmem:[%s22 + $0x64] sm:$0xf]
      %v2884 = vld [vmem:[%s22 + $0x68] sm:$0xf]
      %v2885 = vld [vmem:[%s22 + $0x6c] sm:$0xf]
      %v2886 = vld [vmem:[%s22 + $0x70] sm:$0xf]
      %v2887 = vld [vmem:[%s22 + $0x74] sm:$0xf]
      %v2888 = vld [vmem:[%s22 + $0x78] sm:$0xf]
      %v2889 = vld [vmem:[%s22 + $0x7c] sm:$0xf]
      %v2890 = vld [vmem:[%s22 + $0x80] sm:$0xf]
      %v2891 = vld [vmem:[%s22 + $0x84] sm:$0xf]
      %v2892 = vld [vmem:[%s22 + $0x88] sm:$0xf]
      %v2893 = vld [vmem:[%s22 + $0x8c] sm:$0xf]
      %v2894 = vld [vmem:[%s22 + $0x90] sm:$0xf]
      %v2895 = vld [vmem:[%s22 + $0x94] sm:$0xf]
      %v2896 = vld [vmem:[%s22 + $0x98] sm:$0xf]
      %v2897 = vld [vmem:[%s22 + $0x9c] sm:$0xf]
      %v2898 = vld [vmem:[%s22 + $0xa0] sm:$0xf]
      %v2899 = vld [vmem:[%s22 + $0xa4] sm:$0xf]
      %v2900 = vld [vmem:[%s22 + $0xa8] sm:$0xf]
      %v2901 = vld [vmem:[%s22 + $0xac] sm:$0xf]
      %v2902 = vld [vmem:[%s22 + $0xb0] sm:$0xf]
      %v2903 = vld [vmem:[%s22 + $0xb4] sm:$0xf]
      %v2904 = vld [vmem:[%s22 + $0xb8] sm:$0xf]
      %v2905 = vld [vmem:[%s22 + $0xbc] sm:$0xf]
      %v2906 = vld [vmem:[%s22 + $0xc0] sm:$0xf]
      %v2907 = vld [vmem:[%s22 + $0xc4] sm:$0xf]
      %v2908 = vld [vmem:[%s22 + $0xc8] sm:$0xf]
      %v2909 = vld [vmem:[%s22 + $0xcc] sm:$0xf]
      %v2910 = vld [vmem:[%s22 + $0xd0] sm:$0xf]
      %v2911 = vld [vmem:[%s22 + $0xd4] sm:$0xf]
      %v2912 = vld [vmem:[%s22 + $0xd8] sm:$0xf]
      %v2913 = vld [vmem:[%s22 + $0xdc] sm:$0xf]
      %v2914 = vld [vmem:[%s22 + $0xe0] sm:$0xf]
      %v2915 = vld [vmem:[%s22 + $0xe4] sm:$0xf]
      %v2916 = vld [vmem:[%s22 + $0xe8] sm:$0xf]
      %v2917 = vld [vmem:[%s22 + $0xec] sm:$0xf]
      %v2918 = vld [vmem:[%s22 + $0xf0] sm:$0xf]
      %v2919 = vld [vmem:[%s22 + $0xf4] sm:$0xf]
      %v2920 = vld [vmem:[%s22 + $0xf8] sm:$0xf]
      %v2921 = vld [vmem:[%s22 + $0xfc] sm:$0xf]
      %v2922 = vld [vmem:[%s23] sm:$0x1]
      %v2987 = vunpack.c.l.b16 %v2858
      %v2988 = vunpack.c.l.b16 %v2859
      %v2989 = vunpack.c.l.b16 %v2860
      %v2990 = vunpack.c.l.b16 %v2861
      %v2991 = vunpack.c.l.b16 %v2862
      %v2992 = vunpack.c.l.b16 %v2863
      %v2993 = vunpack.c.l.b16 %v2864
      %v2994 = vunpack.c.l.b16 %v2865
      %v2995 = vunpack.c.l.b16 %v2866
      %v2996 = vunpack.c.l.b16 %v2867
      %v2997 = vunpack.c.l.b16 %v2868
      %v2998 = vunpack.c.l.b16 %v2869
      %v2999 = vunpack.c.l.b16 %v2870
      %v3000 = vunpack.c.l.b16 %v2871
      %v3001 = vunpack.c.l.b16 %v2872
      %v3002 = vunpack.c.l.b16 %v2873
      %v3003 = vunpack.c.l.b16 %v2874
      %v3004 = vunpack.c.l.b16 %v2875
      %v3005 = vunpack.c.l.b16 %v2876
      %v3006 = vunpack.c.l.b16 %v2877
      %v3007 = vunpack.c.l.b16 %v2878
      %v3008 = vunpack.c.l.b16 %v2879
      %v3009 = vunpack.c.l.b16 %v2880
      %v3010 = vunpack.c.l.b16 %v2881
      %v3011 = vunpack.c.l.b16 %v2882
      %v3012 = vunpack.c.l.b16 %v2883
      %v3013 = vunpack.c.l.b16 %v2884
      %v3014 = vunpack.c.l.b16 %v2885
      %v3015 = vunpack.c.l.b16 %v2886
      %v3016 = vunpack.c.l.b16 %v2887
      %v3017 = vunpack.c.l.b16 %v2888
      %v3018 = vunpack.c.l.b16 %v2889
      %v3019 = vunpack.c.l.b16 %v2890
      %v3020 = vunpack.c.l.b16 %v2891
      %v3021 = vunpack.c.l.b16 %v2892
      %v3022 = vunpack.c.l.b16 %v2893
      %v3023 = vunpack.c.l.b16 %v2894
      %v3024 = vunpack.c.l.b16 %v2895
      %v3025 = vunpack.c.l.b16 %v2896
      %v3026 = vunpack.c.l.b16 %v2897
      %v3027 = vunpack.c.l.b16 %v2898
      %v3028 = vunpack.c.l.b16 %v2899
      %v3029 = vunpack.c.l.b16 %v2900
      %v3030 = vunpack.c.l.b16 %v2901
      %v3031 = vunpack.c.l.b16 %v2902
      %v3032 = vunpack.c.l.b16 %v2903
      %v3033 = vunpack.c.l.b16 %v2904
      %v3034 = vunpack.c.l.b16 %v2905
      %v3035 = vunpack.c.l.b16 %v2906
      %v3036 = vunpack.c.l.b16 %v2907
      %v3037 = vunpack.c.l.b16 %v2908
      %v3038 = vunpack.c.l.b16 %v2909
      %v3039 = vunpack.c.l.b16 %v2910
      %v3040 = vunpack.c.l.b16 %v2911
      %v3041 = vunpack.c.l.b16 %v2912
      %v3042 = vunpack.c.l.b16 %v2913
      %v3043 = vunpack.c.l.b16 %v2914
      %v3044 = vunpack.c.l.b16 %v2915
      %v3045 = vunpack.c.l.b16 %v2916
      %v3046 = vunpack.c.l.b16 %v2917
      %v3047 = vunpack.c.l.b16 %v2918
      %v3048 = vunpack.c.l.b16 %v2919
      %v3049 = vunpack.c.l.b16 %v2920
      %v3050 = vunpack.c.l.b16 %v2921
      %v3051 = vpack.c.b16 %v2988, %v2987
      %v3052 = vpack.c.b16 %v2990, %v2989
      %v3053 = vpack.c.b16 %v2992, %v2991
      %v3054 = vpack.c.b16 %v2994, %v2993
      %v3055 = vpack.c.b16 %v2996, %v2995
      %v3056 = vpack.c.b16 %v2998, %v2997
      %v3057 = vpack.c.b16 %v3000, %v2999
      %v3058 = vpack.c.b16 %v3002, %v3001
      %v3059 = vpack.c.b16 %v3004, %v3003
      %v3060 = vpack.c.b16 %v3006, %v3005
      %v3061 = vpack.c.b16 %v3008, %v3007
      %v3062 = vpack.c.b16 %v3010, %v3009
      %v3063 = vpack.c.b16 %v3012, %v3011
      %v3064 = vpack.c.b16 %v3014, %v3013
      %v3065 = vpack.c.b16 %v3016, %v3015
      %v3066 = vpack.c.b16 %v3018, %v3017
      %v3067 = vpack.c.b16 %v3020, %v3019
      %v3068 = vpack.c.b16 %v3022, %v3021
      %v3069 = vpack.c.b16 %v3024, %v3023
      %v3070 = vpack.c.b16 %v3026, %v3025
      %v3071 = vpack.c.b16 %v3028, %v3027
      %v3072 = vpack.c.b16 %v3030, %v3029
      %v3073 = vpack.c.b16 %v3032, %v3031
      %v3074 = vpack.c.b16 %v3034, %v3033
      %v3075 = vpack.c.b16 %v3036, %v3035
      %v3076 = vpack.c.b16 %v3038, %v3037
      %v3077 = vpack.c.b16 %v3040, %v3039
      %v3078 = vpack.c.b16 %v3042, %v3041
      %v3079 = vpack.c.b16 %v3044, %v3043
      %v3080 = vpack.c.b16 %v3046, %v3045
      %v3081 = vpack.c.b16 %v3048, %v3047
      %v3082 = vpack.c.b16 %v3050, %v3049
      %3115 = vmatprep.subr.bf16.mxu0 0
      %3116 = vmatpush1.bf16.msra.mxu0 %v3058
      %3117 = vmatprep.subr.bf16.mxu0 0
      %3118 = vmatpush1.bf16.msra.mxu0 %v3057
      %3119 = vmatprep.subr.bf16.mxu0 0
      %3120 = vmatpush1.bf16.msra.mxu0 %v3056
      %3121 = vmatprep.subr.bf16.mxu0 0
      %3122 = vmatpush1.bf16.msra.mxu0 %v3055
      %3123 = vmatprep.subr.bf16.mxu0 0
      %3124 = vmatpush1.bf16.msra.mxu0 %v3054
      %3125 = vmatprep.subr.bf16.mxu0 0
      %3126 = vmatpush1.bf16.msra.mxu0 %v3053
      %3127 = vmatprep.subr.bf16.mxu0 0
      %3128 = vmatpush1.bf16.msra.mxu0 %v3052
      %3129 = vmatprep.subr.bf16.mxu0 0
      %3130 = vmatpush1.bf16.msra.mxu0 %v3051
      %3131 = vmatprep.subr.bf16.mxu0 0
      %3132 = vmatpush2.bf16.msra.mxu0 %v3066
      %3133 = vmatprep.subr.bf16.mxu0 0
      %3134 = vmatpush2.bf16.msra.mxu0 %v3065
      %3135 = vmatprep.subr.bf16.mxu0 0
      %3136 = vmatpush2.bf16.msra.mxu0 %v3064
      %3137 = vmatprep.subr.bf16.mxu0 0
      %3138 = vmatpush2.bf16.msra.mxu0 %v3063
      %3139 = vmatprep.subr.bf16.mxu0 0
      %3140 = vmatpush2.bf16.msra.mxu0 %v3062
      %3141 = vmatprep.subr.bf16.mxu0 0
      %3142 = vmatpush2.bf16.msra.mxu0 %v3061
      %3143 = vmatprep.subr.bf16.mxu0 0
      %3144 = vmatpush2.bf16.msra.mxu0 %v3060
      %3145 = vmatprep.subr.bf16.mxu0 0
      %3146 = vmatpush2.bf16.msra.mxu0 %v3059
      %3147 = vmatprep.mubr.bf16.mxu0 %v2855
      %3148 = vmatmul.mubr.bf16.gmra.mxu0 %v2854
      %v3149 = vpop.f32.mrf.mxu0
      %v3150 = vadd.f32 %v2922, %v3149
      %v3151 = vpop.f32.mrf.mxu0
      %v3152 = vpop.f32.mrf.mxu0
      %v3153 = vpop.f32.mrf.mxu0
      %3154 = vdwg.mxu0
      %3155 = vmatprep.subr.bf16.mxu0 0
      %3156 = vmatpush1.bf16.msra.mxu0 %v3074
      %3157 = vmatprep.subr.bf16.mxu0 0
      %3158 = vmatpush1.bf16.msra.mxu0 %v3073
      %3159 = vmatprep.subr.bf16.mxu0 0
      %3160 = vmatpush1.bf16.msra.mxu0 %v3072
      %3161 = vmatprep.subr.bf16.mxu0 0
      %3162 = vmatpush1.bf16.msra.mxu0 %v3071
      %3163 = vmatprep.subr.bf16.mxu0 0
      %3164 = vmatpush1.bf16.msra.mxu0 %v3070
      %3165 = vmatprep.subr.bf16.mxu0 0
      %3166 = vmatpush1.bf16.msra.mxu0 %v3069
      %3167 = vmatprep.subr.bf16.mxu0 0
      %3168 = vmatpush1.bf16.msra.mxu0 %v3068
      %3169 = vmatprep.subr.bf16.mxu0 0
      %3170 = vmatpush1.bf16.msra.mxu0 %v3067
      %3171 = vmatprep.subr.bf16.mxu0 0
      %3172 = vmatpush2.bf16.msra.mxu0 %v3082
      %3173 = vmatprep.subr.bf16.mxu0 0
      %3174 = vmatpush2.bf16.msra.mxu0 %v3081
      %3175 = vmatprep.subr.bf16.mxu0 0
      %3176 = vmatpush2.bf16.msra.mxu0 %v3080
      %3177 = vmatprep.subr.bf16.mxu0 0
      %3178 = vmatpush2.bf16.msra.mxu0 %v3079
      %3179 = vmatprep.subr.bf16.mxu0 0
      %3180 = vmatpush2.bf16.msra.mxu0 %v3078
      %3181 = vmatprep.subr.bf16.mxu0 0
      %3182 = vmatpush2.bf16.msra.mxu0 %v3077
      %3183 = vmatprep.subr.bf16.mxu0 0
      %3184 = vmatpush2.bf16.msra.mxu0 %v3076
      %3185 = vmatprep.subr.bf16.mxu0 0
      %3186 = vmatpush2.bf16.msra.mxu0 %v3075
      %3187 = vmatprep.mubr.bf16.mxu0 %v2857
      %3188 = vmatmul.mubr.bf16.gmra.mxu0 %v2856
      %v3189 = vpop.f32.mrf.mxu0
      %v3190 = vadd.f32 %v3150, %v3189
      %v3191 = vpop.f32.mrf.mxu0
      %v3192 = vpop.f32.mrf.mxu0
      %v3193 = vpop.f32.mrf.mxu0
      %3194 = vdwg.mxu0
      %v3195 = vmax.f32 %v3190, 0.0
      %v3196 = vlaneseq
      %v3197 = vand.u32 %v3196, 127
      %vm3198 = vcmp.lt.s32.totalorder %v3197, 2
      %v3199 = vsel %vm3198, %v3195, -inf
      %vm3200 = vcmask 1040384
      %v3201 = vsel %vm3200, %v3199, -inf
      %3202 = vmax.xlane.f32.xlu0 %v3201
      %v3203 = vpop.xlane.xlu0 %3202
      %v3204 = vsub.f32 %v3199, %v3203
      %v3205 = vmul.f32 %v3204, 1.442695
      %v3206 = vpow.pop %v3205
      %v3207 = vsel %vm3200, %v3206, 0.0
      %3208 = vadd.xlane.f32.xlu0 %v3207
      %v3209 = vpop.xlane.xlu0 %3208
      %v3210 = vlog2.pop %v3209
      %v3211 = vmul.f32 %v3210, 0.6931472
      %v3212 = vsub.f32 %v3204, %v3211
      %3213 = vst [vmem:[%s753] sm:$0x1] %v3212
      %p3214 = scmp.lt.s32.totalorder %s35, 3
      %s3215 = scalar_select %p3214, %s35, 3
      %s3216 = scalar_lea.vmem %s24, %s3215
      // Predicated region
      $region117: #{particlenet_forward.1} parent=115 // pred_check
        %p3217 = pneg %p567
      $region118: #{particlenet_forward.1} parent=115 // pred_check_branch
        %3219 = sbr.rel (%p3217) target = $region120
      $region119: #{particlenet_forward.1} parent=115 // pred_region
        _
      $region120: #{particlenet_forward.1} parent=115 // pred_fallthru
        _
    $region116: #{particlenet_forward.1} parent=5 // pred_fallthru
      _
    %p3220 = scmp.le.s32.totalorder 2, %s30
    // Predicated region
    $region121: #{particlenet_forward.1} parent=5 // pred_check
      %p3221 = pneg %p3220
    $region122: #{particlenet_forward.1} parent=5 // pred_check_branch
      %3223 = sbr.rel (%p3221) target = $region124
    $region123: #{particlenet_forward.1} parent=5 // pred_region
      %s3224 = ssub.s32 %s30, 2
      // Predicated region
      $region125: #{particlenet_forward.1} parent=123 // pred_check
        %p3225 = pneg %p573
      $region126: #{particlenet_forward.1} parent=123 // pred_check_branch
        %3227 = sbr.rel (%p3225) target = $region128
      $region127: #{particlenet_forward.1} parent=123 // pred_region
        %p3228 = scmp.lt.s32.totalorder %s36, 3
        %s3229 = scalar_select %p3228, %s36, 3
        %s3230 = scalar_lea.vmem %s24, %s3229
      $region128: #{particlenet_forward.1} parent=123 // pred_fallthru
        _
    $region124: #{particlenet_forward.1} parent=5 // pred_fallthru
      _
  $region6: #{particlenet_forward.1} parent=0 // loop_footer
    %s34 = sadd.s32 1, %s30
  $region7: #{particlenet_forward.1} parent=0 // loop_footer_branch
    %29 = sbr.rel target = $region3
  $region8: #{particlenet_forward.1} parent=0 // loop_exit
    _

</llo_original>
